<compile_context>
chip_gen: v7x
topology: tpu7x:2x2x1
jax: 0.10.0
libtpu: 0.0.40
codegen_flags: <defaults>
</compile_context>

<pallas_src>
import functools
import math

import jax
import jax.numpy as jnp
from jax import lax
from jax.experimental import pallas as pl
from jax.experimental.pallas import tpu as pltpu

# ---------------------------- model configuration ---------------------------- #

NODE_TYPES = ("gene", "disease")
EDGE_TYPES = (("gene", "to", "disease"), ("disease", "rev_to", "gene"))
EDGES_IN = {  # incoming edge types per destination node type (static metadata)
    "disease": (("gene", "to", "disease"),),
    "gene": (("disease", "rev_to", "gene"),),
}
CLASS_NODE = "disease"

IN_DIM = 16
H_DIM = 32
NUM_CLASSES = 3
NUM_CONV_LAYERS = 2
NUM_LIN_LAYERS = 2
RAW_DIMS = {"gene": 10, "disease": 6}
N_NODES = {"gene": 12, "disease": 8}      # disease: 4 nodes/graph * 2 graphs
BATCH = 2
COV_DIM = 5
NODES_PER_GRAPH = N_NODES[CLASS_NODE] // BATCH   # 4

F = 128                                   # lane-padded feature width
V_OFF = 64                                # lane offset of the packed V block (K at 0)


def _rpad(n):                             # sublane (row) padding to a multiple of 8
    return ((n + 7) // 8) * 8


NPAD = {nt: _rpad(N_NODES[nt]) for nt in NODE_TYPES}   # gene: 16, disease: 8
BPAD = _rpad(BATCH)                                     # 8

_VMEM = pl.BlockSpec(memory_space=pltpu.MemorySpace.VMEM)


# ------------------------------ in-kernel math ------------------------------ #

def _erf_poly(x):
    # Abramowitz & Stegun 7.1.26, |err| < 1.5e-7 -> exact-GELU numerics at f32 precision.
    p = 0.3275911
    a1, a2, a3, a4, a5 = 0.254829592, -0.284496736, 1.421413741, -1.453152027, 1.061405429
    sgn = jnp.where(x < 0.0, -1.0, 1.0)
    ax = jnp.abs(x)
    t = 1.0 / (1.0 + p * ax)
    poly = ((((a5 * t + a4) * t + a3) * t + a2) * t + a1) * t
    return sgn * (1.0 - poly * jnp.exp(-ax * ax))


def _gelu_exact(x):
    return 0.5 * x * (1.0 + _erf_poly(x * 0.7071067811865476))


# ------------------------------ fused kernel -------------------------------- #

def _fused_forward_kernel(xg_ref, xd_ref, m_gd_ref, m_dg_ref, cov_ref,
                          w_ref, b_ref, o_ref, *, widx, bidx, use_skip):
    def W(name):                       # (128,128) weight from the slab, static index
        return w_ref[widx[name]]

    def B(name):                       # (1,128) bias/beta row, static slice
        j = bidx[name]
        return b_ref[j:j + 1, :]

    def lin(x, name, relu=False):      # y = x @ W + b, all lane-padded / zero-tailed
        y = jnp.dot(x, W(name), preferred_element_type=jnp.float32) + B(name)
        if relu:
            y = jnp.maximum(y, 0.0)
        return y

    # basis_lins + ReLU per node type
    x = {
        "gene": lin(xg_ref[...], "basis_gene", relu=True),
        "disease": lin(xd_ref[...], "basis_disease", relu=True),
    }
    masks = {
        ("gene", "to", "disease"): m_gd_ref[...],
        ("disease", "rev_to", "gene"): m_dg_ref[...],
    }

    # HGT conv layers (unrolled at trace time)
    for l in range(NUM_CONV_LAYERS):
        new_x = {}
        for dt in NODE_TYPES:
            q = lin(x[dt], f"q{l}_{dt}")           # nonzero lanes 0:H_DIM only
            kvs, ms = [], []
            for et in EDGES_IN[dt]:
                st, rel, _d = et
                tag = f"{l}_{st}_{rel}_{dt}"
                # one matmul yields K_rel (lanes 0:H) and V_rel (lanes V_OFF:V_OFF+H)
                kvs.append(lin(x[st], "kv" + tag))
                ms.append(masks[et])
            kv = kvs[0] if len(kvs) == 1 else jnp.concatenate(kvs, axis=0)
            m = ms[0] if len(ms) == 1 else jnp.concatenate(ms, axis=1)

            # masked softmax over all incoming edges of this destination type.
            # q is zero in the V lanes, so q @ kv.T == q_dst . k_rel exactly.
            s = lax.dot_general(q, kv, (((1,), (1,)), ((), ())),
                                preferred_element_type=jnp.float32)
            s = jnp.where(m > 0.0, s, -1e30)
            smax = jnp.max(s, axis=-1, keepdims=True)
            p = jnp.exp(s - smax) * m
            denom = jnp.sum(p, axis=-1, keepdims=True)
            agg = jnp.dot(p, kv, preferred_element_type=jnp.float32)  # V in lanes V_OFF:
            safe = jnp.where(denom > 0.0, denom, 1.0)
            inv = pl.reciprocal(safe, approx=True)
            inv = inv * (2.0 - safe * inv)          # one Newton step -> near-exact
            agg = jnp.where(denom > 0.0, agg * inv, 0.0)   # no-incoming-edge nodes -> 0

            h = _gelu_exact(agg)
            # out weight rows live at V_OFF so the junk K lanes of `agg` are ignored;
            # sigmoid(skip) is pre-folded into W/b.
            o = lin(h, f"out{l}_{dt}")
            if use_skip[l]:
                o = o + B(f"beta{l}_{dt}") * x[dt]  # (1-sigmoid(skip)) * residual
            new_x[dt] = jnp.maximum(o, 0.0)         # ReLU between conv layers
        x = new_x

    # readout x_dict[class_node].view(batch,-1) + covs, fused into the first lin layer
    xd = x[CLASS_NODE]                                              # (8,128), cols>=32 are 0
    b_iota = lax.broadcasted_iota(jnp.int32, (BPAD, NPAD[CLASS_NODE]), 0)
    n_iota = lax.broadcasted_iota(jnp.int32, (BPAD, NPAD[CLASS_NODE]), 1)
    z = jnp.zeros((BPAD, F), jnp.float32)
    for loc in range(NODES_PER_GRAPH):
        sel = (n_iota == NODES_PER_GRAPH * b_iota + loc).astype(jnp.float32)
        zj = jnp.dot(xd, W(f"lin0_node{loc}"), preferred_element_type=jnp.float32)
        z = z + jnp.dot(sel, zj, preferred_element_type=jnp.float32)
    z = z + jnp.dot(cov_ref[...], W("lin0_cov"),
                    preferred_element_type=jnp.float32) + B("lin0")
    z = jnp.maximum(z, 0.0)
    for i in range(1, NUM_LIN_LAYERS - 1):          # extra hidden layers (none here)
        z = lin(z, f"lin{i}", relu=True)
    o_ref[...] = jnp.dot(z, W(f"lin{NUM_LIN_LAYERS - 1}"),
                         preferred_element_type=jnp.float32) + B(f"lin{NUM_LIN_LAYERS - 1}")


# --------------------------- parameter preparation --------------------------- #

def _pad2(x, rows, cols):
    x = jnp.asarray(x, jnp.float32)
    return jnp.zeros((rows, cols), jnp.float32).at[:x.shape[0], :x.shape[1]].set(x)


def _pad_row(v):
    return _pad2(jnp.asarray(v, jnp.float32).reshape(1, -1), 1, F)


def prepare_params(params):
    """Fold inference-time constants into weights and pack into one weight slab + one
    bias slab so the fused kernel never re-DMAs a parameter."""
    w_mats, widx = [], {}
    b_rows, bidx = [], {}

    def add_w(name, mat):
        widx[name] = len(w_mats)
        w_mats.append(_pad2(mat, F, F))

    def add_b(name, vec):
        bidx[name] = len(b_rows)
        b_rows.append(_pad_row(vec))

    for nt in NODE_TYPES:
        add_w(f"basis_{nt}", params["basis_w"][nt])
        add_b(f"basis_{nt}", params["basis_b"][nt])

    use_skip = []
    in_dims = [IN_DIM] + [H_DIM] * (NUM_CONV_LAYERS - 1)
    for l, lp in enumerate(params["hgt_layers"]):
        skip_this = in_dims[l] == H_DIM                     # PyG applies skip only if dims match
        use_skip.append(skip_this)
        for dt in NODE_TYPES:
            add_w(f"q{l}_{dt}", lp["kqv_w"][dt][:, H_DIM:2 * H_DIM])
            add_b(f"q{l}_{dt}", lp["kqv_b"][dt][H_DIM:2 * H_DIM])
            alpha = jax.nn.sigmoid(lp["skip"][dt]) if skip_this else jnp.float32(1.0)
            # out weight consumes the V lanes (row offset V_OFF) of the packed KV output
            w_out = jnp.zeros((F, F), jnp.float32)
            w_out = w_out.at[V_OFF:V_OFF + H_DIM, :H_DIM].set(alpha * lp["out_w"][dt])
            add_w(f"out{l}_{dt}", w_out)
            add_b(f"out{l}_{dt}", alpha * lp["out_b"][dt])
            if skip_this:
                add_b(f"beta{l}_{dt}", (1.0 - alpha) * jnp.ones((F,), jnp.float32))
        for et in EDGE_TYPES:
            st, rel, dt = et
            tag = f"{l}_{st}_{rel}_{dt}"
            a_sc = lp["a_rel"][et] * (lp["p_rel"][et] / math.sqrt(H_DIM))
            wk = lp["kqv_w"][st][:, :H_DIM] @ a_sc                    # (in, H) K with a_rel/p folded
            bk = lp["kqv_b"][st][:H_DIM] @ a_sc
            wv = lp["kqv_w"][st][:, 2 * H_DIM:] @ lp["m_rel"][et]     # (in, H) V with m_rel folded
            bv = lp["kqv_b"][st][2 * H_DIM:] @ lp["m_rel"][et]
            w_kv = jnp.zeros((F, F), jnp.float32)
            w_kv = w_kv.at[:wk.shape[0], :H_DIM].set(wk)
            w_kv = w_kv.at[:wv.shape[0], V_OFF:V_OFF + H_DIM].set(wv)
            b_kv = jnp.zeros((F,), jnp.float32)
            b_kv = b_kv.at[:H_DIM].set(bk).at[V_OFF:V_OFF + H_DIM].set(bv)
            add_w("kv" + tag, w_kv)
            add_b("kv" + tag, b_kv)

    # first lin layer: decomposed per local class-node + covariate block (readout fusion)
    w0, b0 = params["lins"][0]
    for loc in range(NODES_PER_GRAPH):
        add_w(f"lin0_node{loc}", w0[loc * H_DIM:(loc + 1) * H_DIM, :])
    add_w("lin0_cov", w0[NODES_PER_GRAPH * H_DIM:, :])
    add_b("lin0", b0)
    for i in range(1, NUM_LIN_LAYERS):
        wi, bi = params["lins"][i]
        add_w(f"lin{i}", wi)
        add_b(f"lin{i}", bi)

    w_slab = jnp.stack(w_mats, axis=0)                          # (20, 128, 128) f32
    nb = _rpad(len(b_rows))
    b_slab = jnp.concatenate(
        b_rows + [jnp.zeros((nb - len(b_rows), F), jnp.float32)], axis=0)  # (24, 128)
    return w_slab, b_slab, widx, bidx, tuple(use_skip)


# ----------------------------- forward wrapper ------------------------------- #

def make_forward(widx, bidx, use_skip):
    kernel = functools.partial(_fused_forward_kernel,
                               widx=widx, bidx=bidx, use_skip=use_skip)
    call = pl.pallas_call(
        kernel,
        out_shape=jax.ShapeDtypeStruct((BPAD, F), jnp.float32),
        in_specs=[_VMEM] * 7,
        out_specs=_VMEM,
    )

    @jax.jit
    def forward(w_slab, b_slab, x_gene_raw, x_dis_raw, mask_gd, mask_dg, x_covs):
        xg = _pad2(x_gene_raw, NPAD["gene"], F)
        xd = _pad2(x_dis_raw, NPAD["disease"], F)
        m_gd = _pad2(mask_gd, NPAD["disease"], NPAD["gene"])
        m_dg = _pad2(mask_dg, NPAD["gene"], NPAD["disease"])
        cov = _pad2(x_covs, BPAD, F)
        out_pad = call(xg, xd, m_gd, m_dg, cov, w_slab, b_slab)
        return out_pad[:BATCH, :NUM_CLASSES]

    return forward


# ------------------------------- parameter init ------------------------------ #

def glorot(key, shape):
    limit = math.sqrt(6.0 / (shape[0] + shape[1]))
    return jax.random.uniform(key, shape, jnp.float32, -limit, limit)


def init_params(key):
    keys = iter(jax.random.split(key, 256))
    params = {"basis_w": {}, "basis_b": {}, "hgt_layers": [], "lins": []}
    for nt in NODE_TYPES:
        params["basis_w"][nt] = glorot(next(keys), (RAW_DIMS[nt], IN_DIM))
        params["basis_b"][nt] = 0.01 * jax.random.normal(next(keys), (IN_DIM,), jnp.float32)
    in_dims = [IN_DIM] + [H_DIM] * (NUM_CONV_LAYERS - 1)
    for l in range(NUM_CONV_LAYERS):
        lp = {"kqv_w": {}, "kqv_b": {}, "out_w": {}, "out_b": {}, "skip": {},
              "a_rel": {}, "m_rel": {}, "p_rel": {}}
        for nt in NODE_TYPES:
            lp["kqv_w"][nt] = glorot(next(keys), (in_dims[l], 3 * H_DIM))
            lp["kqv_b"][nt] = jnp.zeros((3 * H_DIM,), jnp.float32)
            lp["out_w"][nt] = glorot(next(keys), (H_DIM, H_DIM))
            lp["out_b"][nt] = jnp.zeros((H_DIM,), jnp.float32)
            lp["skip"][nt] = jnp.float32(1.0)
        for et in EDGE_TYPES:
            lp["a_rel"][et] = glorot(next(keys), (H_DIM, H_DIM))
            lp["m_rel"][et] = glorot(next(keys), (H_DIM, H_DIM))
            lp["p_rel"][et] = jnp.float32(1.0)
        params["hgt_layers"].append(lp)
    lin_in = NODES_PER_GRAPH * H_DIM + COV_DIM
    feats = [H_DIM] * (NUM_LIN_LAYERS - 1) + [NUM_CLASSES]
    d = lin_in
    for f in feats:
        w = glorot(next(keys), (d, f))
        b = 0.01 * jax.random.normal(next(keys), (f,), jnp.float32)
        params["lins"].append((w, b))
        d = f
    return params


# ----------------------------------- main ------------------------------------ #

if __name__ == "__main__":
    key = jax.random.PRNGKey(0)
    pkey, dkey = jax.random.split(key)
    params = init_params(pkey)
    w_slab, b_slab, widx, bidx, use_skip = prepare_params(params)
    forward = make_forward(widx, bidx, use_skip)

    dkeys = iter(jax.random.split(dkey, 16))
    x_dict_raw = {
        nt: jax.random.normal(next(dkeys), (N_NODES[nt], RAW_DIMS[nt]), jnp.float32)
        for nt in NODE_TYPES
    }
    # deterministic synthetic edge lists -> dense adjacency masks (N_dst, N_src)
    adj_masks = {}
    for et in EDGE_TYPES:
        st, _, dt = et
        ns, nd = N_NODES[st], N_NODES[dt]
        e = 3 * max(ns, nd)
        src = jax.random.randint(next(dkeys), (e,), 0, ns)
        dst = jax.random.randint(next(dkeys), (e,), 0, nd)
        # TODO(synk): dense mask de-duplicates repeated edges vs PyG's segment softmax.
        adj_masks[et] = jnp.zeros((nd, ns), jnp.float32).at[dst, src].set(1.0)
    x_covs = jax.random.normal(next(dkeys), (BATCH, COV_DIM), jnp.float32)

    out = forward(w_slab, b_slab,
                  x_dict_raw["gene"], x_dict_raw["disease"],
                  adj_masks[("gene", "to", "disease")],
                  adj_masks[("disease", "rev_to", "gene")],
                  x_covs)
    out = jax.block_until_ready(out)
    assert out.shape == (BATCH, NUM_CLASSES)
    assert bool(jnp.all(jnp.isfinite(out)))
    print("KERNEL_OK")
</pallas_src>

<mosaic_0001>
module attributes {stable_mosaic.version = 11 : i64} {
  func.func @_fused_forward_kernel(%arg0: memref<16x128xf32, #tpu.memory_space<vmem>>, %arg1: memref<8x128xf32, #tpu.memory_space<vmem>>, %arg2: memref<8x16xf32, #tpu.memory_space<vmem>>, %arg3: memref<16x8xf32, #tpu.memory_space<vmem>>, %arg4: memref<8x128xf32, #tpu.memory_space<vmem>>, %arg5: memref<20x128x128xf32, #tpu.memory_space<vmem>>, %arg6: memref<24x128xf32, #tpu.memory_space<vmem>>, %arg7: memref<8x128xf32, #tpu.memory_space<vmem>>) attributes {dimension_semantics = [], scalar_prefetch = 0 : i64, scratch_operands = 0 : i64, tpu.core_type = #tpu.core_type<tc>} {
    %c0 = arith.constant 0 : index
    %c0_0 = arith.constant 0 : index
    %0 = vector.load %arg0[%c0, %c0_0] : memref<16x128xf32, #tpu.memory_space<vmem>>, vector<16x128xf32>
    %c0_1 = arith.constant 0 : index
    %c0_2 = arith.constant 0 : index
    %c0_3 = arith.constant 0 : index
    %1 = vector.load %arg5[%c0_1, %c0_2, %c0_3] : memref<20x128x128xf32, #tpu.memory_space<vmem>>, vector<1x128x128xf32>
    %2 = vector.shape_cast %1 : vector<1x128x128xf32> to vector<128x128xf32>
    %cst = arith.constant dense<0.000000e+00> : vector<16x128xf32>
    %3 = tpu.matmul %0, %2, %cst {dimension_numbers = #tpu.dot_dimension_numbers<[1], [0], [0], [1], [0, 0, 1, 1], [], []>} : vector<16x128xf32>, vector<128x128xf32>, vector<16x128xf32> -> vector<16x128xf32>
    %c0_4 = arith.constant 0 : index
    %c0_5 = arith.constant 0 : index
    %4 = vector.load %arg6[%c0_4, %c0_5] : memref<24x128xf32, #tpu.memory_space<vmem>>, vector<1x128xf32>
    %5 = vector.broadcast %4 : vector<1x128xf32> to vector<16x128xf32>
    %6 = arith.addf %3, %5 : vector<16x128xf32>
    %cst_6 = arith.constant 0.000000e+00 : f32
    %7 = vector.broadcast %cst_6 : f32 to vector<16x128xf32>
    %8 = arith.maximumf %6, %7 : vector<16x128xf32>
    %c0_7 = arith.constant 0 : index
    %c0_8 = arith.constant 0 : index
    %9 = vector.load %arg1[%c0_7, %c0_8] : memref<8x128xf32, #tpu.memory_space<vmem>>, vector<8x128xf32>
    %c1 = arith.constant 1 : index
    %c0_9 = arith.constant 0 : index
    %c0_10 = arith.constant 0 : index
    %10 = vector.load %arg5[%c1, %c0_9, %c0_10] : memref<20x128x128xf32, #tpu.memory_space<vmem>>, vector<1x128x128xf32>
    %11 = vector.shape_cast %10 : vector<1x128x128xf32> to vector<128x128xf32>
    %cst_11 = arith.constant dense<0.000000e+00> : vector<8x128xf32>
    %12 = tpu.matmul %9, %11, %cst_11 {dimension_numbers = #tpu.dot_dimension_numbers<[1], [0], [0], [1], [0, 0, 1, 1], [], []>} : vector<8x128xf32>, vector<128x128xf32>, vector<8x128xf32> -> vector<8x128xf32>
    %c1_12 = arith.constant 1 : index
    %c0_13 = arith.constant 0 : index
    %13 = vector.load %arg6[%c1_12, %c0_13] : memref<24x128xf32, #tpu.memory_space<vmem>>, vector<1x128xf32>
    %14 = vector.broadcast %13 : vector<1x128xf32> to vector<8x128xf32>
    %15 = arith.addf %12, %14 : vector<8x128xf32>
    %cst_14 = arith.constant 0.000000e+00 : f32
    %16 = vector.broadcast %cst_14 : f32 to vector<8x128xf32>
    %17 = arith.maximumf %15, %16 : vector<8x128xf32>
    %c0_15 = arith.constant 0 : index
    %c0_16 = arith.constant 0 : index
    %18 = vector.load %arg2[%c0_15, %c0_16] : memref<8x16xf32, #tpu.memory_space<vmem>>, vector<8x16xf32>
    %c0_17 = arith.constant 0 : index
    %c0_18 = arith.constant 0 : index
    %19 = vector.load %arg3[%c0_17, %c0_18] : memref<16x8xf32, #tpu.memory_space<vmem>>, vector<16x8xf32>
    %c2 = arith.constant 2 : index
    %c0_19 = arith.constant 0 : index
    %c0_20 = arith.constant 0 : index
    %20 = vector.load %arg5[%c2, %c0_19, %c0_20] : memref<20x128x128xf32, #tpu.memory_space<vmem>>, vector<1x128x128xf32>
    %21 = vector.shape_cast %20 : vector<1x128x128xf32> to vector<128x128xf32>
    %cst_21 = arith.constant dense<0.000000e+00> : vector<16x128xf32>
    %22 = tpu.matmul %8, %21, %cst_21 {dimension_numbers = #tpu.dot_dimension_numbers<[1], [0], [0], [1], [0, 0, 1, 1], [], []>} : vector<16x128xf32>, vector<128x128xf32>, vector<16x128xf32> -> vector<16x128xf32>
    %c2_22 = arith.constant 2 : index
    %c0_23 = arith.constant 0 : index
    %23 = vector.load %arg6[%c2_22, %c0_23] : memref<24x128xf32, #tpu.memory_space<vmem>>, vector<1x128xf32>
    %24 = vector.broadcast %23 : vector<1x128xf32> to vector<16x128xf32>
    %25 = arith.addf %22, %24 : vector<16x128xf32>
    %c7 = arith.constant 7 : index
    %c0_24 = arith.constant 0 : index
    %c0_25 = arith.constant 0 : index
    %26 = vector.load %arg5[%c7, %c0_24, %c0_25] : memref<20x128x128xf32, #tpu.memory_space<vmem>>, vector<1x128x128xf32>
    %27 = vector.shape_cast %26 : vector<1x128x128xf32> to vector<128x128xf32>
    %cst_26 = arith.constant dense<0.000000e+00> : vector<8x128xf32>
    %28 = tpu.matmul %17, %27, %cst_26 {dimension_numbers = #tpu.dot_dimension_numbers<[1], [0], [0], [1], [0, 0, 1, 1], [], []>} : vector<8x128xf32>, vector<128x128xf32>, vector<8x128xf32> -> vector<8x128xf32>
    %c7_27 = arith.constant 7 : index
    %c0_28 = arith.constant 0 : index
    %29 = vector.load %arg6[%c7_27, %c0_28] : memref<24x128xf32, #tpu.memory_space<vmem>>, vector<1x128xf32>
    %30 = vector.broadcast %29 : vector<1x128xf32> to vector<8x128xf32>
    %31 = arith.addf %28, %30 : vector<8x128xf32>
    %cst_29 = arith.constant dense<0.000000e+00> : vector<16x8xf32>
    %32 = tpu.matmul %25, %31, %cst_29 {dimension_numbers = #tpu.dot_dimension_numbers<[1], [1], [0], [0], [0, 0, 1, 0], [], []>} : vector<16x128xf32>, vector<8x128xf32>, vector<16x8xf32> -> vector<16x8xf32>
    %cst_30 = arith.constant 0.000000e+00 : f32
    %33 = vector.broadcast %cst_30 : f32 to vector<16x8xf32>
    %34 = arith.cmpf ogt, %19, %33 : vector<16x8xf32>
    %cst_31 = arith.constant -1.000000e+30 : f32
    %35 = vector.broadcast %cst_31 : f32 to vector<16x8xf32>
    %36 = arith.select %34, %32, %35 : vector<16x8xi1>, vector<16x8xf32>
    %cst_32 = arith.constant dense<0xFF800000> : vector<16xf32>
    %37 = vector.multi_reduction <maximumf>, %36, %cst_32 [1] : vector<16x8xf32> to vector<16xf32>
    %38 = vector.shape_cast %37 : vector<16xf32> to vector<16x1xf32>
    %39 = vector.broadcast %38 : vector<16x1xf32> to vector<16x8xf32>
    %40 = arith.subf %36, %39 : vector<16x8xf32>
    %41 = math.exp %40 : vector<16x8xf32>
    %42 = arith.mulf %41, %19 : vector<16x8xf32>
    %cst_33 = arith.constant dense<0.000000e+00> : vector<16xf32>
    %43 = vector.multi_reduction <add>, %42, %cst_33 [1] : vector<16x8xf32> to vector<16xf32>
    %44 = vector.shape_cast %43 : vector<16xf32> to vector<16x1xf32>
    %cst_34 = arith.constant dense<0.000000e+00> : vector<16x128xf32>
    %45 = tpu.matmul %42, %31, %cst_34 {dimension_numbers = #tpu.dot_dimension_numbers<[1], [0], [0], [1], [0, 0, 1, 1], [], []>} : vector<16x8xf32>, vector<8x128xf32>, vector<16x128xf32> -> vector<16x128xf32>
    %cst_35 = arith.constant 0.000000e+00 : f32
    %46 = vector.broadcast %cst_35 : f32 to vector<16x1xf32>
    %47 = arith.cmpf ogt, %44, %46 : vector<16x1xf32>
    %cst_36 = arith.constant 1.000000e+00 : f32
    %48 = vector.broadcast %cst_36 : f32 to vector<16x1xf32>
    %49 = arith.select %47, %44, %48 : vector<16x1xi1>, vector<16x1xf32>
    %50 = tpu.reciprocal %49 {approx = true} : vector<16x1xf32> -> vector<16x1xf32>
    %51 = arith.mulf %49, %50 : vector<16x1xf32>
    %cst_37 = arith.constant 2.000000e+00 : f32
    %52 = vector.broadcast %cst_37 : f32 to vector<16x1xf32>
    %53 = arith.subf %52, %51 : vector<16x1xf32>
    %54 = arith.mulf %50, %53 : vector<16x1xf32>
    %cst_38 = arith.constant 0.000000e+00 : f32
    %55 = vector.broadcast %cst_38 : f32 to vector<16x1xf32>
    %56 = arith.cmpf ogt, %44, %55 : vector<16x1xf32>
    %57 = vector.broadcast %54 : vector<16x1xf32> to vector<16x128xf32>
    %58 = arith.mulf %45, %57 : vector<16x128xf32>
    %cst_39 = arith.constant 0.000000e+00 : f32
    %59 = vector.shape_cast %56 : vector<16x1xi1> to vector<16x1xi1>
    %60 = vector.broadcast %59 : vector<16x1xi1> to vector<16x128xi1>
    %61 = vector.broadcast %cst_39 : f32 to vector<16x128xf32>
    %62 = arith.select %60, %58, %61 : vector<16x128xi1>, vector<16x128xf32>
    %cst_40 = arith.constant 5.000000e-01 : f32
    %63 = vector.broadcast %cst_40 : f32 to vector<16x128xf32>
    %64 = arith.mulf %63, %62 : vector<16x128xf32>
    %cst_41 = arith.constant 0.707106769 : f32
    %65 = vector.broadcast %cst_41 : f32 to vector<16x128xf32>
    %66 = arith.mulf %62, %65 : vector<16x128xf32>
    %cst_42 = arith.constant 0.000000e+00 : f32
    %67 = vector.broadcast %cst_42 : f32 to vector<16x128xf32>
    %68 = arith.cmpf olt, %66, %67 : vector<16x128xf32>
    %cst_43 = arith.constant -1.000000e+00 : f32
    %cst_44 = arith.constant 1.000000e+00 : f32
    %69 = vector.broadcast %cst_43 : f32 to vector<16x128xf32>
    %70 = vector.broadcast %cst_44 : f32 to vector<16x128xf32>
    %71 = arith.select %68, %69, %70 : vector<16x128xi1>, vector<16x128xf32>
    %72 = math.absf %66 : vector<16x128xf32>
    %cst_45 = arith.constant 0.327591091 : f32
    %73 = vector.broadcast %cst_45 : f32 to vector<16x128xf32>
    %74 = arith.mulf %73, %72 : vector<16x128xf32>
    %cst_46 = arith.constant 1.000000e+00 : f32
    %75 = vector.broadcast %cst_46 : f32 to vector<16x128xf32>
    %76 = arith.addf %75, %74 : vector<16x128xf32>
    %cst_47 = arith.constant 1.000000e+00 : f32
    %77 = vector.broadcast %cst_47 : f32 to vector<16x128xf32>
    %78 = arith.divf %77, %76 : vector<16x128xf32>
    %cst_48 = arith.constant 1.06140542 : f32
    %79 = vector.broadcast %cst_48 : f32 to vector<16x128xf32>
    %80 = arith.mulf %79, %78 : vector<16x128xf32>
    %cst_49 = arith.constant -1.45315206 : f32
    %81 = vector.broadcast %cst_49 : f32 to vector<16x128xf32>
    %82 = arith.addf %80, %81 : vector<16x128xf32>
    %83 = arith.mulf %82, %78 : vector<16x128xf32>
    %cst_50 = arith.constant 1.42141378 : f32
    %84 = vector.broadcast %cst_50 : f32 to vector<16x128xf32>
    %85 = arith.addf %83, %84 : vector<16x128xf32>
    %86 = arith.mulf %85, %78 : vector<16x128xf32>
    %cst_51 = arith.constant -0.284496725 : f32
    %87 = vector.broadcast %cst_51 : f32 to vector<16x128xf32>
    %88 = arith.addf %86, %87 : vector<16x128xf32>
    %89 = arith.mulf %88, %78 : vector<16x128xf32>
    %cst_52 = arith.constant 0.254829586 : f32
    %90 = vector.broadcast %cst_52 : f32 to vector<16x128xf32>
    %91 = arith.addf %89, %90 : vector<16x128xf32>
    %92 = arith.mulf %91, %78 : vector<16x128xf32>
    %cst_53 = arith.constant 0.000000e+00 : f32
    %93 = vector.broadcast %cst_53 : f32 to vector<16x128xf32>
    %94 = arith.subf %93, %72 : vector<16x128xf32>
    %95 = arith.mulf %94, %72 : vector<16x128xf32>
    %96 = math.exp %95 : vector<16x128xf32>
    %97 = arith.mulf %92, %96 : vector<16x128xf32>
    %cst_54 = arith.constant 1.000000e+00 : f32
    %98 = vector.broadcast %cst_54 : f32 to vector<16x128xf32>
    %99 = arith.subf %98, %97 : vector<16x128xf32>
    %100 = arith.mulf %71, %99 : vector<16x128xf32>
    %cst_55 = arith.constant 1.000000e+00 : f32
    %101 = vector.broadcast %cst_55 : f32 to vector<16x128xf32>
    %102 = arith.addf %101, %100 : vector<16x128xf32>
    %103 = arith.mulf %64, %102 : vector<16x128xf32>
    %c3 = arith.constant 3 : index
    %c0_56 = arith.constant 0 : index
    %c0_57 = arith.constant 0 : index
    %104 = vector.load %arg5[%c3, %c0_56, %c0_57] : memref<20x128x128xf32, #tpu.memory_space<vmem>>, vector<1x128x128xf32>
    %105 = vector.shape_cast %104 : vector<1x128x128xf32> to vector<128x128xf32>
    %cst_58 = arith.constant dense<0.000000e+00> : vector<16x128xf32>
    %106 = tpu.matmul %103, %105, %cst_58 {dimension_numbers = #tpu.dot_dimension_numbers<[1], [0], [0], [1], [0, 0, 1, 1], [], []>} : vector<16x128xf32>, vector<128x128xf32>, vector<16x128xf32> -> vector<16x128xf32>
    %c3_59 = arith.constant 3 : index
    %c0_60 = arith.constant 0 : index
    %107 = vector.load %arg6[%c3_59, %c0_60] : memref<24x128xf32, #tpu.memory_space<vmem>>, vector<1x128xf32>
    %108 = vector.broadcast %107 : vector<1x128xf32> to vector<16x128xf32>
    %109 = arith.addf %106, %108 : vector<16x128xf32>
    %cst_61 = arith.constant 0.000000e+00 : f32
    %110 = vector.broadcast %cst_61 : f32 to vector<16x128xf32>
    %111 = arith.maximumf %109, %110 : vector<16x128xf32>
    %c4 = arith.constant 4 : index
    %c0_62 = arith.constant 0 : index
    %c0_63 = arith.constant 0 : index
    %112 = vector.load %arg5[%c4, %c0_62, %c0_63] : memref<20x128x128xf32, #tpu.memory_space<vmem>>, vector<1x128x128xf32>
    %113 = vector.shape_cast %112 : vector<1x128x128xf32> to vector<128x128xf32>
    %cst_64 = arith.constant dense<0.000000e+00> : vector<8x128xf32>
    %114 = tpu.matmul %17, %113, %cst_64 {dimension_numbers = #tpu.dot_dimension_numbers<[1], [0], [0], [1], [0, 0, 1, 1], [], []>} : vector<8x128xf32>, vector<128x128xf32>, vector<8x128xf32> -> vector<8x128xf32>
    %c4_65 = arith.constant 4 : index
    %c0_66 = arith.constant 0 : index
    %115 = vector.load %arg6[%c4_65, %c0_66] : memref<24x128xf32, #tpu.memory_space<vmem>>, vector<1x128xf32>
    %116 = vector.broadcast %115 : vector<1x128xf32> to vector<8x128xf32>
    %117 = arith.addf %114, %116 : vector<8x128xf32>
    %c6 = arith.constant 6 : index
    %c0_67 = arith.constant 0 : index
    %c0_68 = arith.constant 0 : index
    %118 = vector.load %arg5[%c6, %c0_67, %c0_68] : memref<20x128x128xf32, #tpu.memory_space<vmem>>, vector<1x128x128xf32>
    %119 = vector.shape_cast %118 : vector<1x128x128xf32> to vector<128x128xf32>
    %cst_69 = arith.constant dense<0.000000e+00> : vector<16x128xf32>
    %120 = tpu.matmul %8, %119, %cst_69 {dimension_numbers = #tpu.dot_dimension_numbers<[1], [0], [0], [1], [0, 0, 1, 1], [], []>} : vector<16x128xf32>, vector<128x128xf32>, vector<16x128xf32> -> vector<16x128xf32>
    %c6_70 = arith.constant 6 : index
    %c0_71 = arith.constant 0 : index
    %121 = vector.load %arg6[%c6_70, %c0_71] : memref<24x128xf32, #tpu.memory_space<vmem>>, vector<1x128xf32>
    %122 = vector.broadcast %121 : vector<1x128xf32> to vector<16x128xf32>
    %123 = arith.addf %120, %122 : vector<16x128xf32>
    %cst_72 = arith.constant dense<0.000000e+00> : vector<8x16xf32>
    %124 = tpu.matmul %117, %123, %cst_72 {dimension_numbers = #tpu.dot_dimension_numbers<[1], [1], [0], [0], [0, 0, 1, 0], [], []>} : vector<8x128xf32>, vector<16x128xf32>, vector<8x16xf32> -> vector<8x16xf32>
    %cst_73 = arith.constant 0.000000e+00 : f32
    %125 = vector.broadcast %cst_73 : f32 to vector<8x16xf32>
    %126 = arith.cmpf ogt, %18, %125 : vector<8x16xf32>
    %cst_74 = arith.constant -1.000000e+30 : f32
    %127 = vector.broadcast %cst_74 : f32 to vector<8x16xf32>
    %128 = arith.select %126, %124, %127 : vector<8x16xi1>, vector<8x16xf32>
    %cst_75 = arith.constant dense<0xFF800000> : vector<8xf32>
    %129 = vector.multi_reduction <maximumf>, %128, %cst_75 [1] : vector<8x16xf32> to vector<8xf32>
    %130 = vector.shape_cast %129 : vector<8xf32> to vector<8x1xf32>
    %131 = vector.broadcast %130 : vector<8x1xf32> to vector<8x16xf32>
    %132 = arith.subf %128, %131 : vector<8x16xf32>
    %133 = math.exp %132 : vector<8x16xf32>
    %134 = arith.mulf %133, %18 : vector<8x16xf32>
    %cst_76 = arith.constant dense<0.000000e+00> : vector<8xf32>
    %135 = vector.multi_reduction <add>, %134, %cst_76 [1] : vector<8x16xf32> to vector<8xf32>
    %136 = vector.shape_cast %135 : vector<8xf32> to vector<8x1xf32>
    %cst_77 = arith.constant dense<0.000000e+00> : vector<8x128xf32>
    %137 = tpu.matmul %134, %123, %cst_77 {dimension_numbers = #tpu.dot_dimension_numbers<[1], [0], [0], [1], [0, 0, 1, 1], [], []>} : vector<8x16xf32>, vector<16x128xf32>, vector<8x128xf32> -> vector<8x128xf32>
    %cst_78 = arith.constant 0.000000e+00 : f32
    %138 = vector.broadcast %cst_78 : f32 to vector<8x1xf32>
    %139 = arith.cmpf ogt, %136, %138 : vector<8x1xf32>
    %cst_79 = arith.constant 1.000000e+00 : f32
    %140 = vector.broadcast %cst_79 : f32 to vector<8x1xf32>
    %141 = arith.select %139, %136, %140 : vector<8x1xi1>, vector<8x1xf32>
    %142 = tpu.reciprocal %141 {approx = true} : vector<8x1xf32> -> vector<8x1xf32>
    %143 = arith.mulf %141, %142 : vector<8x1xf32>
    %cst_80 = arith.constant 2.000000e+00 : f32
    %144 = vector.broadcast %cst_80 : f32 to vector<8x1xf32>
    %145 = arith.subf %144, %143 : vector<8x1xf32>
    %146 = arith.mulf %142, %145 : vector<8x1xf32>
    %cst_81 = arith.constant 0.000000e+00 : f32
    %147 = vector.broadcast %cst_81 : f32 to vector<8x1xf32>
    %148 = arith.cmpf ogt, %136, %147 : vector<8x1xf32>
    %149 = vector.broadcast %146 : vector<8x1xf32> to vector<8x128xf32>
    %150 = arith.mulf %137, %149 : vector<8x128xf32>
    %cst_82 = arith.constant 0.000000e+00 : f32
    %151 = vector.shape_cast %148 : vector<8x1xi1> to vector<8x1xi1>
    %152 = vector.broadcast %151 : vector<8x1xi1> to vector<8x128xi1>
    %153 = vector.broadcast %cst_82 : f32 to vector<8x128xf32>
    %154 = arith.select %152, %150, %153 : vector<8x128xi1>, vector<8x128xf32>
    %cst_83 = arith.constant 5.000000e-01 : f32
    %155 = vector.broadcast %cst_83 : f32 to vector<8x128xf32>
    %156 = arith.mulf %155, %154 : vector<8x128xf32>
    %cst_84 = arith.constant 0.707106769 : f32
    %157 = vector.broadcast %cst_84 : f32 to vector<8x128xf32>
    %158 = arith.mulf %154, %157 : vector<8x128xf32>
    %cst_85 = arith.constant 0.000000e+00 : f32
    %159 = vector.broadcast %cst_85 : f32 to vector<8x128xf32>
    %160 = arith.cmpf olt, %158, %159 : vector<8x128xf32>
    %cst_86 = arith.constant -1.000000e+00 : f32
    %cst_87 = arith.constant 1.000000e+00 : f32
    %161 = vector.broadcast %cst_86 : f32 to vector<8x128xf32>
    %162 = vector.broadcast %cst_87 : f32 to vector<8x128xf32>
    %163 = arith.select %160, %161, %162 : vector<8x128xi1>, vector<8x128xf32>
    %164 = math.absf %158 : vector<8x128xf32>
    %cst_88 = arith.constant 0.327591091 : f32
    %165 = vector.broadcast %cst_88 : f32 to vector<8x128xf32>
    %166 = arith.mulf %165, %164 : vector<8x128xf32>
    %cst_89 = arith.constant 1.000000e+00 : f32
    %167 = vector.broadcast %cst_89 : f32 to vector<8x128xf32>
    %168 = arith.addf %167, %166 : vector<8x128xf32>
    %cst_90 = arith.constant 1.000000e+00 : f32
    %169 = vector.broadcast %cst_90 : f32 to vector<8x128xf32>
    %170 = arith.divf %169, %168 : vector<8x128xf32>
    %cst_91 = arith.constant 1.06140542 : f32
    %171 = vector.broadcast %cst_91 : f32 to vector<8x128xf32>
    %172 = arith.mulf %171, %170 : vector<8x128xf32>
    %cst_92 = arith.constant -1.45315206 : f32
    %173 = vector.broadcast %cst_92 : f32 to vector<8x128xf32>
    %174 = arith.addf %172, %173 : vector<8x128xf32>
    %175 = arith.mulf %174, %170 : vector<8x128xf32>
    %cst_93 = arith.constant 1.42141378 : f32
    %176 = vector.broadcast %cst_93 : f32 to vector<8x128xf32>
    %177 = arith.addf %175, %176 : vector<8x128xf32>
    %178 = arith.mulf %177, %170 : vector<8x128xf32>
    %cst_94 = arith.constant -0.284496725 : f32
    %179 = vector.broadcast %cst_94 : f32 to vector<8x128xf32>
    %180 = arith.addf %178, %179 : vector<8x128xf32>
    %181 = arith.mulf %180, %170 : vector<8x128xf32>
    %cst_95 = arith.constant 0.254829586 : f32
    %182 = vector.broadcast %cst_95 : f32 to vector<8x128xf32>
    %183 = arith.addf %181, %182 : vector<8x128xf32>
    %184 = arith.mulf %183, %170 : vector<8x128xf32>
    %cst_96 = arith.constant 0.000000e+00 : f32
    %185 = vector.broadcast %cst_96 : f32 to vector<8x128xf32>
    %186 = arith.subf %185, %164 : vector<8x128xf32>
    %187 = arith.mulf %186, %164 : vector<8x128xf32>
    %188 = math.exp %187 : vector<8x128xf32>
    %189 = arith.mulf %184, %188 : vector<8x128xf32>
    %cst_97 = arith.constant 1.000000e+00 : f32
    %190 = vector.broadcast %cst_97 : f32 to vector<8x128xf32>
    %191 = arith.subf %190, %189 : vector<8x128xf32>
    %192 = arith.mulf %163, %191 : vector<8x128xf32>
    %cst_98 = arith.constant 1.000000e+00 : f32
    %193 = vector.broadcast %cst_98 : f32 to vector<8x128xf32>
    %194 = arith.addf %193, %192 : vector<8x128xf32>
    %195 = arith.mulf %156, %194 : vector<8x128xf32>
    %c5 = arith.constant 5 : index
    %c0_99 = arith.constant 0 : index
    %c0_100 = arith.constant 0 : index
    %196 = vector.load %arg5[%c5, %c0_99, %c0_100] : memref<20x128x128xf32, #tpu.memory_space<vmem>>, vector<1x128x128xf32>
    %197 = vector.shape_cast %196 : vector<1x128x128xf32> to vector<128x128xf32>
    %cst_101 = arith.constant dense<0.000000e+00> : vector<8x128xf32>
    %198 = tpu.matmul %195, %197, %cst_101 {dimension_numbers = #tpu.dot_dimension_numbers<[1], [0], [0], [1], [0, 0, 1, 1], [], []>} : vector<8x128xf32>, vector<128x128xf32>, vector<8x128xf32> -> vector<8x128xf32>
    %c5_102 = arith.constant 5 : index
    %c0_103 = arith.constant 0 : index
    %199 = vector.load %arg6[%c5_102, %c0_103] : memref<24x128xf32, #tpu.memory_space<vmem>>, vector<1x128xf32>
    %200 = vector.broadcast %199 : vector<1x128xf32> to vector<8x128xf32>
    %201 = arith.addf %198, %200 : vector<8x128xf32>
    %cst_104 = arith.constant 0.000000e+00 : f32
    %202 = vector.broadcast %cst_104 : f32 to vector<8x128xf32>
    %203 = arith.maximumf %201, %202 : vector<8x128xf32>
    %c10 = arith.constant 10 : index
    %c0_105 = arith.constant 0 : index
    %c0_106 = arith.constant 0 : index
    %204 = vector.load %arg5[%c10, %c0_105, %c0_106] : memref<20x128x128xf32, #tpu.memory_space<vmem>>, vector<1x128x128xf32>
    %205 = vector.shape_cast %204 : vector<1x128x128xf32> to vector<128x128xf32>
    %cst_107 = arith.constant dense<0.000000e+00> : vector<8x128xf32>
    %206 = tpu.matmul %203, %205, %cst_107 {dimension_numbers = #tpu.dot_dimension_numbers<[1], [0], [0], [1], [0, 0, 1, 1], [], []>} : vector<8x128xf32>, vector<128x128xf32>, vector<8x128xf32> -> vector<8x128xf32>
    %c11 = arith.constant 11 : index
    %c0_108 = arith.constant 0 : index
    %207 = vector.load %arg6[%c11, %c0_108] : memref<24x128xf32, #tpu.memory_space<vmem>>, vector<1x128xf32>
    %208 = vector.broadcast %207 : vector<1x128xf32> to vector<8x128xf32>
    %209 = arith.addf %206, %208 : vector<8x128xf32>
    %c12 = arith.constant 12 : index
    %c0_109 = arith.constant 0 : index
    %c0_110 = arith.constant 0 : index
    %210 = vector.load %arg5[%c12, %c0_109, %c0_110] : memref<20x128x128xf32, #tpu.memory_space<vmem>>, vector<1x128x128xf32>
    %211 = vector.shape_cast %210 : vector<1x128x128xf32> to vector<128x128xf32>
    %cst_111 = arith.constant dense<0.000000e+00> : vector<16x128xf32>
    %212 = tpu.matmul %111, %211, %cst_111 {dimension_numbers = #tpu.dot_dimension_numbers<[1], [0], [0], [1], [0, 0, 1, 1], [], []>} : vector<16x128xf32>, vector<128x128xf32>, vector<16x128xf32> -> vector<16x128xf32>
    %c14 = arith.constant 14 : index
    %c0_112 = arith.constant 0 : index
    %213 = vector.load %arg6[%c14, %c0_112] : memref<24x128xf32, #tpu.memory_space<vmem>>, vector<1x128xf32>
    %214 = vector.broadcast %213 : vector<1x128xf32> to vector<16x128xf32>
    %215 = arith.addf %212, %214 : vector<16x128xf32>
    %cst_113 = arith.constant dense<0.000000e+00> : vector<8x16xf32>
    %216 = tpu.matmul %209, %215, %cst_113 {dimension_numbers = #tpu.dot_dimension_numbers<[1], [1], [0], [0], [0, 0, 1, 0], [], []>} : vector<8x128xf32>, vector<16x128xf32>, vector<8x16xf32> -> vector<8x16xf32>
    %cst_114 = arith.constant 0.000000e+00 : f32
    %217 = vector.broadcast %cst_114 : f32 to vector<8x16xf32>
    %218 = arith.cmpf ogt, %18, %217 : vector<8x16xf32>
    %cst_115 = arith.constant -1.000000e+30 : f32
    %219 = vector.broadcast %cst_115 : f32 to vector<8x16xf32>
    %220 = arith.select %218, %216, %219 : vector<8x16xi1>, vector<8x16xf32>
    %cst_116 = arith.constant dense<0xFF800000> : vector<8xf32>
    %221 = vector.multi_reduction <maximumf>, %220, %cst_116 [1] : vector<8x16xf32> to vector<8xf32>
    %222 = vector.shape_cast %221 : vector<8xf32> to vector<8x1xf32>
    %223 = vector.broadcast %222 : vector<8x1xf32> to vector<8x16xf32>
    %224 = arith.subf %220, %223 : vector<8x16xf32>
    %225 = math.exp %224 : vector<8x16xf32>
    %226 = arith.mulf %225, %18 : vector<8x16xf32>
    %cst_117 = arith.constant dense<0.000000e+00> : vector<8xf32>
    %227 = vector.multi_reduction <add>, %226, %cst_117 [1] : vector<8x16xf32> to vector<8xf32>
    %228 = vector.shape_cast %227 : vector<8xf32> to vector<8x1xf32>
    %cst_118 = arith.constant dense<0.000000e+00> : vector<8x128xf32>
    %229 = tpu.matmul %226, %215, %cst_118 {dimension_numbers = #tpu.dot_dimension_numbers<[1], [0], [0], [1], [0, 0, 1, 1], [], []>} : vector<8x16xf32>, vector<16x128xf32>, vector<8x128xf32> -> vector<8x128xf32>
    %cst_119 = arith.constant 0.000000e+00 : f32
    %230 = vector.broadcast %cst_119 : f32 to vector<8x1xf32>
    %231 = arith.cmpf ogt, %228, %230 : vector<8x1xf32>
    %cst_120 = arith.constant 1.000000e+00 : f32
    %232 = vector.broadcast %cst_120 : f32 to vector<8x1xf32>
    %233 = arith.select %231, %228, %232 : vector<8x1xi1>, vector<8x1xf32>
    %234 = tpu.reciprocal %233 {approx = true} : vector<8x1xf32> -> vector<8x1xf32>
    %235 = arith.mulf %233, %234 : vector<8x1xf32>
    %cst_121 = arith.constant 2.000000e+00 : f32
    %236 = vector.broadcast %cst_121 : f32 to vector<8x1xf32>
    %237 = arith.subf %236, %235 : vector<8x1xf32>
    %238 = arith.mulf %234, %237 : vector<8x1xf32>
    %cst_122 = arith.constant 0.000000e+00 : f32
    %239 = vector.broadcast %cst_122 : f32 to vector<8x1xf32>
    %240 = arith.cmpf ogt, %228, %239 : vector<8x1xf32>
    %241 = vector.broadcast %238 : vector<8x1xf32> to vector<8x128xf32>
    %242 = arith.mulf %229, %241 : vector<8x128xf32>
    %cst_123 = arith.constant 0.000000e+00 : f32
    %243 = vector.shape_cast %240 : vector<8x1xi1> to vector<8x1xi1>
    %244 = vector.broadcast %243 : vector<8x1xi1> to vector<8x128xi1>
    %245 = vector.broadcast %cst_123 : f32 to vector<8x128xf32>
    %246 = arith.select %244, %242, %245 : vector<8x128xi1>, vector<8x128xf32>
    %cst_124 = arith.constant 5.000000e-01 : f32
    %247 = vector.broadcast %cst_124 : f32 to vector<8x128xf32>
    %248 = arith.mulf %247, %246 : vector<8x128xf32>
    %cst_125 = arith.constant 0.707106769 : f32
    %249 = vector.broadcast %cst_125 : f32 to vector<8x128xf32>
    %250 = arith.mulf %246, %249 : vector<8x128xf32>
    %cst_126 = arith.constant 0.000000e+00 : f32
    %251 = vector.broadcast %cst_126 : f32 to vector<8x128xf32>
    %252 = arith.cmpf olt, %250, %251 : vector<8x128xf32>
    %cst_127 = arith.constant -1.000000e+00 : f32
    %cst_128 = arith.constant 1.000000e+00 : f32
    %253 = vector.broadcast %cst_127 : f32 to vector<8x128xf32>
    %254 = vector.broadcast %cst_128 : f32 to vector<8x128xf32>
    %255 = arith.select %252, %253, %254 : vector<8x128xi1>, vector<8x128xf32>
    %256 = math.absf %250 : vector<8x128xf32>
    %cst_129 = arith.constant 0.327591091 : f32
    %257 = vector.broadcast %cst_129 : f32 to vector<8x128xf32>
    %258 = arith.mulf %257, %256 : vector<8x128xf32>
    %cst_130 = arith.constant 1.000000e+00 : f32
    %259 = vector.broadcast %cst_130 : f32 to vector<8x128xf32>
    %260 = arith.addf %259, %258 : vector<8x128xf32>
    %cst_131 = arith.constant 1.000000e+00 : f32
    %261 = vector.broadcast %cst_131 : f32 to vector<8x128xf32>
    %262 = arith.divf %261, %260 : vector<8x128xf32>
    %cst_132 = arith.constant 1.06140542 : f32
    %263 = vector.broadcast %cst_132 : f32 to vector<8x128xf32>
    %264 = arith.mulf %263, %262 : vector<8x128xf32>
    %cst_133 = arith.constant -1.45315206 : f32
    %265 = vector.broadcast %cst_133 : f32 to vector<8x128xf32>
    %266 = arith.addf %264, %265 : vector<8x128xf32>
    %267 = arith.mulf %266, %262 : vector<8x128xf32>
    %cst_134 = arith.constant 1.42141378 : f32
    %268 = vector.broadcast %cst_134 : f32 to vector<8x128xf32>
    %269 = arith.addf %267, %268 : vector<8x128xf32>
    %270 = arith.mulf %269, %262 : vector<8x128xf32>
    %cst_135 = arith.constant -0.284496725 : f32
    %271 = vector.broadcast %cst_135 : f32 to vector<8x128xf32>
    %272 = arith.addf %270, %271 : vector<8x128xf32>
    %273 = arith.mulf %272, %262 : vector<8x128xf32>
    %cst_136 = arith.constant 0.254829586 : f32
    %274 = vector.broadcast %cst_136 : f32 to vector<8x128xf32>
    %275 = arith.addf %273, %274 : vector<8x128xf32>
    %276 = arith.mulf %275, %262 : vector<8x128xf32>
    %cst_137 = arith.constant 0.000000e+00 : f32
    %277 = vector.broadcast %cst_137 : f32 to vector<8x128xf32>
    %278 = arith.subf %277, %256 : vector<8x128xf32>
    %279 = arith.mulf %278, %256 : vector<8x128xf32>
    %280 = math.exp %279 : vector<8x128xf32>
    %281 = arith.mulf %276, %280 : vector<8x128xf32>
    %cst_138 = arith.constant 1.000000e+00 : f32
    %282 = vector.broadcast %cst_138 : f32 to vector<8x128xf32>
    %283 = arith.subf %282, %281 : vector<8x128xf32>
    %284 = arith.mulf %255, %283 : vector<8x128xf32>
    %cst_139 = arith.constant 1.000000e+00 : f32
    %285 = vector.broadcast %cst_139 : f32 to vector<8x128xf32>
    %286 = arith.addf %285, %284 : vector<8x128xf32>
    %287 = arith.mulf %248, %286 : vector<8x128xf32>
    %c11_140 = arith.constant 11 : index
    %c0_141 = arith.constant 0 : index
    %c0_142 = arith.constant 0 : index
    %288 = vector.load %arg5[%c11_140, %c0_141, %c0_142] : memref<20x128x128xf32, #tpu.memory_space<vmem>>, vector<1x128x128xf32>
    %289 = vector.shape_cast %288 : vector<1x128x128xf32> to vector<128x128xf32>
    %cst_143 = arith.constant dense<0.000000e+00> : vector<8x128xf32>
    %290 = tpu.matmul %287, %289, %cst_143 {dimension_numbers = #tpu.dot_dimension_numbers<[1], [0], [0], [1], [0, 0, 1, 1], [], []>} : vector<8x128xf32>, vector<128x128xf32>, vector<8x128xf32> -> vector<8x128xf32>
    %c12_144 = arith.constant 12 : index
    %c0_145 = arith.constant 0 : index
    %291 = vector.load %arg6[%c12_144, %c0_145] : memref<24x128xf32, #tpu.memory_space<vmem>>, vector<1x128xf32>
    %292 = vector.broadcast %291 : vector<1x128xf32> to vector<8x128xf32>
    %293 = arith.addf %290, %292 : vector<8x128xf32>
    %c13 = arith.constant 13 : index
    %c0_146 = arith.constant 0 : index
    %294 = vector.load %arg6[%c13, %c0_146] : memref<24x128xf32, #tpu.memory_space<vmem>>, vector<1x128xf32>
    %295 = vector.broadcast %294 : vector<1x128xf32> to vector<8x128xf32>
    %296 = arith.mulf %295, %203 : vector<8x128xf32>
    %297 = arith.addf %293, %296 : vector<8x128xf32>
    %cst_147 = arith.constant 0.000000e+00 : f32
    %298 = vector.broadcast %cst_147 : f32 to vector<8x128xf32>
    %299 = arith.maximumf %297, %298 : vector<8x128xf32>
    %300 = tpu.iota {dimensions = array<i32: 0>} : vector<8x8xi32>
    %301 = tpu.iota {dimensions = array<i32: 1>} : vector<8x8xi32>
    %cst_148 = arith.constant 0.000000e+00 : f32
    %302 = vector.broadcast %cst_148 : f32 to vector<8x128xf32>
    %c4_i32 = arith.constant 4 : i32
    %303 = vector.broadcast %c4_i32 : i32 to vector<8x8xi32>
    %304 = arith.muli %303, %300 : vector<8x8xi32>
    %c0_i32 = arith.constant 0 : i32
    %305 = vector.broadcast %c0_i32 : i32 to vector<8x8xi32>
    %306 = arith.addi %304, %305 : vector<8x8xi32>
    %307 = arith.cmpi eq, %301, %306 : vector<8x8xi32>
    %308 = arith.extui %307 : vector<8x8xi1> to vector<8x8xi32>
    %309 = arith.sitofp %308 : vector<8x8xi32> to vector<8x8xf32>
    %c14_149 = arith.constant 14 : index
    %c0_150 = arith.constant 0 : index
    %c0_151 = arith.constant 0 : index
    %310 = vector.load %arg5[%c14_149, %c0_150, %c0_151] : memref<20x128x128xf32, #tpu.memory_space<vmem>>, vector<1x128x128xf32>
    %311 = vector.shape_cast %310 : vector<1x128x128xf32> to vector<128x128xf32>
    %cst_152 = arith.constant dense<0.000000e+00> : vector<8x128xf32>
    %312 = tpu.matmul %299, %311, %cst_152 {dimension_numbers = #tpu.dot_dimension_numbers<[1], [0], [0], [1], [0, 0, 1, 1], [], []>} : vector<8x128xf32>, vector<128x128xf32>, vector<8x128xf32> -> vector<8x128xf32>
    %cst_153 = arith.constant dense<0.000000e+00> : vector<8x128xf32>
    %313 = tpu.matmul %309, %312, %cst_153 {dimension_numbers = #tpu.dot_dimension_numbers<[1], [0], [0], [1], [0, 0, 1, 1], [], []>} : vector<8x8xf32>, vector<8x128xf32>, vector<8x128xf32> -> vector<8x128xf32>
    %314 = arith.addf %302, %313 : vector<8x128xf32>
    %c4_i32_154 = arith.constant 4 : i32
    %315 = vector.broadcast %c4_i32_154 : i32 to vector<8x8xi32>
    %316 = arith.muli %315, %300 : vector<8x8xi32>
    %c1_i32 = arith.constant 1 : i32
    %317 = vector.broadcast %c1_i32 : i32 to vector<8x8xi32>
    %318 = arith.addi %316, %317 : vector<8x8xi32>
    %319 = arith.cmpi eq, %301, %318 : vector<8x8xi32>
    %320 = arith.extui %319 : vector<8x8xi1> to vector<8x8xi32>
    %321 = arith.sitofp %320 : vector<8x8xi32> to vector<8x8xf32>
    %c15 = arith.constant 15 : index
    %c0_155 = arith.constant 0 : index
    %c0_156 = arith.constant 0 : index
    %322 = vector.load %arg5[%c15, %c0_155, %c0_156] : memref<20x128x128xf32, #tpu.memory_space<vmem>>, vector<1x128x128xf32>
    %323 = vector.shape_cast %322 : vector<1x128x128xf32> to vector<128x128xf32>
    %cst_157 = arith.constant dense<0.000000e+00> : vector<8x128xf32>
    %324 = tpu.matmul %299, %323, %cst_157 {dimension_numbers = #tpu.dot_dimension_numbers<[1], [0], [0], [1], [0, 0, 1, 1], [], []>} : vector<8x128xf32>, vector<128x128xf32>, vector<8x128xf32> -> vector<8x128xf32>
    %cst_158 = arith.constant dense<0.000000e+00> : vector<8x128xf32>
    %325 = tpu.matmul %321, %324, %cst_158 {dimension_numbers = #tpu.dot_dimension_numbers<[1], [0], [0], [1], [0, 0, 1, 1], [], []>} : vector<8x8xf32>, vector<8x128xf32>, vector<8x128xf32> -> vector<8x128xf32>
    %326 = arith.addf %314, %325 : vector<8x128xf32>
    %c4_i32_159 = arith.constant 4 : i32
    %327 = vector.broadcast %c4_i32_159 : i32 to vector<8x8xi32>
    %328 = arith.muli %327, %300 : vector<8x8xi32>
    %c2_i32 = arith.constant 2 : i32
    %329 = vector.broadcast %c2_i32 : i32 to vector<8x8xi32>
    %330 = arith.addi %328, %329 : vector<8x8xi32>
    %331 = arith.cmpi eq, %301, %330 : vector<8x8xi32>
    %332 = arith.extui %331 : vector<8x8xi1> to vector<8x8xi32>
    %333 = arith.sitofp %332 : vector<8x8xi32> to vector<8x8xf32>
    %c16 = arith.constant 16 : index
    %c0_160 = arith.constant 0 : index
    %c0_161 = arith.constant 0 : index
    %334 = vector.load %arg5[%c16, %c0_160, %c0_161] : memref<20x128x128xf32, #tpu.memory_space<vmem>>, vector<1x128x128xf32>
    %335 = vector.shape_cast %334 : vector<1x128x128xf32> to vector<128x128xf32>
    %cst_162 = arith.constant dense<0.000000e+00> : vector<8x128xf32>
    %336 = tpu.matmul %299, %335, %cst_162 {dimension_numbers = #tpu.dot_dimension_numbers<[1], [0], [0], [1], [0, 0, 1, 1], [], []>} : vector<8x128xf32>, vector<128x128xf32>, vector<8x128xf32> -> vector<8x128xf32>
    %cst_163 = arith.constant dense<0.000000e+00> : vector<8x128xf32>
    %337 = tpu.matmul %333, %336, %cst_163 {dimension_numbers = #tpu.dot_dimension_numbers<[1], [0], [0], [1], [0, 0, 1, 1], [], []>} : vector<8x8xf32>, vector<8x128xf32>, vector<8x128xf32> -> vector<8x128xf32>
    %338 = arith.addf %326, %337 : vector<8x128xf32>
    %c4_i32_164 = arith.constant 4 : i32
    %339 = vector.broadcast %c4_i32_164 : i32 to vector<8x8xi32>
    %340 = arith.muli %339, %300 : vector<8x8xi32>
    %c3_i32 = arith.constant 3 : i32
    %341 = vector.broadcast %c3_i32 : i32 to vector<8x8xi32>
    %342 = arith.addi %340, %341 : vector<8x8xi32>
    %343 = arith.cmpi eq, %301, %342 : vector<8x8xi32>
    %344 = arith.extui %343 : vector<8x8xi1> to vector<8x8xi32>
    %345 = arith.sitofp %344 : vector<8x8xi32> to vector<8x8xf32>
    %c17 = arith.constant 17 : index
    %c0_165 = arith.constant 0 : index
    %c0_166 = arith.constant 0 : index
    %346 = vector.load %arg5[%c17, %c0_165, %c0_166] : memref<20x128x128xf32, #tpu.memory_space<vmem>>, vector<1x128x128xf32>
    %347 = vector.shape_cast %346 : vector<1x128x128xf32> to vector<128x128xf32>
    %cst_167 = arith.constant dense<0.000000e+00> : vector<8x128xf32>
    %348 = tpu.matmul %299, %347, %cst_167 {dimension_numbers = #tpu.dot_dimension_numbers<[1], [0], [0], [1], [0, 0, 1, 1], [], []>} : vector<8x128xf32>, vector<128x128xf32>, vector<8x128xf32> -> vector<8x128xf32>
    %cst_168 = arith.constant dense<0.000000e+00> : vector<8x128xf32>
    %349 = tpu.matmul %345, %348, %cst_168 {dimension_numbers = #tpu.dot_dimension_numbers<[1], [0], [0], [1], [0, 0, 1, 1], [], []>} : vector<8x8xf32>, vector<8x128xf32>, vector<8x128xf32> -> vector<8x128xf32>
    %350 = arith.addf %338, %349 : vector<8x128xf32>
    %c0_169 = arith.constant 0 : index
    %c0_170 = arith.constant 0 : index
    %351 = vector.load %arg4[%c0_169, %c0_170] : memref<8x128xf32, #tpu.memory_space<vmem>>, vector<8x128xf32>
    %c18 = arith.constant 18 : index
    %c0_171 = arith.constant 0 : index
    %c0_172 = arith.constant 0 : index
    %352 = vector.load %arg5[%c18, %c0_171, %c0_172] : memref<20x128x128xf32, #tpu.memory_space<vmem>>, vector<1x128x128xf32>
    %353 = vector.shape_cast %352 : vector<1x128x128xf32> to vector<128x128xf32>
    %cst_173 = arith.constant dense<0.000000e+00> : vector<8x128xf32>
    %354 = tpu.matmul %351, %353, %cst_173 {dimension_numbers = #tpu.dot_dimension_numbers<[1], [0], [0], [1], [0, 0, 1, 1], [], []>} : vector<8x128xf32>, vector<128x128xf32>, vector<8x128xf32> -> vector<8x128xf32>
    %355 = arith.addf %350, %354 : vector<8x128xf32>
    %c16_174 = arith.constant 16 : index
    %c0_175 = arith.constant 0 : index
    %356 = vector.load %arg6[%c16_174, %c0_175] : memref<24x128xf32, #tpu.memory_space<vmem>>, vector<1x128xf32>
    %357 = vector.broadcast %356 : vector<1x128xf32> to vector<8x128xf32>
    %358 = arith.addf %355, %357 : vector<8x128xf32>
    %cst_176 = arith.constant 0.000000e+00 : f32
    %359 = vector.broadcast %cst_176 : f32 to vector<8x128xf32>
    %360 = arith.maximumf %358, %359 : vector<8x128xf32>
    %c19 = arith.constant 19 : index
    %c0_177 = arith.constant 0 : index
    %c0_178 = arith.constant 0 : index
    %361 = vector.load %arg5[%c19, %c0_177, %c0_178] : memref<20x128x128xf32, #tpu.memory_space<vmem>>, vector<1x128x128xf32>
    %362 = vector.shape_cast %361 : vector<1x128x128xf32> to vector<128x128xf32>
    %cst_179 = arith.constant dense<0.000000e+00> : vector<8x128xf32>
    %363 = tpu.matmul %360, %362, %cst_179 {dimension_numbers = #tpu.dot_dimension_numbers<[1], [0], [0], [1], [0, 0, 1, 1], [], []>} : vector<8x128xf32>, vector<128x128xf32>, vector<8x128xf32> -> vector<8x128xf32>
    %c17_180 = arith.constant 17 : index
    %c0_181 = arith.constant 0 : index
    %364 = vector.load %arg6[%c17_180, %c0_181] : memref<24x128xf32, #tpu.memory_space<vmem>>, vector<1x128xf32>
    %365 = vector.broadcast %364 : vector<1x128xf32> to vector<8x128xf32>
    %366 = arith.addf %363, %365 : vector<8x128xf32>
    %c0_182 = arith.constant 0 : index
    %c0_183 = arith.constant 0 : index
    %367 = vector.load %arg7[%c0_182, %c0_183] : memref<8x128xf32, #tpu.memory_space<vmem>>, vector<8x128xf32>
    tpu.vector_store %arg7[%c0_182, %c0_183], %366 {strides = array<i32>} : memref<8x128xf32, #tpu.memory_space<vmem>>, vector<8x128xf32>,
    return
  }
}

</mosaic_0001>

<llo_original>
// kernel: forward.1
$region0: #{forward.1}
  #allocation0 [shape = 'u32[]', space=smem, size = 0x4, offset = 0x4, fixed_abs, tag = 'smem constant byte address 0x4 - core index']
  #allocation1 [shape = 'u32[144,128]{1,0:T(1,128)}', space=vmem, size = 0x12000, scoped, tag = 'internal scratch']
  %s0 = inlined_call_operand.vmem [shape: f32[16,128], index: 0, kind: input, shape index: {}]
  %s1 = inlined_call_operand.vmem [shape: f32[8,128], index: 1, kind: input, shape index: {}]
  %s2 = inlined_call_operand.vmem [shape: f32[8,16], index: 2, kind: input, shape index: {}]
  %s3 = inlined_call_operand.vmem [shape: f32[16,8], index: 3, kind: input, shape index: {}]
  %s4 = inlined_call_operand.vmem [shape: f32[8,128], index: 4, kind: input, shape index: {}]
  %s5 = inlined_call_operand.hbm [shape: f32[20,128,128], index: 5, kind: input, shape index: {}]
  %s6 = inlined_call_operand.hbm [shape: f32[24,128], index: 6, kind: input, shape index: {}]
  %s7 = inlined_call_operand.vmem [shape: f32[8,128], index: 7, kind: output, shape index: {}]
  %s8 = sld [smem:[#allocation0]]
  $region46: #{forward.1} parent=0
    _
  %s10 = ssub.s32 1, %s8
  %s11 = scalar_select 0, %s10, %s8
  $region1: #{forward.1} parent=0
    #allocation2 [shape = 'u8[1310720]{0}', space=vmem, size = 0x140000, scoped, tag = 'input window, operand 5, single buffered']
    #allocation3 [shape = 's32[1]{0}', space=sflag, size = 0x4, scoped, tag = 'scoped memory for forward.1']
    #allocation4 [shape = 'u8[12288]{0}', space=vmem, size = 0x3000, scoped, tag = 'input window, operand 6, single buffered']
    #allocation5 [shape = 's32[1]{0}', space=sflag, size = 0x4, scoped, tag = 'scoped memory for forward.1']
    %12 = vsyncpa [#allocation3], 0
    %13 = vsyncpa [#allocation5], 0
    // Predicated region
    $region2: #{forward.1} parent=1 // pred_check
      _
    $region3: #{forward.1} parent=1 // pred_check_branch
      %15 = sbr.rel (0) target = $region5
    $region4: #{forward.1} parent=1 // pred_region
      _
    $region5: #{forward.1} parent=1 // pred_fallthru
      _
    // Predicated region
    $region6: #{forward.1} parent=1 // pred_check
      _
    $region7: #{forward.1} parent=1 // pred_check_branch
      %17 = sbr.rel (0) target = $region9
    $region8: #{forward.1} parent=1 // pred_region
      _
    $region9: #{forward.1} parent=1 // pred_fallthru
      _
    // Predicated region
    $region10: #{forward.1} parent=1 // pred_check
      _
    $region11: #{forward.1} parent=1 // pred_check_branch
      %19 = sbr.rel (0) target = $region13
    $region12: #{forward.1} parent=1 // pred_region
      _
    $region13: #{forward.1} parent=1 // pred_fallthru
      _
    // Predicated region
    $region14: #{forward.1} parent=1 // pred_check
      _
    $region15: #{forward.1} parent=1 // pred_check_branch
      %21 = sbr.rel (0) target = $region17
    $region16: #{forward.1} parent=1 // pred_region
      _
    $region17: #{forward.1} parent=1 // pred_fallthru
      _
    // Predicated region
    $region18: #{forward.1} parent=1 // pred_check
      _
    $region19: #{forward.1} parent=1 // pred_check_branch
      %23 = sbr.rel (0) target = $region21
    $region20: #{forward.1} parent=1 // pred_region
      _
    $region21: #{forward.1} parent=1 // pred_fallthru
      _
    // Predicated region
    $region22: #{forward.1} parent=1 // pred_check
      _
    $region23: #{forward.1} parent=1 // pred_check_branch
      %25 = sbr.rel (0) target = $region25
    $region24: #{forward.1} parent=1 // pred_region
      %s27 = ssub.s32 40960, 40960
      %28 = vsyncadd [#allocation3], %s27
      %s29 = sshll.u32 [#allocation2], 4
      %s30 = int_to_ptr.vmem [resolvable:$true] %s29
      %35 = dma.hbm_to_vmem [thread:$0]  %s5, 40960, %s30, [#allocation3], 128, 128, 8
    $region25: #{forward.1} parent=1 // pred_fallthru
      _
    // Predicated region
    $region26: #{forward.1} parent=1 // pred_check
      _
    $region27: #{forward.1} parent=1 // pred_check_branch
      %37 = sbr.rel (0) target = $region29
    $region28: #{forward.1} parent=1 // pred_region
      %s39 = ssub.s32 384, 384
      %40 = vsyncadd [#allocation5], %s39
      %s41 = sshll.u32 [#allocation4], 4
      %s42 = int_to_ptr.vmem [resolvable:$true] %s41
      %47 = dma.hbm_to_vmem [thread:$0]  %s6, 384, %s42, [#allocation5], 128, 128, 8
    $region29: #{forward.1} parent=1 // pred_fallthru
      _
    // Predicated region
    $region30: #{forward.1} parent=1 // pred_check
      _
    $region31: #{forward.1} parent=1 // pred_check_branch
      %49 = sbr.rel (0) target = $region33
    $region32: #{forward.1} parent=1 // pred_region
      %50 = dma.done [#allocation3], 40960
    $region33: #{forward.1} parent=1 // pred_fallthru
      _
    // Predicated region
    $region34: #{forward.1} parent=1 // pred_check
      _
    $region35: #{forward.1} parent=1 // pred_check_branch
      %52 = sbr.rel (0) target = $region37
    $region36: #{forward.1} parent=1 // pred_region
      %53 = dma.done [#allocation5], 384
    $region37: #{forward.1} parent=1 // pred_fallthru
      _
    %v54 = vld [vmem:[%s0] sm:$0xff]
    %v55 = vld [vmem:[%s0 + $0x8] sm:$0xff]
    %v56 = vld [vmem:[#allocation2] sm:$0xff]
    %v57 = vld [vmem:[#allocation2 + $0x8] sm:$0xff]
    %v58 = vld [vmem:[#allocation2 + $0x10] sm:$0xff]
    %v59 = vld [vmem:[#allocation2 + $0x18] sm:$0xff]
    %v60 = vld [vmem:[#allocation2 + $0x20] sm:$0xff]
    %v61 = vld [vmem:[#allocation2 + $0x28] sm:$0xff]
    %v62 = vld [vmem:[#allocation2 + $0x30] sm:$0xff]
    %v63 = vld [vmem:[#allocation2 + $0x38] sm:$0xff]
    %v64 = vld [vmem:[#allocation2 + $0x40] sm:$0xff]
    %v65 = vld [vmem:[#allocation2 + $0x48] sm:$0xff]
    %v66 = vld [vmem:[#allocation2 + $0x50] sm:$0xff]
    %v67 = vld [vmem:[#allocation2 + $0x58] sm:$0xff]
    %v68 = vld [vmem:[#allocation2 + $0x60] sm:$0xff]
    %v69 = vld [vmem:[#allocation2 + $0x68] sm:$0xff]
    %v70 = vld [vmem:[#allocation2 + $0x70] sm:$0xff]
    %v71 = vld [vmem:[#allocation2 + $0x78] sm:$0xff]
    %v72 = vld [vmem:[#allocation4] sm:$0x1]
    %v73 = vlaneseq
    %v74 = vshrl.u32 %v73, 7
    %v75 = vsub.s32 0, %v74
    %v76 = vrot.slane %v72, %v75
    %77 = vmatprep.subr.mxu0 0.0
    %78 = vmatpush1.msra.mxu0 %v56
    %79 = vmatprep.subr.mxu0 0.0
    %80 = vmatpush1.msra.mxu0 %v57
    %81 = vmatprep.subr.mxu0 0.0
    %82 = vmatpush1.msra.mxu0 %v58
    %83 = vmatprep.subr.mxu0 0.0
    %84 = vmatpush1.msra.mxu0 %v59
    %85 = vmatprep.subr.mxu0 0.0
    %86 = vmatpush1.msra.mxu0 %v60
    %87 = vmatprep.subr.mxu0 0.0
    %88 = vmatpush1.msra.mxu0 %v61
    %89 = vmatprep.subr.mxu0 0.0
    %90 = vmatpush1.msra.mxu0 %v62
    %91 = vmatprep.subr.mxu0 0.0
    %92 = vmatpush1.msra.mxu0 %v63
    %93 = vmatprep.subr.mxu0 0.0
    %94 = vmatpush1.msra.mxu0 %v64
    %95 = vmatprep.subr.mxu0 0.0
    %96 = vmatpush1.msra.mxu0 %v65
    %97 = vmatprep.subr.mxu0 0.0
    %98 = vmatpush1.msra.mxu0 %v66
    %99 = vmatprep.subr.mxu0 0.0
    %100 = vmatpush1.msra.mxu0 %v67
    %101 = vmatprep.subr.mxu0 0.0
    %102 = vmatpush1.msra.mxu0 %v68
    %103 = vmatprep.subr.mxu0 0.0
    %104 = vmatpush1.msra.mxu0 %v69
    %105 = vmatprep.subr.mxu0 0.0
    %106 = vmatpush1.msra.mxu0 %v70
    %107 = vmatprep.subr.mxu0 0.0
    %108 = vmatpush1.msra.mxu0 %v71
    %109 = vmatprep.subr.mxu0 0.0
    %110 = vmatpush1.msra.mxu0 0.0
    %111 = vmatprep.subr.mxu0 0.0
    %112 = vmatpush1.msra.mxu0 0.0
    %113 = vmatprep.subr.mxu0 0.0
    %114 = vmatpush1.msra.mxu0 0.0
    %115 = vmatprep.subr.mxu0 0.0
    %116 = vmatpush1.msra.mxu0 0.0
    %117 = vmatprep.subr.mxu0 0.0
    %118 = vmatpush1.msra.mxu0 0.0
    %119 = vmatprep.subr.mxu0 0.0
    %120 = vmatpush1.msra.mxu0 0.0
    %121 = vmatprep.subr.mxu0 0.0
    %122 = vmatpush1.msra.mxu0 0.0
    %123 = vmatprep.subr.mxu0 0.0
    %124 = vmatpush1.msra.mxu0 0.0
    %125 = vmatprep.subr.mxu0 0.0
    %126 = vmatpush1.msra.mxu0 0.0
    %127 = vmatprep.subr.mxu0 0.0
    %128 = vmatpush1.msra.mxu0 0.0
    %129 = vmatprep.subr.mxu0 0.0
    %130 = vmatpush1.msra.mxu0 0.0
    %131 = vmatprep.subr.mxu0 0.0
    %132 = vmatpush1.msra.mxu0 0.0
    %133 = vmatprep.subr.mxu0 0.0
    %134 = vmatpush1.msra.mxu0 0.0
    %135 = vmatprep.subr.mxu0 0.0
    %136 = vmatpush1.msra.mxu0 0.0
    %137 = vmatprep.subr.mxu0 0.0
    %138 = vmatpush1.msra.mxu0 0.0
    %139 = vmatprep.subr.mxu0 0.0
    %140 = vmatpush1.msra.mxu0 0.0
    %141 = vmatprep.mubr.f32.mxu0 0.0
    %142 = vmatmul.mubr.f32.gmra.mrb[0].mxu0 %v54
    %v143 = vpop.f32.mrb[0].mxu0
    %v144 = vadd.f32 %v76, %v143
    %v145 = vpop.f32.mrb[0].mxu0
    %146 = vmatprep.mubr.f32.mxu0 0.0
    %147 = vmatmul.mubr.f32.gmra.mrb[0].mxu0 %v55
    %v148 = vpop.f32.mrb[0].mxu0
    %v149 = vadd.f32 %v76, %v148
    %v150 = vpop.f32.mrb[0].mxu0
    %151 = vdwg.mxu0
    %v152 = vmax.f32 %v144, 0.0
    %v153 = vmax.f32 %v149, 0.0
    %v154 = vld [vmem:[%s1] sm:$0xff]
    %s155 = scalar_lea.vmem [#allocation2], 128
    %v156 = vld [vmem:[%s155] sm:$0xff]
    %v157 = vld [vmem:[%s155 + $0x8] sm:$0xff]
    %v158 = vld [vmem:[%s155 + $0x10] sm:$0xff]
    %v159 = vld [vmem:[%s155 + $0x18] sm:$0xff]
    %v160 = vld [vmem:[%s155 + $0x20] sm:$0xff]
    %v161 = vld [vmem:[%s155 + $0x28] sm:$0xff]
    %v162 = vld [vmem:[%s155 + $0x30] sm:$0xff]
    %v163 = vld [vmem:[%s155 + $0x38] sm:$0xff]
    %v164 = vld [vmem:[%s155 + $0x40] sm:$0xff]
    %v165 = vld [vmem:[%s155 + $0x48] sm:$0xff]
    %v166 = vld [vmem:[%s155 + $0x50] sm:$0xff]
    %v167 = vld [vmem:[%s155 + $0x58] sm:$0xff]
    %v168 = vld [vmem:[%s155 + $0x60] sm:$0xff]
    %v169 = vld [vmem:[%s155 + $0x68] sm:$0xff]
    %v170 = vld [vmem:[%s155 + $0x70] sm:$0xff]
    %v171 = vld [vmem:[%s155 + $0x78] sm:$0xff]
    %v172 = vld [vmem:[#allocation4 + $0x1] sm:$0x1]
    %v173 = vlaneseq
    %v174 = vshrl.u32 %v173, 7
    %v175 = vsub.s32 0, %v174
    %v176 = vrot.slane %v172, %v175
    %177 = vmatprep.subr.mxu0 0.0
    %178 = vmatpush1.msra.mxu0 %v156
    %179 = vmatprep.subr.mxu0 0.0
    %180 = vmatpush1.msra.mxu0 %v157
    %181 = vmatprep.subr.mxu0 0.0
    %182 = vmatpush1.msra.mxu0 %v158
    %183 = vmatprep.subr.mxu0 0.0
    %184 = vmatpush1.msra.mxu0 %v159
    %185 = vmatprep.subr.mxu0 0.0
    %186 = vmatpush1.msra.mxu0 %v160
    %187 = vmatprep.subr.mxu0 0.0
    %188 = vmatpush1.msra.mxu0 %v161
    %189 = vmatprep.subr.mxu0 0.0
    %190 = vmatpush1.msra.mxu0 %v162
    %191 = vmatprep.subr.mxu0 0.0
    %192 = vmatpush1.msra.mxu0 %v163
    %193 = vmatprep.subr.mxu0 0.0
    %194 = vmatpush1.msra.mxu0 %v164
    %195 = vmatprep.subr.mxu0 0.0
    %196 = vmatpush1.msra.mxu0 %v165
    %197 = vmatprep.subr.mxu0 0.0
    %198 = vmatpush1.msra.mxu0 %v166
    %199 = vmatprep.subr.mxu0 0.0
    %200 = vmatpush1.msra.mxu0 %v167
    %201 = vmatprep.subr.mxu0 0.0
    %202 = vmatpush1.msra.mxu0 %v168
    %203 = vmatprep.subr.mxu0 0.0
    %204 = vmatpush1.msra.mxu0 %v169
    %205 = vmatprep.subr.mxu0 0.0
    %206 = vmatpush1.msra.mxu0 %v170
    %207 = vmatprep.subr.mxu0 0.0
    %208 = vmatpush1.msra.mxu0 %v171
    %209 = vmatprep.subr.mxu0 0.0
    %210 = vmatpush1.msra.mxu0 0.0
    %211 = vmatprep.subr.mxu0 0.0
    %212 = vmatpush1.msra.mxu0 0.0
    %213 = vmatprep.subr.mxu0 0.0
    %214 = vmatpush1.msra.mxu0 0.0
    %215 = vmatprep.subr.mxu0 0.0
    %216 = vmatpush1.msra.mxu0 0.0
    %217 = vmatprep.subr.mxu0 0.0
    %218 = vmatpush1.msra.mxu0 0.0
    %219 = vmatprep.subr.mxu0 0.0
    %220 = vmatpush1.msra.mxu0 0.0
    %221 = vmatprep.subr.mxu0 0.0
    %222 = vmatpush1.msra.mxu0 0.0
    %223 = vmatprep.subr.mxu0 0.0
    %224 = vmatpush1.msra.mxu0 0.0
    %225 = vmatprep.subr.mxu0 0.0
    %226 = vmatpush1.msra.mxu0 0.0
    %227 = vmatprep.subr.mxu0 0.0
    %228 = vmatpush1.msra.mxu0 0.0
    %229 = vmatprep.subr.mxu0 0.0
    %230 = vmatpush1.msra.mxu0 0.0
    %231 = vmatprep.subr.mxu0 0.0
    %232 = vmatpush1.msra.mxu0 0.0
    %233 = vmatprep.subr.mxu0 0.0
    %234 = vmatpush1.msra.mxu0 0.0
    %235 = vmatprep.subr.mxu0 0.0
    %236 = vmatpush1.msra.mxu0 0.0
    %237 = vmatprep.subr.mxu0 0.0
    %238 = vmatpush1.msra.mxu0 0.0
    %239 = vmatprep.subr.mxu0 0.0
    %240 = vmatpush1.msra.mxu0 0.0
    %241 = vmatprep.mubr.f32.mxu0 0.0
    %242 = vmatmul.mubr.f32.gmra.mrb[0].mxu0 %v154
    %v243 = vpop.f32.mrb[0].mxu0
    %v244 = vadd.f32 %v176, %v243
    %v245 = vpop.f32.mrb[0].mxu0
    %246 = vdwg.mxu0
    %v247 = vmax.f32 %v244, 0.0
    %v248 = vld [vmem:[%s2] sm:$0xff]
    %v249 = vld [vmem:[%s3] sm:$0xff]
    %v250 = vld [vmem:[%s3 + $0x8] sm:$0xff]
    %s251 = scalar_lea.vmem [#allocation2], 256
    %v252 = vld [vmem:[%s251] sm:$0xff]
    %v253 = vld [vmem:[%s251 + $0x8] sm:$0xff]
    %v254 = vld [vmem:[%s251 + $0x10] sm:$0xff]
    %v255 = vld [vmem:[%s251 + $0x18] sm:$0xff]
    %v256 = vld [vmem:[%s251 + $0x20] sm:$0xff]
    %v257 = vld [vmem:[%s251 + $0x28] sm:$0xff]
    %v258 = vld [vmem:[%s251 + $0x30] sm:$0xff]
    %v259 = vld [vmem:[%s251 + $0x38] sm:$0xff]
    %v260 = vld [vmem:[%s251 + $0x40] sm:$0xff]
    %v261 = vld [vmem:[%s251 + $0x48] sm:$0xff]
    %v262 = vld [vmem:[%s251 + $0x50] sm:$0xff]
    %v263 = vld [vmem:[%s251 + $0x58] sm:$0xff]
    %v264 = vld [vmem:[%s251 + $0x60] sm:$0xff]
    %v265 = vld [vmem:[%s251 + $0x68] sm:$0xff]
    %v266 = vld [vmem:[%s251 + $0x70] sm:$0xff]
    %v267 = vld [vmem:[%s251 + $0x78] sm:$0xff]
    %v268 = vld [vmem:[#allocation4 + $0x2] sm:$0x1]
    %v269 = vlaneseq
    %v270 = vshrl.u32 %v269, 7
    %v271 = vsub.s32 0, %v270
    %v272 = vrot.slane %v268, %v271
    %273 = vmatprep.subr.mxu0 0.0
    %274 = vmatpush1.msra.mxu0 %v252
    %275 = vmatprep.subr.mxu0 0.0
    %276 = vmatpush1.msra.mxu0 %v253
    %277 = vmatprep.subr.mxu0 0.0
    %278 = vmatpush1.msra.mxu0 %v254
    %279 = vmatprep.subr.mxu0 0.0
    %280 = vmatpush1.msra.mxu0 %v255
    %281 = vmatprep.subr.mxu0 0.0
    %282 = vmatpush1.msra.mxu0 %v256
    %283 = vmatprep.subr.mxu0 0.0
    %284 = vmatpush1.msra.mxu0 %v257
    %285 = vmatprep.subr.mxu0 0.0
    %286 = vmatpush1.msra.mxu0 %v258
    %287 = vmatprep.subr.mxu0 0.0
    %288 = vmatpush1.msra.mxu0 %v259
    %289 = vmatprep.subr.mxu0 0.0
    %290 = vmatpush1.msra.mxu0 %v260
    %291 = vmatprep.subr.mxu0 0.0
    %292 = vmatpush1.msra.mxu0 %v261
    %293 = vmatprep.subr.mxu0 0.0
    %294 = vmatpush1.msra.mxu0 %v262
    %295 = vmatprep.subr.mxu0 0.0
    %296 = vmatpush1.msra.mxu0 %v263
    %297 = vmatprep.subr.mxu0 0.0
    %298 = vmatpush1.msra.mxu0 %v264
    %299 = vmatprep.subr.mxu0 0.0
    %300 = vmatpush1.msra.mxu0 %v265
    %301 = vmatprep.subr.mxu0 0.0
    %302 = vmatpush1.msra.mxu0 %v266
    %303 = vmatprep.subr.mxu0 0.0
    %304 = vmatpush1.msra.mxu0 %v267
    %305 = vmatprep.subr.mxu0 0.0
    %306 = vmatpush1.msra.mxu0 0.0
    %307 = vmatprep.subr.mxu0 0.0
    %308 = vmatpush1.msra.mxu0 0.0
    %309 = vmatprep.subr.mxu0 0.0
    %310 = vmatpush1.msra.mxu0 0.0
    %311 = vmatprep.subr.mxu0 0.0
    %312 = vmatpush1.msra.mxu0 0.0
    %313 = vmatprep.subr.mxu0 0.0
    %314 = vmatpush1.msra.mxu0 0.0
    %315 = vmatprep.subr.mxu0 0.0
    %316 = vmatpush1.msra.mxu0 0.0
    %317 = vmatprep.subr.mxu0 0.0
    %318 = vmatpush1.msra.mxu0 0.0
    %319 = vmatprep.subr.mxu0 0.0
    %320 = vmatpush1.msra.mxu0 0.0
    %321 = vmatprep.subr.mxu0 0.0
    %322 = vmatpush1.msra.mxu0 0.0
    %323 = vmatprep.subr.mxu0 0.0
    %324 = vmatpush1.msra.mxu0 0.0
    %325 = vmatprep.subr.mxu0 0.0
    %326 = vmatpush1.msra.mxu0 0.0
    %327 = vmatprep.subr.mxu0 0.0
    %328 = vmatpush1.msra.mxu0 0.0
    %329 = vmatprep.subr.mxu0 0.0
    %330 = vmatpush1.msra.mxu0 0.0
    %331 = vmatprep.subr.mxu0 0.0
    %332 = vmatpush1.msra.mxu0 0.0
    %333 = vmatprep.subr.mxu0 0.0
    %334 = vmatpush1.msra.mxu0 0.0
    %335 = vmatprep.subr.mxu0 0.0
    %336 = vmatpush1.msra.mxu0 0.0
    %337 = vmatprep.mubr.f32.mxu0 0.0
    %338 = vmatmul.mubr.f32.gmra.mrb[0].mxu0 %v152
    %v339 = vpop.f32.mrb[0].mxu0
    %v340 = vadd.f32 %v272, %v339
    %v341 = vpop.f32.mrb[0].mxu0
    %342 = vmatprep.mubr.f32.mxu0 0.0
    %343 = vmatmul.mubr.f32.gmra.mrb[0].mxu0 %v153
    %v344 = vpop.f32.mrb[0].mxu0
    %v345 = vadd.f32 %v272, %v344
    %v346 = vpop.f32.mrb[0].mxu0
    %347 = vdwg.mxu0
    %s348 = scalar_lea.vmem [#allocation2], 896
    %v349 = vld [vmem:[%s348] sm:$0xff]
    %v350 = vld [vmem:[%s348 + $0x8] sm:$0xff]
    %v351 = vld [vmem:[%s348 + $0x10] sm:$0xff]
    %v352 = vld [vmem:[%s348 + $0x18] sm:$0xff]
    %v353 = vld [vmem:[%s348 + $0x20] sm:$0xff]
    %v354 = vld [vmem:[%s348 + $0x28] sm:$0xff]
    %v355 = vld [vmem:[%s348 + $0x30] sm:$0xff]
    %v356 = vld [vmem:[%s348 + $0x38] sm:$0xff]
    %v357 = vld [vmem:[%s348 + $0x40] sm:$0xff]
    %v358 = vld [vmem:[%s348 + $0x48] sm:$0xff]
    %v359 = vld [vmem:[%s348 + $0x50] sm:$0xff]
    %v360 = vld [vmem:[%s348 + $0x58] sm:$0xff]
    %v361 = vld [vmem:[%s348 + $0x60] sm:$0xff]
    %v362 = vld [vmem:[%s348 + $0x68] sm:$0xff]
    %v363 = vld [vmem:[%s348 + $0x70] sm:$0xff]
    %v364 = vld [vmem:[%s348 + $0x78] sm:$0xff]
    %v365 = vld [vmem:[#allocation4 + $0x7] sm:$0x1]
    %v366 = vlaneseq
    %v367 = vshrl.u32 %v366, 7
    %v368 = vsub.s32 0, %v367
    %v369 = vrot.slane %v365, %v368
    %370 = vmatprep.subr.mxu0 0.0
    %371 = vmatpush1.msra.mxu0 %v349
    %372 = vmatprep.subr.mxu0 0.0
    %373 = vmatpush1.msra.mxu0 %v350
    %374 = vmatprep.subr.mxu0 0.0
    %375 = vmatpush1.msra.mxu0 %v351
    %376 = vmatprep.subr.mxu0 0.0
    %377 = vmatpush1.msra.mxu0 %v352
    %378 = vmatprep.subr.mxu0 0.0
    %379 = vmatpush1.msra.mxu0 %v353
    %380 = vmatprep.subr.mxu0 0.0
    %381 = vmatpush1.msra.mxu0 %v354
    %382 = vmatprep.subr.mxu0 0.0
    %383 = vmatpush1.msra.mxu0 %v355
    %384 = vmatprep.subr.mxu0 0.0
    %385 = vmatpush1.msra.mxu0 %v356
    %386 = vmatprep.subr.mxu0 0.0
    %387 = vmatpush1.msra.mxu0 %v357
    %388 = vmatprep.subr.mxu0 0.0
    %389 = vmatpush1.msra.mxu0 %v358
    %390 = vmatprep.subr.mxu0 0.0
    %391 = vmatpush1.msra.mxu0 %v359
    %392 = vmatprep.subr.mxu0 0.0
    %393 = vmatpush1.msra.mxu0 %v360
    %394 = vmatprep.subr.mxu0 0.0
    %395 = vmatpush1.msra.mxu0 %v361
    %396 = vmatprep.subr.mxu0 0.0
    %397 = vmatpush1.msra.mxu0 %v362
    %398 = vmatprep.subr.mxu0 0.0
    %399 = vmatpush1.msra.mxu0 %v363
    %400 = vmatprep.subr.mxu0 0.0
    %401 = vmatpush1.msra.mxu0 %v364
    %402 = vmatprep.subr.mxu0 0.0
    %403 = vmatpush1.msra.mxu0 0.0
    %404 = vmatprep.subr.mxu0 0.0
    %405 = vmatpush1.msra.mxu0 0.0
    %406 = vmatprep.subr.mxu0 0.0
    %407 = vmatpush1.msra.mxu0 0.0
    %408 = vmatprep.subr.mxu0 0.0
    %409 = vmatpush1.msra.mxu0 0.0
    %410 = vmatprep.subr.mxu0 0.0
    %411 = vmatpush1.msra.mxu0 0.0
    %412 = vmatprep.subr.mxu0 0.0
    %413 = vmatpush1.msra.mxu0 0.0
    %414 = vmatprep.subr.mxu0 0.0
    %415 = vmatpush1.msra.mxu0 0.0
    %416 = vmatprep.subr.mxu0 0.0
    %417 = vmatpush1.msra.mxu0 0.0
    %418 = vmatprep.subr.mxu0 0.0
    %419 = vmatpush1.msra.mxu0 0.0
    %420 = vmatprep.subr.mxu0 0.0
    %421 = vmatpush1.msra.mxu0 0.0
    %422 = vmatprep.subr.mxu0 0.0
    %423 = vmatpush1.msra.mxu0 0.0
    %424 = vmatprep.subr.mxu0 0.0
    %425 = vmatpush1.msra.mxu0 0.0
    %426 = vmatprep.subr.mxu0 0.0
    %427 = vmatpush1.msra.mxu0 0.0
    %428 = vmatprep.subr.mxu0 0.0
    %429 = vmatpush1.msra.mxu0 0.0
    %430 = vmatprep.subr.mxu0 0.0
    %431 = vmatpush1.msra.mxu0 0.0
    %432 = vmatprep.subr.mxu0 0.0
    %433 = vmatpush1.msra.mxu0 0.0
    %434 = vmatprep.mubr.f32.mxu0 0.0
    %435 = vmatmul.mubr.f32.gmra.mrb[0].mxu0 %v247
    %v436 = vpop.f32.mrb[0].mxu0
    %v437 = vadd.f32 %v369, %v436
    %v438 = vpop.f32.mrb[0].mxu0
    %439 = vdwg.mxu0
    %440 = vmatprep.subr.mxu0 0.0
    %441 = vmatpush1.xpose.msra.mxu0 %v437
    %442 = vmatprep.subr.mxu0 0.0
    %443 = vmatpush1.xpose.msra.mxu0 0.0
    %444 = vmatprep.subr.mxu0 0.0
    %445 = vmatpush1.xpose.msra.mxu0 0.0
    %446 = vmatprep.subr.mxu0 0.0
    %447 = vmatpush1.xpose.msra.mxu0 0.0
    %448 = vmatprep.subr.mxu0 0.0
    %449 = vmatpush1.xpose.msra.mxu0 0.0
    %450 = vmatprep.subr.mxu0 0.0
    %451 = vmatpush1.xpose.msra.mxu0 0.0
    %452 = vmatprep.subr.mxu0 0.0
    %453 = vmatpush1.xpose.msra.mxu0 0.0
    %454 = vmatprep.subr.mxu0 0.0
    %455 = vmatpush1.xpose.msra.mxu0 0.0
    %456 = vmatprep.subr.mxu0 0.0
    %457 = vmatpush1.xpose.msra.mxu0 0.0
    %458 = vmatprep.subr.mxu0 0.0
    %459 = vmatpush1.xpose.msra.mxu0 0.0
    %460 = vmatprep.subr.mxu0 0.0
    %461 = vmatpush1.xpose.msra.mxu0 0.0
    %462 = vmatprep.subr.mxu0 0.0
    %463 = vmatpush1.xpose.msra.mxu0 0.0
    %464 = vmatprep.subr.mxu0 0.0
    %465 = vmatpush1.xpose.msra.mxu0 0.0
    %466 = vmatprep.subr.mxu0 0.0
    %467 = vmatpush1.xpose.msra.mxu0 0.0
    %468 = vmatprep.subr.mxu0 0.0
    %469 = vmatpush1.xpose.msra.mxu0 0.0
    %470 = vmatprep.subr.mxu0 0.0
    %471 = vmatpush1.xpose.msra.mxu0 0.0
    %472 = vmatprep.subr.mxu0 0.0
    %473 = vmatpush1.xpose.msra.mxu0 0.0
    %474 = vmatprep.subr.mxu0 0.0
    %475 = vmatpush1.xpose.msra.mxu0 0.0
    %476 = vmatprep.subr.mxu0 0.0
    %477 = vmatpush1.xpose.msra.mxu0 0.0
    %478 = vmatprep.subr.mxu0 0.0
    %479 = vmatpush1.xpose.msra.mxu0 0.0
    %480 = vmatprep.subr.mxu0 0.0
    %481 = vmatpush1.xpose.msra.mxu0 0.0
    %482 = vmatprep.subr.mxu0 0.0
    %483 = vmatpush1.xpose.msra.mxu0 0.0
    %484 = vmatprep.subr.mxu0 0.0
    %485 = vmatpush1.xpose.msra.mxu0 0.0
    %486 = vmatprep.subr.mxu0 0.0
    %487 = vmatpush1.xpose.msra.mxu0 0.0
    %488 = vmatprep.subr.mxu0 0.0
    %489 = vmatpush1.xpose.msra.mxu0 0.0
    %490 = vmatprep.subr.mxu0 0.0
    %491 = vmatpush1.xpose.msra.mxu0 0.0
    %492 = vmatprep.subr.mxu0 0.0
    %493 = vmatpush1.xpose.msra.mxu0 0.0
    %494 = vmatprep.subr.mxu0 0.0
    %495 = vmatpush1.xpose.msra.mxu0 0.0
    %496 = vmatprep.subr.mxu0 0.0
    %497 = vmatpush1.xpose.msra.mxu0 0.0
    %498 = vmatprep.subr.mxu0 0.0
    %499 = vmatpush1.xpose.msra.mxu0 0.0
    %500 = vmatprep.subr.mxu0 0.0
    %501 = vmatpush1.xpose.msra.mxu0 0.0
    %502 = vmatprep.subr.mxu0 0.0
    %503 = vmatpush1.xpose.msra.mxu0 0.0
    %504 = vmatprep.mubr.f32.mxu0 0.0
    %505 = vmatmul.mubr.f32.gmra.mrb[0].mxu0 %v340
    %v506 = vpop.f32.mrb[0].mxu0
    %v507 = vadd.f32 0.0, %v506
    %v508 = vpop.f32.mrb[0].mxu0
    %509 = vmatprep.mubr.f32.mxu0 0.0
    %510 = vmatmul.mubr.f32.gmra.mrb[0].mxu0 %v345
    %v511 = vpop.f32.mrb[0].mxu0
    %v512 = vadd.f32 0.0, %v511
    %v513 = vpop.f32.mrb[0].mxu0
    %514 = vdwg.mxu0
    %vm515 = vcmp.gt.f32.partialorder %v249, 0.0
    %vm516 = vcmp.gt.f32.partialorder %v250, 0.0
    %v517 = vsel %vm515, %v507, -1e+30
    %v518 = vsel %vm516, %v512, -1e+30
    %vm519 = vcmask 64512
    %v520 = vsel %vm519, %v517, -inf
    %521 = vmax.xlane.f32.xlu0 %v520
    %v522 = vpop.xlane.xlu0 %521
    %v523 = vsel %vm519, %v518, -inf
    %524 = vmax.xlane.f32.xlu0 %v523
    %v525 = vpop.xlane.xlu0 %524
    %v526 = vsub.f32 %v517, %v522
    %v527 = vsub.f32 %v518, %v525
    %v528 = vmul.f32 %v526, 1.442695
    %v529 = vpow.pop %v528
    %v530 = vmul.f32 %v527, 1.442695
    %v531 = vpow.pop %v530
    %v532 = vmul.f32 %v529, %v249
    %v533 = vmul.f32 %v531, %v250
    %v534 = vsel %vm519, %v532, 0.0
    %535 = vadd.xlane.f32.xlu0 %v534
    %v536 = vpop.xlane.xlu0 %535
    %v537 = vsel %vm519, %v533, 0.0
    %538 = vadd.xlane.f32.xlu0 %v537
    %v539 = vpop.xlane.xlu0 %538
    %v541 = vsel %vm519, %v532, 0
    %v544 = vsel %vm519, %v533, 0
    %546 = vmatprep.subr.mxu0 0.0
    %547 = vmatpush1.msra.mxu0 %v437
    %548 = vmatprep.subr.mxu0 0.0
    %549 = vmatpush1.msra.mxu0 0.0
    %550 = vmatprep.subr.mxu0 0.0
    %551 = vmatpush1.msra.mxu0 0.0
    %552 = vmatprep.subr.mxu0 0.0
    %553 = vmatpush1.msra.mxu0 0.0
    %554 = vmatprep.subr.mxu0 0.0
    %555 = vmatpush1.msra.mxu0 0.0
    %556 = vmatprep.subr.mxu0 0.0
    %557 = vmatpush1.msra.mxu0 0.0
    %558 = vmatprep.subr.mxu0 0.0
    %559 = vmatpush1.msra.mxu0 0.0
    %560 = vmatprep.subr.mxu0 0.0
    %561 = vmatpush1.msra.mxu0 0.0
    %562 = vmatprep.subr.mxu0 0.0
    %563 = vmatpush1.msra.mxu0 0.0
    %564 = vmatprep.subr.mxu0 0.0
    %565 = vmatpush1.msra.mxu0 0.0
    %566 = vmatprep.subr.mxu0 0.0
    %567 = vmatpush1.msra.mxu0 0.0
    %568 = vmatprep.subr.mxu0 0.0
    %569 = vmatpush1.msra.mxu0 0.0
    %570 = vmatprep.subr.mxu0 0.0
    %571 = vmatpush1.msra.mxu0 0.0
    %572 = vmatprep.subr.mxu0 0.0
    %573 = vmatpush1.msra.mxu0 0.0
    %574 = vmatprep.subr.mxu0 0.0
    %575 = vmatpush1.msra.mxu0 0.0
    %576 = vmatprep.subr.mxu0 0.0
    %577 = vmatpush1.msra.mxu0 0.0
    %578 = vmatprep.subr.mxu0 0.0
    %579 = vmatpush1.msra.mxu0 0.0
    %580 = vmatprep.subr.mxu0 0.0
    %581 = vmatpush1.msra.mxu0 0.0
    %582 = vmatprep.subr.mxu0 0.0
    %583 = vmatpush1.msra.mxu0 0.0
    %584 = vmatprep.subr.mxu0 0.0
    %585 = vmatpush1.msra.mxu0 0.0
    %586 = vmatprep.subr.mxu0 0.0
    %587 = vmatpush1.msra.mxu0 0.0
    %588 = vmatprep.subr.mxu0 0.0
    %589 = vmatpush1.msra.mxu0 0.0
    %590 = vmatprep.subr.mxu0 0.0
    %591 = vmatpush1.msra.mxu0 0.0
    %592 = vmatprep.subr.mxu0 0.0
    %593 = vmatpush1.msra.mxu0 0.0
    %594 = vmatprep.subr.mxu0 0.0
    %595 = vmatpush1.msra.mxu0 0.0
    %596 = vmatprep.subr.mxu0 0.0
    %597 = vmatpush1.msra.mxu0 0.0
    %598 = vmatprep.subr.mxu0 0.0
    %599 = vmatpush1.msra.mxu0 0.0
    %600 = vmatprep.subr.mxu0 0.0
    %601 = vmatpush1.msra.mxu0 0.0
    %602 = vmatprep.subr.mxu0 0.0
    %603 = vmatpush1.msra.mxu0 0.0
    %604 = vmatprep.subr.mxu0 0.0
    %605 = vmatpush1.msra.mxu0 0.0
    %606 = vmatprep.subr.mxu0 0.0
    %607 = vmatpush1.msra.mxu0 0.0
    %608 = vmatprep.subr.mxu0 0.0
    %609 = vmatpush1.msra.mxu0 0.0
    %610 = vmatprep.mubr.f32.mxu0 0.0
    %611 = vmatmul.mubr.f32.gmra.mrb[0].mxu0 %v541
    %v612 = vpop.f32.mrb[0].mxu0
    %v613 = vadd.f32 0.0, %v612
    %v614 = vpop.f32.mrb[0].mxu0
    %615 = vmatprep.mubr.f32.mxu0 0.0
    %616 = vmatmul.mubr.f32.gmra.mrb[0].mxu0 %v544
    %v617 = vpop.f32.mrb[0].mxu0
    %v618 = vadd.f32 0.0, %v617
    %v619 = vpop.f32.mrb[0].mxu0
    %620 = vdwg.mxu0
    %vm621 = vcmp.gt.f32.partialorder %v536, 0.0
    %vm622 = vcmp.gt.f32.partialorder %v539, 0.0
    %v623 = vsel %vm621, %v536, 1.0
    %v624 = vsel %vm622, %v539, 1.0
    %v625 = vrcp.pop %v623
    %v626 = vrcp.pop %v624
    %v627 = vmul.f32 %v623, %v625
    %v628 = vmul.f32 %v624, %v626
    %v629 = vsub.f32 2.0, %v627
    %v630 = vsub.f32 2.0, %v628
    %v631 = vmul.f32 %v625, %v629
    %v632 = vmul.f32 %v626, %v630
    %v633 = vmul.f32 %v613, %v631
    %v634 = vmul.f32 %v618, %v632
    %v635 = vsel %vm621, 1, 0
    %v636 = vsel %vm622, 1, 0
    %vm637 = vcmp.eq.s32.totalorder %v635, 1
    %vm638 = vcmp.eq.s32.totalorder %v636, 1
    %v639 = vsel %vm637, %v633, 0.0
    %v640 = vsel %vm638, %v634, 0.0
    %v641 = vmul.f32 %v639, 0.5
    %v642 = vmul.f32 %v640, 0.5
    %v643 = vmul.f32 %v639, 0.70710677
    %v644 = vmul.f32 %v640, 0.70710677
    %vm645 = vcmp.lt.f32.partialorder %v643, 0.0
    %vm646 = vcmp.lt.f32.partialorder %v644, 0.0
    %v647 = vsel %vm645, -1.0, 1.0
    %v648 = vsel %vm646, -1.0, 1.0
    %v649 = vand.u32 2147483647, %v643
    %v650 = vand.u32 2147483647, %v644
    %v651 = vmul.f32 %v649, 0.3275911
    %v652 = vmul.f32 %v650, 0.3275911
    %v653 = vadd.f32 %v651, 1.0
    %v654 = vadd.f32 %v652, 1.0
    %v655 = vrcp.pop %v653
    %v656 = vmul.f32 1.0, %v655
    %v657 = vrcp.pop %v654
    %v658 = vmul.f32 1.0, %v657
    %v659 = vmul.f32 %v656, 1.0614054
    %v660 = vmul.f32 %v658, 1.0614054
    %v661 = vadd.f32 %v659, -1.4531521
    %v662 = vadd.f32 %v660, -1.4531521
    %v663 = vmul.f32 %v661, %v656
    %v664 = vmul.f32 %v662, %v658
    %v665 = vadd.f32 %v663, 1.4214138
    %v666 = vadd.f32 %v664, 1.4214138
    %v667 = vmul.f32 %v665, %v656
    %v668 = vmul.f32 %v666, %v658
    %v669 = vadd.f32 %v667, -0.28449672
    %v670 = vadd.f32 %v668, -0.28449672
    %v671 = vmul.f32 %v669, %v656
    %v672 = vmul.f32 %v670, %v658
    %v673 = vadd.f32 %v671, 0.2548296
    %v674 = vadd.f32 %v672, 0.2548296
    %v675 = vmul.f32 %v673, %v656
    %v676 = vmul.f32 %v674, %v658
    %v677 = vsub.f32 0.0, %v649
    %v678 = vsub.f32 0.0, %v650
    %v679 = vmul.f32 %v677, %v649
    %v680 = vmul.f32 %v678, %v650
    %v681 = vmul.f32 %v679, 1.442695
    %v682 = vpow.pop %v681
    %v683 = vmul.f32 %v680, 1.442695
    %v684 = vpow.pop %v683
    %v685 = vmul.f32 %v675, %v682
    %v686 = vmul.f32 %v676, %v684
    %v687 = vsub.f32 1.0, %v685
    %v688 = vsub.f32 1.0, %v686
    %v689 = vmul.f32 %v647, %v687
    %v690 = vmul.f32 %v648, %v688
    %v691 = vadd.f32 %v689, 1.0
    %v692 = vadd.f32 %v690, 1.0
    %v693 = vmul.f32 %v641, %v691
    %v694 = vmul.f32 %v642, %v692
    %s695 = scalar_lea.vmem [#allocation2], 384
    %v696 = vld [vmem:[%s695] sm:$0xff]
    %v697 = vld [vmem:[%s695 + $0x8] sm:$0xff]
    %v698 = vld [vmem:[%s695 + $0x10] sm:$0xff]
    %v699 = vld [vmem:[%s695 + $0x18] sm:$0xff]
    %v700 = vld [vmem:[%s695 + $0x20] sm:$0xff]
    %v701 = vld [vmem:[%s695 + $0x28] sm:$0xff]
    %v702 = vld [vmem:[%s695 + $0x30] sm:$0xff]
    %v703 = vld [vmem:[%s695 + $0x38] sm:$0xff]
    %v704 = vld [vmem:[%s695 + $0x40] sm:$0xff]
    %v705 = vld [vmem:[%s695 + $0x48] sm:$0xff]
    %v706 = vld [vmem:[%s695 + $0x50] sm:$0xff]
    %v707 = vld [vmem:[%s695 + $0x58] sm:$0xff]
    %v708 = vld [vmem:[%s695 + $0x60] sm:$0xff]
    %v709 = vld [vmem:[%s695 + $0x68] sm:$0xff]
    %v710 = vld [vmem:[%s695 + $0x70] sm:$0xff]
    %v711 = vld [vmem:[%s695 + $0x78] sm:$0xff]
    %v712 = vld [vmem:[#allocation4 + $0x3] sm:$0x1]
    %v713 = vlaneseq
    %v714 = vshrl.u32 %v713, 7
    %v715 = vsub.s32 0, %v714
    %v716 = vrot.slane %v712, %v715
    %717 = vmatprep.subr.mxu0 0.0
    %718 = vmatpush1.msra.mxu0 %v696
    %719 = vmatprep.subr.mxu0 0.0
    %720 = vmatpush1.msra.mxu0 %v697
    %721 = vmatprep.subr.mxu0 0.0
    %722 = vmatpush1.msra.mxu0 %v698
    %723 = vmatprep.subr.mxu0 0.0
    %724 = vmatpush1.msra.mxu0 %v699
    %725 = vmatprep.subr.mxu0 0.0
    %726 = vmatpush1.msra.mxu0 %v700
    %727 = vmatprep.subr.mxu0 0.0
    %728 = vmatpush1.msra.mxu0 %v701
    %729 = vmatprep.subr.mxu0 0.0
    %730 = vmatpush1.msra.mxu0 %v702
    %731 = vmatprep.subr.mxu0 0.0
    %732 = vmatpush1.msra.mxu0 %v703
    %733 = vmatprep.subr.mxu0 0.0
    %734 = vmatpush1.msra.mxu0 %v704
    %735 = vmatprep.subr.mxu0 0.0
    %736 = vmatpush1.msra.mxu0 %v705
    %737 = vmatprep.subr.mxu0 0.0
    %738 = vmatpush1.msra.mxu0 %v706
    %739 = vmatprep.subr.mxu0 0.0
    %740 = vmatpush1.msra.mxu0 %v707
    %741 = vmatprep.subr.mxu0 0.0
    %742 = vmatpush1.msra.mxu0 %v708
    %743 = vmatprep.subr.mxu0 0.0
    %744 = vmatpush1.msra.mxu0 %v709
    %745 = vmatprep.subr.mxu0 0.0
    %746 = vmatpush1.msra.mxu0 %v710
    %747 = vmatprep.subr.mxu0 0.0
    %748 = vmatpush1.msra.mxu0 %v711
    %749 = vmatprep.subr.mxu0 0.0
    %750 = vmatpush1.msra.mxu0 0.0
    %751 = vmatprep.subr.mxu0 0.0
    %752 = vmatpush1.msra.mxu0 0.0
    %753 = vmatprep.subr.mxu0 0.0
    %754 = vmatpush1.msra.mxu0 0.0
    %755 = vmatprep.subr.mxu0 0.0
    %756 = vmatpush1.msra.mxu0 0.0
    %757 = vmatprep.subr.mxu0 0.0
    %758 = vmatpush1.msra.mxu0 0.0
    %759 = vmatprep.subr.mxu0 0.0
    %760 = vmatpush1.msra.mxu0 0.0
    %761 = vmatprep.subr.mxu0 0.0
    %762 = vmatpush1.msra.mxu0 0.0
    %763 = vmatprep.subr.mxu0 0.0
    %764 = vmatpush1.msra.mxu0 0.0
    %765 = vmatprep.subr.mxu0 0.0
    %766 = vmatpush1.msra.mxu0 0.0
    %767 = vmatprep.subr.mxu0 0.0
    %768 = vmatpush1.msra.mxu0 0.0
    %769 = vmatprep.subr.mxu0 0.0
    %770 = vmatpush1.msra.mxu0 0.0
    %771 = vmatprep.subr.mxu0 0.0
    %772 = vmatpush1.msra.mxu0 0.0
    %773 = vmatprep.subr.mxu0 0.0
    %774 = vmatpush1.msra.mxu0 0.0
    %775 = vmatprep.subr.mxu0 0.0
    %776 = vmatpush1.msra.mxu0 0.0
    %777 = vmatprep.subr.mxu0 0.0
    %778 = vmatpush1.msra.mxu0 0.0
    %779 = vmatprep.subr.mxu0 0.0
    %780 = vmatpush1.msra.mxu0 0.0
    %781 = vmatprep.mubr.f32.mxu0 0.0
    %782 = vmatmul.mubr.f32.gmra.mrb[0].mxu0 %v693
    %v783 = vpop.f32.mrb[0].mxu0
    %v784 = vadd.f32 %v716, %v783
    %v785 = vpop.f32.mrb[0].mxu0
    %786 = vmatprep.mubr.f32.mxu0 0.0
    %787 = vmatmul.mubr.f32.gmra.mrb[0].mxu0 %v694
    %v788 = vpop.f32.mrb[0].mxu0
    %v789 = vadd.f32 %v716, %v788
    %v790 = vpop.f32.mrb[0].mxu0
    %791 = vdwg.mxu0
    %v792 = vmax.f32 %v784, 0.0
    %v793 = vmax.f32 %v789, 0.0
    %s794 = scalar_lea.vmem [#allocation2], 512
    %v795 = vld [vmem:[%s794] sm:$0xff]
    %v796 = vld [vmem:[%s794 + $0x8] sm:$0xff]
    %v797 = vld [vmem:[%s794 + $0x10] sm:$0xff]
    %v798 = vld [vmem:[%s794 + $0x18] sm:$0xff]
    %v799 = vld [vmem:[%s794 + $0x20] sm:$0xff]
    %v800 = vld [vmem:[%s794 + $0x28] sm:$0xff]
    %v801 = vld [vmem:[%s794 + $0x30] sm:$0xff]
    %v802 = vld [vmem:[%s794 + $0x38] sm:$0xff]
    %v803 = vld [vmem:[%s794 + $0x40] sm:$0xff]
    %v804 = vld [vmem:[%s794 + $0x48] sm:$0xff]
    %v805 = vld [vmem:[%s794 + $0x50] sm:$0xff]
    %v806 = vld [vmem:[%s794 + $0x58] sm:$0xff]
    %v807 = vld [vmem:[%s794 + $0x60] sm:$0xff]
    %v808 = vld [vmem:[%s794 + $0x68] sm:$0xff]
    %v809 = vld [vmem:[%s794 + $0x70] sm:$0xff]
    %v810 = vld [vmem:[%s794 + $0x78] sm:$0xff]
    %v811 = vld [vmem:[#allocation4 + $0x4] sm:$0x1]
    %v812 = vlaneseq
    %v813 = vshrl.u32 %v812, 7
    %v814 = vsub.s32 0, %v813
    %v815 = vrot.slane %v811, %v814
    %816 = vmatprep.subr.mxu0 0.0
    %817 = vmatpush1.msra.mxu0 %v795
    %818 = vmatprep.subr.mxu0 0.0
    %819 = vmatpush1.msra.mxu0 %v796
    %820 = vmatprep.subr.mxu0 0.0
    %821 = vmatpush1.msra.mxu0 %v797
    %822 = vmatprep.subr.mxu0 0.0
    %823 = vmatpush1.msra.mxu0 %v798
    %824 = vmatprep.subr.mxu0 0.0
    %825 = vmatpush1.msra.mxu0 %v799
    %826 = vmatprep.subr.mxu0 0.0
    %827 = vmatpush1.msra.mxu0 %v800
    %828 = vmatprep.subr.mxu0 0.0
    %829 = vmatpush1.msra.mxu0 %v801
    %830 = vmatprep.subr.mxu0 0.0
    %831 = vmatpush1.msra.mxu0 %v802
    %832 = vmatprep.subr.mxu0 0.0
    %833 = vmatpush1.msra.mxu0 %v803
    %834 = vmatprep.subr.mxu0 0.0
    %835 = vmatpush1.msra.mxu0 %v804
    %836 = vmatprep.subr.mxu0 0.0
    %837 = vmatpush1.msra.mxu0 %v805
    %838 = vmatprep.subr.mxu0 0.0
    %839 = vmatpush1.msra.mxu0 %v806
    %840 = vmatprep.subr.mxu0 0.0
    %841 = vmatpush1.msra.mxu0 %v807
    %842 = vmatprep.subr.mxu0 0.0
    %843 = vmatpush1.msra.mxu0 %v808
    %844 = vmatprep.subr.mxu0 0.0
    %845 = vmatpush1.msra.mxu0 %v809
    %846 = vmatprep.subr.mxu0 0.0
    %847 = vmatpush1.msra.mxu0 %v810
    %848 = vmatprep.subr.mxu0 0.0
    %849 = vmatpush1.msra.mxu0 0.0
    %850 = vmatprep.subr.mxu0 0.0
    %851 = vmatpush1.msra.mxu0 0.0
    %852 = vmatprep.subr.mxu0 0.0
    %853 = vmatpush1.msra.mxu0 0.0
    %854 = vmatprep.subr.mxu0 0.0
    %855 = vmatpush1.msra.mxu0 0.0
    %856 = vmatprep.subr.mxu0 0.0
    %857 = vmatpush1.msra.mxu0 0.0
    %858 = vmatprep.subr.mxu0 0.0
    %859 = vmatpush1.msra.mxu0 0.0
    %860 = vmatprep.subr.mxu0 0.0
    %861 = vmatpush1.msra.mxu0 0.0
    %862 = vmatprep.subr.mxu0 0.0
    %863 = vmatpush1.msra.mxu0 0.0
    %864 = vmatprep.subr.mxu0 0.0
    %865 = vmatpush1.msra.mxu0 0.0
    %866 = vmatprep.subr.mxu0 0.0
    %867 = vmatpush1.msra.mxu0 0.0
    %868 = vmatprep.subr.mxu0 0.0
    %869 = vmatpush1.msra.mxu0 0.0
    %870 = vmatprep.subr.mxu0 0.0
    %871 = vmatpush1.msra.mxu0 0.0
    %872 = vmatprep.subr.mxu0 0.0
    %873 = vmatpush1.msra.mxu0 0.0
    %874 = vmatprep.subr.mxu0 0.0
    %875 = vmatpush1.msra.mxu0 0.0
    %876 = vmatprep.subr.mxu0 0.0
    %877 = vmatpush1.msra.mxu0 0.0
    %878 = vmatprep.subr.mxu0 0.0
    %879 = vmatpush1.msra.mxu0 0.0
    %880 = vmatprep.mubr.f32.mxu0 0.0
    %881 = vmatmul.mubr.f32.gmra.mrb[0].mxu0 %v247
    %v882 = vpop.f32.mrb[0].mxu0
    %v883 = vadd.f32 %v815, %v882
    %v884 = vpop.f32.mrb[0].mxu0
    %885 = vdwg.mxu0
    %s886 = scalar_lea.vmem [#allocation2], 768
    %v887 = vld [vmem:[%s886] sm:$0xff]
    %v888 = vld [vmem:[%s886 + $0x8] sm:$0xff]
    %v889 = vld [vmem:[%s886 + $0x10] sm:$0xff]
    %v890 = vld [vmem:[%s886 + $0x18] sm:$0xff]
    %v891 = vld [vmem:[%s886 + $0x20] sm:$0xff]
    %v892 = vld [vmem:[%s886 + $0x28] sm:$0xff]
    %v893 = vld [vmem:[%s886 + $0x30] sm:$0xff]
    %v894 = vld [vmem:[%s886 + $0x38] sm:$0xff]
    %v895 = vld [vmem:[%s886 + $0x40] sm:$0xff]
    %v896 = vld [vmem:[%s886 + $0x48] sm:$0xff]
    %v897 = vld [vmem:[%s886 + $0x50] sm:$0xff]
    %v898 = vld [vmem:[%s886 + $0x58] sm:$0xff]
    %v899 = vld [vmem:[%s886 + $0x60] sm:$0xff]
    %v900 = vld [vmem:[%s886 + $0x68] sm:$0xff]
    %v901 = vld [vmem:[%s886 + $0x70] sm:$0xff]
    %v902 = vld [vmem:[%s886 + $0x78] sm:$0xff]
    %v903 = vld [vmem:[#allocation4 + $0x6] sm:$0x1]
    %v904 = vlaneseq
    %v905 = vshrl.u32 %v904, 7
    %v906 = vsub.s32 0, %v905
    %v907 = vrot.slane %v903, %v906
    %908 = vmatprep.subr.mxu0 0.0
    %909 = vmatpush1.msra.mxu0 %v887
    %910 = vmatprep.subr.mxu0 0.0
    %911 = vmatpush1.msra.mxu0 %v888
    %912 = vmatprep.subr.mxu0 0.0
    %913 = vmatpush1.msra.mxu0 %v889
    %914 = vmatprep.subr.mxu0 0.0
    %915 = vmatpush1.msra.mxu0 %v890
    %916 = vmatprep.subr.mxu0 0.0
    %917 = vmatpush1.msra.mxu0 %v891
    %918 = vmatprep.subr.mxu0 0.0
    %919 = vmatpush1.msra.mxu0 %v892
    %920 = vmatprep.subr.mxu0 0.0
    %921 = vmatpush1.msra.mxu0 %v893
    %922 = vmatprep.subr.mxu0 0.0
    %923 = vmatpush1.msra.mxu0 %v894
    %924 = vmatprep.subr.mxu0 0.0
    %925 = vmatpush1.msra.mxu0 %v895
    %926 = vmatprep.subr.mxu0 0.0
    %927 = vmatpush1.msra.mxu0 %v896
    %928 = vmatprep.subr.mxu0 0.0
    %929 = vmatpush1.msra.mxu0 %v897
    %930 = vmatprep.subr.mxu0 0.0
    %931 = vmatpush1.msra.mxu0 %v898
    %932 = vmatprep.subr.mxu0 0.0
    %933 = vmatpush1.msra.mxu0 %v899
    %934 = vmatprep.subr.mxu0 0.0
    %935 = vmatpush1.msra.mxu0 %v900
    %936 = vmatprep.subr.mxu0 0.0
    %937 = vmatpush1.msra.mxu0 %v901
    %938 = vmatprep.subr.mxu0 0.0
    %939 = vmatpush1.msra.mxu0 %v902
    %940 = vmatprep.subr.mxu0 0.0
    %941 = vmatpush1.msra.mxu0 0.0
    %942 = vmatprep.subr.mxu0 0.0
    %943 = vmatpush1.msra.mxu0 0.0
    %944 = vmatprep.subr.mxu0 0.0
    %945 = vmatpush1.msra.mxu0 0.0
    %946 = vmatprep.subr.mxu0 0.0
    %947 = vmatpush1.msra.mxu0 0.0
    %948 = vmatprep.subr.mxu0 0.0
    %949 = vmatpush1.msra.mxu0 0.0
    %950 = vmatprep.subr.mxu0 0.0
    %951 = vmatpush1.msra.mxu0 0.0
    %952 = vmatprep.subr.mxu0 0.0
    %953 = vmatpush1.msra.mxu0 0.0
    %954 = vmatprep.subr.mxu0 0.0
    %955 = vmatpush1.msra.mxu0 0.0
    %956 = vmatprep.subr.mxu0 0.0
    %957 = vmatpush1.msra.mxu0 0.0
    %958 = vmatprep.subr.mxu0 0.0
    %959 = vmatpush1.msra.mxu0 0.0
    %960 = vmatprep.subr.mxu0 0.0
    %961 = vmatpush1.msra.mxu0 0.0
    %962 = vmatprep.subr.mxu0 0.0
    %963 = vmatpush1.msra.mxu0 0.0
    %964 = vmatprep.subr.mxu0 0.0
    %965 = vmatpush1.msra.mxu0 0.0
    %966 = vmatprep.subr.mxu0 0.0
    %967 = vmatpush1.msra.mxu0 0.0
    %968 = vmatprep.subr.mxu0 0.0
    %969 = vmatpush1.msra.mxu0 0.0
    %970 = vmatprep.subr.mxu0 0.0
    %971 = vmatpush1.msra.mxu0 0.0
    %972 = vmatprep.mubr.f32.mxu0 0.0
    %973 = vmatmul.mubr.f32.gmra.mrb[0].mxu0 %v152
    %v974 = vpop.f32.mrb[0].mxu0
    %v975 = vadd.f32 %v907, %v974
    %v976 = vpop.f32.mrb[0].mxu0
    %977 = vmatprep.mubr.f32.mxu0 0.0
    %978 = vmatmul.mubr.f32.gmra.mrb[0].mxu0 %v153
    %v979 = vpop.f32.mrb[0].mxu0
    %v980 = vadd.f32 %v907, %v979
    %v981 = vpop.f32.mrb[0].mxu0
    %982 = vdwg.mxu0
    %983 = vmatprep.subr.mxu0 0.0
    %984 = vmatpush1.xpose.msra.mxu0 %v975
    %985 = vmatprep.subr.mxu0 0.0
    %986 = vmatpush1.xpose.msra.mxu0 %v980
    %987 = vmatprep.subr.mxu0 0.0
    %988 = vmatpush1.xpose.msra.mxu0 0.0
    %989 = vmatprep.subr.mxu0 0.0
    %990 = vmatpush1.xpose.msra.mxu0 0.0
    %991 = vmatprep.subr.mxu0 0.0
    %992 = vmatpush1.xpose.msra.mxu0 0.0
    %993 = vmatprep.subr.mxu0 0.0
    %994 = vmatpush1.xpose.msra.mxu0 0.0
    %995 = vmatprep.subr.mxu0 0.0
    %996 = vmatpush1.xpose.msra.mxu0 0.0
    %997 = vmatprep.subr.mxu0 0.0
    %998 = vmatpush1.xpose.msra.mxu0 0.0
    %999 = vmatprep.subr.mxu0 0.0
    %1000 = vmatpush1.xpose.msra.mxu0 0.0
    %1001 = vmatprep.subr.mxu0 0.0
    %1002 = vmatpush1.xpose.msra.mxu0 0.0
    %1003 = vmatprep.subr.mxu0 0.0
    %1004 = vmatpush1.xpose.msra.mxu0 0.0
    %1005 = vmatprep.subr.mxu0 0.0
    %1006 = vmatpush1.xpose.msra.mxu0 0.0
    %1007 = vmatprep.subr.mxu0 0.0
    %1008 = vmatpush1.xpose.msra.mxu0 0.0
    %1009 = vmatprep.subr.mxu0 0.0
    %1010 = vmatpush1.xpose.msra.mxu0 0.0
    %1011 = vmatprep.subr.mxu0 0.0
    %1012 = vmatpush1.xpose.msra.mxu0 0.0
    %1013 = vmatprep.subr.mxu0 0.0
    %1014 = vmatpush1.xpose.msra.mxu0 0.0
    %1015 = vmatprep.subr.mxu0 0.0
    %1016 = vmatpush1.xpose.msra.mxu0 0.0
    %1017 = vmatprep.subr.mxu0 0.0
    %1018 = vmatpush1.xpose.msra.mxu0 0.0
    %1019 = vmatprep.subr.mxu0 0.0
    %1020 = vmatpush1.xpose.msra.mxu0 0.0
    %1021 = vmatprep.subr.mxu0 0.0
    %1022 = vmatpush1.xpose.msra.mxu0 0.0
    %1023 = vmatprep.subr.mxu0 0.0
    %1024 = vmatpush1.xpose.msra.mxu0 0.0
    %1025 = vmatprep.subr.mxu0 0.0
    %1026 = vmatpush1.xpose.msra.mxu0 0.0
    %1027 = vmatprep.subr.mxu0 0.0
    %1028 = vmatpush1.xpose.msra.mxu0 0.0
    %1029 = vmatprep.subr.mxu0 0.0
    %1030 = vmatpush1.xpose.msra.mxu0 0.0
    %1031 = vmatprep.subr.mxu0 0.0
    %1032 = vmatpush1.xpose.msra.mxu0 0.0
    %1033 = vmatprep.subr.mxu0 0.0
    %1034 = vmatpush1.xpose.msra.mxu0 0.0
    %1035 = vmatprep.subr.mxu0 0.0
    %1036 = vmatpush1.xpose.msra.mxu0 0.0
    %1037 = vmatprep.subr.mxu0 0.0
    %1038 = vmatpush1.xpose.msra.mxu0 0.0
    %1039 = vmatprep.subr.mxu0 0.0
    %1040 = vmatpush1.xpose.msra.mxu0 0.0
    %1041 = vmatprep.subr.mxu0 0.0
    %1042 = vmatpush1.xpose.msra.mxu0 0.0
    %1043 = vmatprep.subr.mxu0 0.0
    %1044 = vmatpush1.xpose.msra.mxu0 0.0
    %1045 = vmatprep.subr.mxu0 0.0
    %1046 = vmatpush1.xpose.msra.mxu0 0.0
    %1047 = vmatprep.mubr.f32.mxu0 0.0
    %1048 = vmatmul.mubr.f32.gmra.mrb[0].mxu0 %v883
    %v1049 = vpop.f32.mrb[0].mxu0
    %v1050 = vadd.f32 0.0, %v1049
    %v1051 = vpop.f32.mrb[0].mxu0
    %1052 = vdwg.mxu0
    %vm1053 = vcmp.gt.f32.partialorder %v248, 0.0
    %v1054 = vsel %vm1053, %v1050, -1e+30
    %vm1055 = vcmask 130048
    %v1056 = vsel %vm1055, %v1054, -inf
    %1057 = vmax.xlane.f32.xlu0 %v1056
    %v1058 = vpop.xlane.xlu0 %1057
    %v1059 = vsub.f32 %v1054, %v1058
    %v1060 = vmul.f32 %v1059, 1.442695
    %v1061 = vpow.pop %v1060
    %v1062 = vmul.f32 %v1061, %v248
    %v1063 = vsel %vm1055, %v1062, 0.0
    %1064 = vadd.xlane.f32.xlu0 %v1063
    %v1065 = vpop.xlane.xlu0 %1064
    %v1067 = vsel %vm1055, %v1062, 0
    %1069 = vmatprep.subr.mxu0 0.0
    %1070 = vmatpush1.msra.mxu0 %v975
    %1071 = vmatprep.subr.mxu0 0.0
    %1072 = vmatpush1.msra.mxu0 %v980
    %1073 = vmatprep.subr.mxu0 0.0
    %1074 = vmatpush1.msra.mxu0 0.0
    %1075 = vmatprep.subr.mxu0 0.0
    %1076 = vmatpush1.msra.mxu0 0.0
    %1077 = vmatprep.subr.mxu0 0.0
    %1078 = vmatpush1.msra.mxu0 0.0
    %1079 = vmatprep.subr.mxu0 0.0
    %1080 = vmatpush1.msra.mxu0 0.0
    %1081 = vmatprep.subr.mxu0 0.0
    %1082 = vmatpush1.msra.mxu0 0.0
    %1083 = vmatprep.subr.mxu0 0.0
    %1084 = vmatpush1.msra.mxu0 0.0
    %1085 = vmatprep.subr.mxu0 0.0
    %1086 = vmatpush1.msra.mxu0 0.0
    %1087 = vmatprep.subr.mxu0 0.0
    %1088 = vmatpush1.msra.mxu0 0.0
    %1089 = vmatprep.subr.mxu0 0.0
    %1090 = vmatpush1.msra.mxu0 0.0
    %1091 = vmatprep.subr.mxu0 0.0
    %1092 = vmatpush1.msra.mxu0 0.0
    %1093 = vmatprep.subr.mxu0 0.0
    %1094 = vmatpush1.msra.mxu0 0.0
    %1095 = vmatprep.subr.mxu0 0.0
    %1096 = vmatpush1.msra.mxu0 0.0
    %1097 = vmatprep.subr.mxu0 0.0
    %1098 = vmatpush1.msra.mxu0 0.0
    %1099 = vmatprep.subr.mxu0 0.0
    %1100 = vmatpush1.msra.mxu0 0.0
    %1101 = vmatprep.subr.mxu0 0.0
    %1102 = vmatpush1.msra.mxu0 0.0
    %1103 = vmatprep.subr.mxu0 0.0
    %1104 = vmatpush1.msra.mxu0 0.0
    %1105 = vmatprep.subr.mxu0 0.0
    %1106 = vmatpush1.msra.mxu0 0.0
    %1107 = vmatprep.subr.mxu0 0.0
    %1108 = vmatpush1.msra.mxu0 0.0
    %1109 = vmatprep.subr.mxu0 0.0
    %1110 = vmatpush1.msra.mxu0 0.0
    %1111 = vmatprep.subr.mxu0 0.0
    %1112 = vmatpush1.msra.mxu0 0.0
    %1113 = vmatprep.subr.mxu0 0.0
    %1114 = vmatpush1.msra.mxu0 0.0
    %1115 = vmatprep.subr.mxu0 0.0
    %1116 = vmatpush1.msra.mxu0 0.0
    %1117 = vmatprep.subr.mxu0 0.0
    %1118 = vmatpush1.msra.mxu0 0.0
    %1119 = vmatprep.subr.mxu0 0.0
    %1120 = vmatpush1.msra.mxu0 0.0
    %1121 = vmatprep.subr.mxu0 0.0
    %1122 = vmatpush1.msra.mxu0 0.0
    %1123 = vmatprep.subr.mxu0 0.0
    %1124 = vmatpush1.msra.mxu0 0.0
    %1125 = vmatprep.subr.mxu0 0.0
    %1126 = vmatpush1.msra.mxu0 0.0
    %1127 = vmatprep.subr.mxu0 0.0
    %1128 = vmatpush1.msra.mxu0 0.0
    %1129 = vmatprep.subr.mxu0 0.0
    %1130 = vmatpush1.msra.mxu0 0.0
    %1131 = vmatprep.subr.mxu0 0.0
    %1132 = vmatpush1.msra.mxu0 0.0
    %1133 = vmatprep.mubr.f32.mxu0 0.0
    %1134 = vmatmul.mubr.f32.gmra.mrb[0].mxu0 %v1067
    %v1135 = vpop.f32.mrb[0].mxu0
    %v1136 = vadd.f32 0.0, %v1135
    %v1137 = vpop.f32.mrb[0].mxu0
    %1138 = vdwg.mxu0
    %vm1139 = vcmp.gt.f32.partialorder %v1065, 0.0
    %v1140 = vsel %vm1139, %v1065, 1.0
    %v1141 = vrcp.pop %v1140
    %v1142 = vmul.f32 %v1140, %v1141
    %v1143 = vsub.f32 2.0, %v1142
    %v1144 = vmul.f32 %v1141, %v1143
    %v1145 = vmul.f32 %v1136, %v1144
    %v1146 = vsel %vm1139, 1, 0
    %vm1147 = vcmp.eq.s32.totalorder %v1146, 1
    %v1148 = vsel %vm1147, %v1145, 0.0
    %v1149 = vmul.f32 %v1148, 0.5
    %v1150 = vmul.f32 %v1148, 0.70710677
    %vm1151 = vcmp.lt.f32.partialorder %v1150, 0.0
    %v1152 = vsel %vm1151, -1.0, 1.0
    %v1153 = vand.u32 2147483647, %v1150
    %v1154 = vmul.f32 %v1153, 0.3275911
    %v1155 = vadd.f32 %v1154, 1.0
    %v1156 = vrcp.pop %v1155
    %v1157 = vmul.f32 1.0, %v1156
    %v1158 = vmul.f32 %v1157, 1.0614054
    %v1159 = vadd.f32 %v1158, -1.4531521
    %v1160 = vmul.f32 %v1159, %v1157
    %v1161 = vadd.f32 %v1160, 1.4214138
    %v1162 = vmul.f32 %v1161, %v1157
    %v1163 = vadd.f32 %v1162, -0.28449672
    %v1164 = vmul.f32 %v1163, %v1157
    %v1165 = vadd.f32 %v1164, 0.2548296
    %v1166 = vmul.f32 %v1165, %v1157
    %v1167 = vsub.f32 0.0, %v1153
    %v1168 = vmul.f32 %v1167, %v1153
    %v1169 = vmul.f32 %v1168, 1.442695
    %v1170 = vpow.pop %v1169
    %v1171 = vmul.f32 %v1166, %v1170
    %v1172 = vsub.f32 1.0, %v1171
    %v1173 = vmul.f32 %v1152, %v1172
    %v1174 = vadd.f32 %v1173, 1.0
    %v1175 = vmul.f32 %v1149, %v1174
    %s1176 = scalar_lea.vmem [#allocation2], 640
    %v1177 = vld [vmem:[%s1176] sm:$0xff]
    %v1178 = vld [vmem:[%s1176 + $0x8] sm:$0xff]
    %v1179 = vld [vmem:[%s1176 + $0x10] sm:$0xff]
    %v1180 = vld [vmem:[%s1176 + $0x18] sm:$0xff]
    %v1181 = vld [vmem:[%s1176 + $0x20] sm:$0xff]
    %v1182 = vld [vmem:[%s1176 + $0x28] sm:$0xff]
    %v1183 = vld [vmem:[%s1176 + $0x30] sm:$0xff]
    %v1184 = vld [vmem:[%s1176 + $0x38] sm:$0xff]
    %v1185 = vld [vmem:[%s1176 + $0x40] sm:$0xff]
    %v1186 = vld [vmem:[%s1176 + $0x48] sm:$0xff]
    %v1187 = vld [vmem:[%s1176 + $0x50] sm:$0xff]
    %v1188 = vld [vmem:[%s1176 + $0x58] sm:$0xff]
    %v1189 = vld [vmem:[%s1176 + $0x60] sm:$0xff]
    %v1190 = vld [vmem:[%s1176 + $0x68] sm:$0xff]
    %v1191 = vld [vmem:[%s1176 + $0x70] sm:$0xff]
    %v1192 = vld [vmem:[%s1176 + $0x78] sm:$0xff]
    %v1193 = vld [vmem:[#allocation4 + $0x5] sm:$0x1]
    %v1194 = vlaneseq
    %v1195 = vshrl.u32 %v1194, 7
    %v1196 = vsub.s32 0, %v1195
    %v1197 = vrot.slane %v1193, %v1196
    %1198 = vmatprep.subr.mxu0 0.0
    %1199 = vmatpush1.msra.mxu0 %v1177
    %1200 = vmatprep.subr.mxu0 0.0
    %1201 = vmatpush1.msra.mxu0 %v1178
    %1202 = vmatprep.subr.mxu0 0.0
    %1203 = vmatpush1.msra.mxu0 %v1179
    %1204 = vmatprep.subr.mxu0 0.0
    %1205 = vmatpush1.msra.mxu0 %v1180
    %1206 = vmatprep.subr.mxu0 0.0
    %1207 = vmatpush1.msra.mxu0 %v1181
    %1208 = vmatprep.subr.mxu0 0.0
    %1209 = vmatpush1.msra.mxu0 %v1182
    %1210 = vmatprep.subr.mxu0 0.0
    %1211 = vmatpush1.msra.mxu0 %v1183
    %1212 = vmatprep.subr.mxu0 0.0
    %1213 = vmatpush1.msra.mxu0 %v1184
    %1214 = vmatprep.subr.mxu0 0.0
    %1215 = vmatpush1.msra.mxu0 %v1185
    %1216 = vmatprep.subr.mxu0 0.0
    %1217 = vmatpush1.msra.mxu0 %v1186
    %1218 = vmatprep.subr.mxu0 0.0
    %1219 = vmatpush1.msra.mxu0 %v1187
    %1220 = vmatprep.subr.mxu0 0.0
    %1221 = vmatpush1.msra.mxu0 %v1188
    %1222 = vmatprep.subr.mxu0 0.0
    %1223 = vmatpush1.msra.mxu0 %v1189
    %1224 = vmatprep.subr.mxu0 0.0
    %1225 = vmatpush1.msra.mxu0 %v1190
    %1226 = vmatprep.subr.mxu0 0.0
    %1227 = vmatpush1.msra.mxu0 %v1191
    %1228 = vmatprep.subr.mxu0 0.0
    %1229 = vmatpush1.msra.mxu0 %v1192
    %1230 = vmatprep.subr.mxu0 0.0
    %1231 = vmatpush1.msra.mxu0 0.0
    %1232 = vmatprep.subr.mxu0 0.0
    %1233 = vmatpush1.msra.mxu0 0.0
    %1234 = vmatprep.subr.mxu0 0.0
    %1235 = vmatpush1.msra.mxu0 0.0
    %1236 = vmatprep.subr.mxu0 0.0
    %1237 = vmatpush1.msra.mxu0 0.0
    %1238 = vmatprep.subr.mxu0 0.0
    %1239 = vmatpush1.msra.mxu0 0.0
    %1240 = vmatprep.subr.mxu0 0.0
    %1241 = vmatpush1.msra.mxu0 0.0
    %1242 = vmatprep.subr.mxu0 0.0
    %1243 = vmatpush1.msra.mxu0 0.0
    %1244 = vmatprep.subr.mxu0 0.0
    %1245 = vmatpush1.msra.mxu0 0.0
    %1246 = vmatprep.subr.mxu0 0.0
    %1247 = vmatpush1.msra.mxu0 0.0
    %1248 = vmatprep.subr.mxu0 0.0
    %1249 = vmatpush1.msra.mxu0 0.0
    %1250 = vmatprep.subr.mxu0 0.0
    %1251 = vmatpush1.msra.mxu0 0.0
    %1252 = vmatprep.subr.mxu0 0.0
    %1253 = vmatpush1.msra.mxu0 0.0
    %1254 = vmatprep.subr.mxu0 0.0
    %1255 = vmatpush1.msra.mxu0 0.0
    %1256 = vmatprep.subr.mxu0 0.0
    %1257 = vmatpush1.msra.mxu0 0.0
    %1258 = vmatprep.subr.mxu0 0.0
    %1259 = vmatpush1.msra.mxu0 0.0
    %1260 = vmatprep.subr.mxu0 0.0
    %1261 = vmatpush1.msra.mxu0 0.0
    %1262 = vmatprep.mubr.f32.mxu0 0.0
    %1263 = vmatmul.mubr.f32.gmra.mrb[0].mxu0 %v1175
    %v1264 = vpop.f32.mrb[0].mxu0
    %v1265 = vadd.f32 %v1197, %v1264
    %v1266 = vpop.f32.mrb[0].mxu0
    %1267 = vdwg.mxu0
    %v1268 = vmax.f32 %v1265, 0.0
    %s1269 = scalar_lea.vmem [#allocation2], 1280
    %v1270 = vld [vmem:[%s1269] sm:$0xff]
    %v1271 = vld [vmem:[%s1269 + $0x8] sm:$0xff]
    %v1272 = vld [vmem:[%s1269 + $0x10] sm:$0xff]
    %v1273 = vld [vmem:[%s1269 + $0x18] sm:$0xff]
    %v1274 = vld [vmem:[%s1269 + $0x20] sm:$0xff]
    %v1275 = vld [vmem:[%s1269 + $0x28] sm:$0xff]
    %v1276 = vld [vmem:[%s1269 + $0x30] sm:$0xff]
    %v1277 = vld [vmem:[%s1269 + $0x38] sm:$0xff]
    %v1278 = vld [vmem:[%s1269 + $0x40] sm:$0xff]
    %v1279 = vld [vmem:[%s1269 + $0x48] sm:$0xff]
    %v1280 = vld [vmem:[%s1269 + $0x50] sm:$0xff]
    %v1281 = vld [vmem:[%s1269 + $0x58] sm:$0xff]
    %v1282 = vld [vmem:[%s1269 + $0x60] sm:$0xff]
    %v1283 = vld [vmem:[%s1269 + $0x68] sm:$0xff]
    %v1284 = vld [vmem:[%s1269 + $0x70] sm:$0xff]
    %v1285 = vld [vmem:[%s1269 + $0x78] sm:$0xff]
    %v1286 = vld [vmem:[#allocation4 + $0xb] sm:$0x1]
    %v1287 = vlaneseq
    %v1288 = vshrl.u32 %v1287, 7
    %v1289 = vsub.s32 0, %v1288
    %v1290 = vrot.slane %v1286, %v1289
    %1291 = vmatprep.subr.mxu0 0.0
    %1292 = vmatpush1.msra.mxu0 %v1270
    %1293 = vmatprep.subr.mxu0 0.0
    %1294 = vmatpush1.msra.mxu0 %v1271
    %1295 = vmatprep.subr.mxu0 0.0
    %1296 = vmatpush1.msra.mxu0 %v1272
    %1297 = vmatprep.subr.mxu0 0.0
    %1298 = vmatpush1.msra.mxu0 %v1273
    %1299 = vmatprep.subr.mxu0 0.0
    %1300 = vmatpush1.msra.mxu0 %v1274
    %1301 = vmatprep.subr.mxu0 0.0
    %1302 = vmatpush1.msra.mxu0 %v1275
    %1303 = vmatprep.subr.mxu0 0.0
    %1304 = vmatpush1.msra.mxu0 %v1276
    %1305 = vmatprep.subr.mxu0 0.0
    %1306 = vmatpush1.msra.mxu0 %v1277
    %1307 = vmatprep.subr.mxu0 0.0
    %1308 = vmatpush1.msra.mxu0 %v1278
    %1309 = vmatprep.subr.mxu0 0.0
    %1310 = vmatpush1.msra.mxu0 %v1279
    %1311 = vmatprep.subr.mxu0 0.0
    %1312 = vmatpush1.msra.mxu0 %v1280
    %1313 = vmatprep.subr.mxu0 0.0
    %1314 = vmatpush1.msra.mxu0 %v1281
    %1315 = vmatprep.subr.mxu0 0.0
    %1316 = vmatpush1.msra.mxu0 %v1282
    %1317 = vmatprep.subr.mxu0 0.0
    %1318 = vmatpush1.msra.mxu0 %v1283
    %1319 = vmatprep.subr.mxu0 0.0
    %1320 = vmatpush1.msra.mxu0 %v1284
    %1321 = vmatprep.subr.mxu0 0.0
    %1322 = vmatpush1.msra.mxu0 %v1285
    %1323 = vmatprep.subr.mxu0 0.0
    %1324 = vmatpush1.msra.mxu0 0.0
    %1325 = vmatprep.subr.mxu0 0.0
    %1326 = vmatpush1.msra.mxu0 0.0
    %1327 = vmatprep.subr.mxu0 0.0
    %1328 = vmatpush1.msra.mxu0 0.0
    %1329 = vmatprep.subr.mxu0 0.0
    %1330 = vmatpush1.msra.mxu0 0.0
    %1331 = vmatprep.subr.mxu0 0.0
    %1332 = vmatpush1.msra.mxu0 0.0
    %1333 = vmatprep.subr.mxu0 0.0
    %1334 = vmatpush1.msra.mxu0 0.0
    %1335 = vmatprep.subr.mxu0 0.0
    %1336 = vmatpush1.msra.mxu0 0.0
    %1337 = vmatprep.subr.mxu0 0.0
    %1338 = vmatpush1.msra.mxu0 0.0
    %1339 = vmatprep.subr.mxu0 0.0
    %1340 = vmatpush1.msra.mxu0 0.0
    %1341 = vmatprep.subr.mxu0 0.0
    %1342 = vmatpush1.msra.mxu0 0.0
    %1343 = vmatprep.subr.mxu0 0.0
    %1344 = vmatpush1.msra.mxu0 0.0
    %1345 = vmatprep.subr.mxu0 0.0
    %1346 = vmatpush1.msra.mxu0 0.0
    %1347 = vmatprep.subr.mxu0 0.0
    %1348 = vmatpush1.msra.mxu0 0.0
    %1349 = vmatprep.subr.mxu0 0.0
    %1350 = vmatpush1.msra.mxu0 0.0
    %1351 = vmatprep.subr.mxu0 0.0
    %1352 = vmatpush1.msra.mxu0 0.0
    %1353 = vmatprep.subr.mxu0 0.0
    %1354 = vmatpush1.msra.mxu0 0.0
    %1355 = vmatprep.mubr.f32.mxu0 0.0
    %1356 = vmatmul.mubr.f32.gmra.mrb[0].mxu0 %v1268
    %v1357 = vpop.f32.mrb[0].mxu0
    %v1358 = vadd.f32 %v1290, %v1357
    %v1359 = vpop.f32.mrb[0].mxu0
    %1360 = vdwg.mxu0
    %s1361 = scalar_lea.vmem [#allocation2], 1536
    %v1362 = vld [vmem:[%s1361] sm:$0xff]
    %v1363 = vld [vmem:[%s1361 + $0x8] sm:$0xff]
    %v1364 = vld [vmem:[%s1361 + $0x10] sm:$0xff]
    %v1365 = vld [vmem:[%s1361 + $0x18] sm:$0xff]
    %v1366 = vld [vmem:[%s1361 + $0x20] sm:$0xff]
    %v1367 = vld [vmem:[%s1361 + $0x28] sm:$0xff]
    %v1368 = vld [vmem:[%s1361 + $0x30] sm:$0xff]
    %v1369 = vld [vmem:[%s1361 + $0x38] sm:$0xff]
    %v1370 = vld [vmem:[%s1361 + $0x40] sm:$0xff]
    %v1371 = vld [vmem:[%s1361 + $0x48] sm:$0xff]
    %v1372 = vld [vmem:[%s1361 + $0x50] sm:$0xff]
    %v1373 = vld [vmem:[%s1361 + $0x58] sm:$0xff]
    %v1374 = vld [vmem:[%s1361 + $0x60] sm:$0xff]
    %v1375 = vld [vmem:[%s1361 + $0x68] sm:$0xff]
    %v1376 = vld [vmem:[%s1361 + $0x70] sm:$0xff]
    %v1377 = vld [vmem:[%s1361 + $0x78] sm:$0xff]
    %v1378 = vld [vmem:[#allocation4 + $0xe] sm:$0x1]
    %v1379 = vlaneseq
    %v1380 = vshrl.u32 %v1379, 7
    %v1381 = vsub.s32 0, %v1380
    %v1382 = vrot.slane %v1378, %v1381
    %1383 = vmatprep.subr.mxu0 0.0
    %1384 = vmatpush1.msra.mxu0 %v1362
    %1385 = vmatprep.subr.mxu0 0.0
    %1386 = vmatpush1.msra.mxu0 %v1363
    %1387 = vmatprep.subr.mxu0 0.0
    %1388 = vmatpush1.msra.mxu0 %v1364
    %1389 = vmatprep.subr.mxu0 0.0
    %1390 = vmatpush1.msra.mxu0 %v1365
    %1391 = vmatprep.subr.mxu0 0.0
    %1392 = vmatpush1.msra.mxu0 %v1366
    %1393 = vmatprep.subr.mxu0 0.0
    %1394 = vmatpush1.msra.mxu0 %v1367
    %1395 = vmatprep.subr.mxu0 0.0
    %1396 = vmatpush1.msra.mxu0 %v1368
    %1397 = vmatprep.subr.mxu0 0.0
    %1398 = vmatpush1.msra.mxu0 %v1369
    %1399 = vmatprep.subr.mxu0 0.0
    %1400 = vmatpush1.msra.mxu0 %v1370
    %1401 = vmatprep.subr.mxu0 0.0
    %1402 = vmatpush1.msra.mxu0 %v1371
    %1403 = vmatprep.subr.mxu0 0.0
    %1404 = vmatpush1.msra.mxu0 %v1372
    %1405 = vmatprep.subr.mxu0 0.0
    %1406 = vmatpush1.msra.mxu0 %v1373
    %1407 = vmatprep.subr.mxu0 0.0
    %1408 = vmatpush1.msra.mxu0 %v1374
    %1409 = vmatprep.subr.mxu0 0.0
    %1410 = vmatpush1.msra.mxu0 %v1375
    %1411 = vmatprep.subr.mxu0 0.0
    %1412 = vmatpush1.msra.mxu0 %v1376
    %1413 = vmatprep.subr.mxu0 0.0
    %1414 = vmatpush1.msra.mxu0 %v1377
    %1415 = vmatprep.subr.mxu0 0.0
    %1416 = vmatpush1.msra.mxu0 0.0
    %1417 = vmatprep.subr.mxu0 0.0
    %1418 = vmatpush1.msra.mxu0 0.0
    %1419 = vmatprep.subr.mxu0 0.0
    %1420 = vmatpush1.msra.mxu0 0.0
    %1421 = vmatprep.subr.mxu0 0.0
    %1422 = vmatpush1.msra.mxu0 0.0
    %1423 = vmatprep.subr.mxu0 0.0
    %1424 = vmatpush1.msra.mxu0 0.0
    %1425 = vmatprep.subr.mxu0 0.0
    %1426 = vmatpush1.msra.mxu0 0.0
    %1427 = vmatprep.subr.mxu0 0.0
    %1428 = vmatpush1.msra.mxu0 0.0
    %1429 = vmatprep.subr.mxu0 0.0
    %1430 = vmatpush1.msra.mxu0 0.0
    %1431 = vmatprep.subr.mxu0 0.0
    %1432 = vmatpush1.msra.mxu0 0.0
    %1433 = vmatprep.subr.mxu0 0.0
    %1434 = vmatpush1.msra.mxu0 0.0
    %1435 = vmatprep.subr.mxu0 0.0
    %1436 = vmatpush1.msra.mxu0 0.0
    %1437 = vmatprep.subr.mxu0 0.0
    %1438 = vmatpush1.msra.mxu0 0.0
    %1439 = vmatprep.subr.mxu0 0.0
    %1440 = vmatpush1.msra.mxu0 0.0
    %1441 = vmatprep.subr.mxu0 0.0
    %1442 = vmatpush1.msra.mxu0 0.0
    %1443 = vmatprep.subr.mxu0 0.0
    %1444 = vmatpush1.msra.mxu0 0.0
    %1445 = vmatprep.subr.mxu0 0.0
    %1446 = vmatpush1.msra.mxu0 0.0
    %1447 = vmatprep.mubr.f32.mxu0 0.0
    %1448 = vmatmul.mubr.f32.gmra.mrb[0].mxu0 %v792
    %v1449 = vpop.f32.mrb[0].mxu0
    %v1450 = vadd.f32 %v1382, %v1449
    %v1451 = vpop.f32.mrb[0].mxu0
    %1452 = vmatprep.mubr.f32.mxu0 0.0
    %1453 = vmatmul.mubr.f32.gmra.mrb[0].mxu0 %v793
    %v1454 = vpop.f32.mrb[0].mxu0
    %v1455 = vadd.f32 %v1382, %v1454
    %v1456 = vpop.f32.mrb[0].mxu0
    %1457 = vdwg.mxu0
    %1458 = vmatprep.subr.mxu0 0.0
    %1459 = vmatpush1.xpose.msra.mxu0 %v1450
    %1460 = vmatprep.subr.mxu0 0.0
    %1461 = vmatpush1.xpose.msra.mxu0 %v1455
    %1462 = vmatprep.subr.mxu0 0.0
    %1463 = vmatpush1.xpose.msra.mxu0 0.0
    %1464 = vmatprep.subr.mxu0 0.0
    %1465 = vmatpush1.xpose.msra.mxu0 0.0
    %1466 = vmatprep.subr.mxu0 0.0
    %1467 = vmatpush1.xpose.msra.mxu0 0.0
    %1468 = vmatprep.subr.mxu0 0.0
    %1469 = vmatpush1.xpose.msra.mxu0 0.0
    %1470 = vmatprep.subr.mxu0 0.0
    %1471 = vmatpush1.xpose.msra.mxu0 0.0
    %1472 = vmatprep.subr.mxu0 0.0
    %1473 = vmatpush1.xpose.msra.mxu0 0.0
    %1474 = vmatprep.subr.mxu0 0.0
    %1475 = vmatpush1.xpose.msra.mxu0 0.0
    %1476 = vmatprep.subr.mxu0 0.0
    %1477 = vmatpush1.xpose.msra.mxu0 0.0
    %1478 = vmatprep.subr.mxu0 0.0
    %1479 = vmatpush1.xpose.msra.mxu0 0.0
    %1480 = vmatprep.subr.mxu0 0.0
    %1481 = vmatpush1.xpose.msra.mxu0 0.0
    %1482 = vmatprep.subr.mxu0 0.0
    %1483 = vmatpush1.xpose.msra.mxu0 0.0
    %1484 = vmatprep.subr.mxu0 0.0
    %1485 = vmatpush1.xpose.msra.mxu0 0.0
    %1486 = vmatprep.subr.mxu0 0.0
    %1487 = vmatpush1.xpose.msra.mxu0 0.0
    %1488 = vmatprep.subr.mxu0 0.0
    %1489 = vmatpush1.xpose.msra.mxu0 0.0
    %1490 = vmatprep.subr.mxu0 0.0
    %1491 = vmatpush1.xpose.msra.mxu0 0.0
    %1492 = vmatprep.subr.mxu0 0.0
    %1493 = vmatpush1.xpose.msra.mxu0 0.0
    %1494 = vmatprep.subr.mxu0 0.0
    %1495 = vmatpush1.xpose.msra.mxu0 0.0
    %1496 = vmatprep.subr.mxu0 0.0
    %1497 = vmatpush1.xpose.msra.mxu0 0.0
    %1498 = vmatprep.subr.mxu0 0.0
    %1499 = vmatpush1.xpose.msra.mxu0 0.0
    %1500 = vmatprep.subr.mxu0 0.0
    %1501 = vmatpush1.xpose.msra.mxu0 0.0
    %1502 = vmatprep.subr.mxu0 0.0
    %1503 = vmatpush1.xpose.msra.mxu0 0.0
    %1504 = vmatprep.subr.mxu0 0.0
    %1505 = vmatpush1.xpose.msra.mxu0 0.0
    %1506 = vmatprep.subr.mxu0 0.0
    %1507 = vmatpush1.xpose.msra.mxu0 0.0
    %1508 = vmatprep.subr.mxu0 0.0
    %1509 = vmatpush1.xpose.msra.mxu0 0.0
    %1510 = vmatprep.subr.mxu0 0.0
    %1511 = vmatpush1.xpose.msra.mxu0 0.0
    %1512 = vmatprep.subr.mxu0 0.0
    %1513 = vmatpush1.xpose.msra.mxu0 0.0
    %1514 = vmatprep.subr.mxu0 0.0
    %1515 = vmatpush1.xpose.msra.mxu0 0.0
    %1516 = vmatprep.subr.mxu0 0.0
    %1517 = vmatpush1.xpose.msra.mxu0 0.0
    %1518 = vmatprep.subr.mxu0 0.0
    %1519 = vmatpush1.xpose.msra.mxu0 0.0
    %1520 = vmatprep.subr.mxu0 0.0
    %1521 = vmatpush1.xpose.msra.mxu0 0.0
    %1522 = vmatprep.mubr.f32.mxu0 0.0
    %1523 = vmatmul.mubr.f32.gmra.mrb[0].mxu0 %v1358
    %v1524 = vpop.f32.mrb[0].mxu0
    %v1525 = vadd.f32 0.0, %v1524
    %v1526 = vpop.f32.mrb[0].mxu0
    %1527 = vdwg.mxu0
    %v1528 = vsel %vm1053, %v1525, -1e+30
    %v1529 = vsel %vm1055, %v1528, -inf
    %1530 = vmax.xlane.f32.xlu0 %v1529
    %v1531 = vpop.xlane.xlu0 %1530
    %v1532 = vsub.f32 %v1528, %v1531
    %v1533 = vmul.f32 %v1532, 1.442695
    %v1534 = vpow.pop %v1533
    %v1535 = vmul.f32 %v1534, %v248
    %v1536 = vsel %vm1055, %v1535, 0.0
    %1537 = vadd.xlane.f32.xlu0 %v1536
    %v1538 = vpop.xlane.xlu0 %1537
    %v1540 = vsel %vm1055, %v1535, 0
    %1542 = vmatprep.subr.mxu0 0.0
    %1543 = vmatpush1.msra.mxu0 %v1450
    %1544 = vmatprep.subr.mxu0 0.0
    %1545 = vmatpush1.msra.mxu0 %v1455
    %1546 = vmatprep.subr.mxu0 0.0
    %1547 = vmatpush1.msra.mxu0 0.0
    %1548 = vmatprep.subr.mxu0 0.0
    %1549 = vmatpush1.msra.mxu0 0.0
    %1550 = vmatprep.subr.mxu0 0.0
    %1551 = vmatpush1.msra.mxu0 0.0
    %1552 = vmatprep.subr.mxu0 0.0
    %1553 = vmatpush1.msra.mxu0 0.0
    %1554 = vmatprep.subr.mxu0 0.0
    %1555 = vmatpush1.msra.mxu0 0.0
    %1556 = vmatprep.subr.mxu0 0.0
    %1557 = vmatpush1.msra.mxu0 0.0
    %1558 = vmatprep.subr.mxu0 0.0
    %1559 = vmatpush1.msra.mxu0 0.0
    %1560 = vmatprep.subr.mxu0 0.0
    %1561 = vmatpush1.msra.mxu0 0.0
    %1562 = vmatprep.subr.mxu0 0.0
    %1563 = vmatpush1.msra.mxu0 0.0
    %1564 = vmatprep.subr.mxu0 0.0
    %1565 = vmatpush1.msra.mxu0 0.0
    %1566 = vmatprep.subr.mxu0 0.0
    %1567 = vmatpush1.msra.mxu0 0.0
    %1568 = vmatprep.subr.mxu0 0.0
    %1569 = vmatpush1.msra.mxu0 0.0
    %1570 = vmatprep.subr.mxu0 0.0
    %1571 = vmatpush1.msra.mxu0 0.0
    %1572 = vmatprep.subr.mxu0 0.0
    %1573 = vmatpush1.msra.mxu0 0.0
    %1574 = vmatprep.subr.mxu0 0.0
    %1575 = vmatpush1.msra.mxu0 0.0
    %1576 = vmatprep.subr.mxu0 0.0
    %1577 = vmatpush1.msra.mxu0 0.0
    %1578 = vmatprep.subr.mxu0 0.0
    %1579 = vmatpush1.msra.mxu0 0.0
    %1580 = vmatprep.subr.mxu0 0.0
    %1581 = vmatpush1.msra.mxu0 0.0
    %1582 = vmatprep.subr.mxu0 0.0
    %1583 = vmatpush1.msra.mxu0 0.0
    %1584 = vmatprep.subr.mxu0 0.0
    %1585 = vmatpush1.msra.mxu0 0.0
    %1586 = vmatprep.subr.mxu0 0.0
    %1587 = vmatpush1.msra.mxu0 0.0
    %1588 = vmatprep.subr.mxu0 0.0
    %1589 = vmatpush1.msra.mxu0 0.0
    %1590 = vmatprep.subr.mxu0 0.0
    %1591 = vmatpush1.msra.mxu0 0.0
    %1592 = vmatprep.subr.mxu0 0.0
    %1593 = vmatpush1.msra.mxu0 0.0
    %1594 = vmatprep.subr.mxu0 0.0
    %1595 = vmatpush1.msra.mxu0 0.0
    %1596 = vmatprep.subr.mxu0 0.0
    %1597 = vmatpush1.msra.mxu0 0.0
    %1598 = vmatprep.subr.mxu0 0.0
    %1599 = vmatpush1.msra.mxu0 0.0
    %1600 = vmatprep.subr.mxu0 0.0
    %1601 = vmatpush1.msra.mxu0 0.0
    %1602 = vmatprep.subr.mxu0 0.0
    %1603 = vmatpush1.msra.mxu0 0.0
    %1604 = vmatprep.subr.mxu0 0.0
    %1605 = vmatpush1.msra.mxu0 0.0
    %1606 = vmatprep.mubr.f32.mxu0 0.0
    %1607 = vmatmul.mubr.f32.gmra.mrb[0].mxu0 %v1540
    %v1608 = vpop.f32.mrb[0].mxu0
    %v1609 = vadd.f32 0.0, %v1608
    %v1610 = vpop.f32.mrb[0].mxu0
    %1611 = vdwg.mxu0
    %vm1612 = vcmp.gt.f32.partialorder %v1538, 0.0
    %v1613 = vsel %vm1612, %v1538, 1.0
    %v1614 = vrcp.pop %v1613
    %v1615 = vmul.f32 %v1613, %v1614
    %v1616 = vsub.f32 2.0, %v1615
    %v1617 = vmul.f32 %v1614, %v1616
    %v1618 = vmul.f32 %v1609, %v1617
    %v1619 = vsel %vm1612, 1, 0
    %vm1620 = vcmp.eq.s32.totalorder %v1619, 1
    %v1621 = vsel %vm1620, %v1618, 0.0
    %v1622 = vmul.f32 %v1621, 0.5
    %v1623 = vmul.f32 %v1621, 0.70710677
    %vm1624 = vcmp.lt.f32.partialorder %v1623, 0.0
    %v1625 = vsel %vm1624, -1.0, 1.0
    %v1626 = vand.u32 2147483647, %v1623
    %v1627 = vmul.f32 %v1626, 0.3275911
    %v1628 = vadd.f32 %v1627, 1.0
    %v1629 = vrcp.pop %v1628
    %v1630 = vmul.f32 1.0, %v1629
    %v1631 = vmul.f32 %v1630, 1.0614054
    %v1632 = vadd.f32 %v1631, -1.4531521
    %v1633 = vmul.f32 %v1632, %v1630
    %v1634 = vadd.f32 %v1633, 1.4214138
    %v1635 = vmul.f32 %v1634, %v1630
    %v1636 = vadd.f32 %v1635, -0.28449672
    %v1637 = vmul.f32 %v1636, %v1630
    %v1638 = vadd.f32 %v1637, 0.2548296
    %v1639 = vmul.f32 %v1638, %v1630
    %v1640 = vsub.f32 0.0, %v1626
    %v1641 = vmul.f32 %v1640, %v1626
    %v1642 = vmul.f32 %v1641, 1.442695
    %v1643 = vpow.pop %v1642
    %v1644 = vmul.f32 %v1639, %v1643
    %v1645 = vsub.f32 1.0, %v1644
    %v1646 = vmul.f32 %v1625, %v1645
    %v1647 = vadd.f32 %v1646, 1.0
    %v1648 = vmul.f32 %v1622, %v1647
    %s1649 = scalar_lea.vmem [#allocation2], 1408
    %v1650 = vld [vmem:[%s1649] sm:$0xff]
    %v1651 = vld [vmem:[%s1649 + $0x8] sm:$0xff]
    %v1652 = vld [vmem:[%s1649 + $0x10] sm:$0xff]
    %v1653 = vld [vmem:[%s1649 + $0x18] sm:$0xff]
    %v1654 = vld [vmem:[%s1649 + $0x20] sm:$0xff]
    %v1655 = vld [vmem:[%s1649 + $0x28] sm:$0xff]
    %v1656 = vld [vmem:[%s1649 + $0x30] sm:$0xff]
    %v1657 = vld [vmem:[%s1649 + $0x38] sm:$0xff]
    %v1658 = vld [vmem:[%s1649 + $0x40] sm:$0xff]
    %v1659 = vld [vmem:[%s1649 + $0x48] sm:$0xff]
    %v1660 = vld [vmem:[%s1649 + $0x50] sm:$0xff]
    %v1661 = vld [vmem:[%s1649 + $0x58] sm:$0xff]
    %v1662 = vld [vmem:[%s1649 + $0x60] sm:$0xff]
    %v1663 = vld [vmem:[%s1649 + $0x68] sm:$0xff]
    %v1664 = vld [vmem:[%s1649 + $0x70] sm:$0xff]
    %v1665 = vld [vmem:[%s1649 + $0x78] sm:$0xff]
    %v1666 = vld [vmem:[#allocation4 + $0xc] sm:$0x1]
    %v1667 = vlaneseq
    %v1668 = vshrl.u32 %v1667, 7
    %v1669 = vsub.s32 0, %v1668
    %v1670 = vrot.slane %v1666, %v1669
    %1671 = vmatprep.subr.mxu0 0.0
    %1672 = vmatpush1.msra.mxu0 %v1650
    %1673 = vmatprep.subr.mxu0 0.0
    %1674 = vmatpush1.msra.mxu0 %v1651
    %1675 = vmatprep.subr.mxu0 0.0
    %1676 = vmatpush1.msra.mxu0 %v1652
    %1677 = vmatprep.subr.mxu0 0.0
    %1678 = vmatpush1.msra.mxu0 %v1653
    %1679 = vmatprep.subr.mxu0 0.0
    %1680 = vmatpush1.msra.mxu0 %v1654
    %1681 = vmatprep.subr.mxu0 0.0
    %1682 = vmatpush1.msra.mxu0 %v1655
    %1683 = vmatprep.subr.mxu0 0.0
    %1684 = vmatpush1.msra.mxu0 %v1656
    %1685 = vmatprep.subr.mxu0 0.0
    %1686 = vmatpush1.msra.mxu0 %v1657
    %1687 = vmatprep.subr.mxu0 0.0
    %1688 = vmatpush1.msra.mxu0 %v1658
    %1689 = vmatprep.subr.mxu0 0.0
    %1690 = vmatpush1.msra.mxu0 %v1659
    %1691 = vmatprep.subr.mxu0 0.0
    %1692 = vmatpush1.msra.mxu0 %v1660
    %1693 = vmatprep.subr.mxu0 0.0
    %1694 = vmatpush1.msra.mxu0 %v1661
    %1695 = vmatprep.subr.mxu0 0.0
    %1696 = vmatpush1.msra.mxu0 %v1662
    %1697 = vmatprep.subr.mxu0 0.0
    %1698 = vmatpush1.msra.mxu0 %v1663
    %1699 = vmatprep.subr.mxu0 0.0
    %1700 = vmatpush1.msra.mxu0 %v1664
    %1701 = vmatprep.subr.mxu0 0.0
    %1702 = vmatpush1.msra.mxu0 %v1665
    %1703 = vmatprep.subr.mxu0 0.0
    %1704 = vmatpush1.msra.mxu0 0.0
    %1705 = vmatprep.subr.mxu0 0.0
    %1706 = vmatpush1.msra.mxu0 0.0
    %1707 = vmatprep.subr.mxu0 0.0
    %1708 = vmatpush1.msra.mxu0 0.0
    %1709 = vmatprep.subr.mxu0 0.0
    %1710 = vmatpush1.msra.mxu0 0.0
    %1711 = vmatprep.subr.mxu0 0.0
    %1712 = vmatpush1.msra.mxu0 0.0
    %1713 = vmatprep.subr.mxu0 0.0
    %1714 = vmatpush1.msra.mxu0 0.0
    %1715 = vmatprep.subr.mxu0 0.0
    %1716 = vmatpush1.msra.mxu0 0.0
    %1717 = vmatprep.subr.mxu0 0.0
    %1718 = vmatpush1.msra.mxu0 0.0
    %1719 = vmatprep.subr.mxu0 0.0
    %1720 = vmatpush1.msra.mxu0 0.0
    %1721 = vmatprep.subr.mxu0 0.0
    %1722 = vmatpush1.msra.mxu0 0.0
    %1723 = vmatprep.subr.mxu0 0.0
    %1724 = vmatpush1.msra.mxu0 0.0
    %1725 = vmatprep.subr.mxu0 0.0
    %1726 = vmatpush1.msra.mxu0 0.0
    %1727 = vmatprep.subr.mxu0 0.0
    %1728 = vmatpush1.msra.mxu0 0.0
    %1729 = vmatprep.subr.mxu0 0.0
    %1730 = vmatpush1.msra.mxu0 0.0
    %1731 = vmatprep.subr.mxu0 0.0
    %1732 = vmatpush1.msra.mxu0 0.0
    %1733 = vmatprep.subr.mxu0 0.0
    %1734 = vmatpush1.msra.mxu0 0.0
    %1735 = vmatprep.mubr.f32.mxu0 0.0
    %1736 = vmatmul.mubr.f32.gmra.mrb[0].mxu0 %v1648
    %v1737 = vpop.f32.mrb[0].mxu0
    %v1738 = vadd.f32 %v1670, %v1737
    %v1739 = vpop.f32.mrb[0].mxu0
    %1740 = vdwg.mxu0
    %v1741 = vld [vmem:[#allocation4 + $0xd] sm:$0x1]
    %v1742 = vlaneseq
    %v1743 = vshrl.u32 %v1742, 7
    %v1744 = vsub.s32 0, %v1743
    %v1745 = vrot.slane %v1741, %v1744
    %v1746 = vmul.f32 %v1745, %v1268
    %v1747 = vadd.f32 %v1738, %v1746
    %v1748 = vmax.f32 %v1747, 0.0
    %v1749 = vlaneseq
    %v1750 = vshrl.u32 %v1749, 7
    %v1751 = vlaneseq
    %v1752 = vand.u32 %v1751, 127
    %v1753 = vmul.u32 %v1750, 4
    %vm1754 = vcmp.eq.s32.totalorder %v1752, %v1753
    %v1755 = vsel %vm1754, 1, 0
    %v1756 = vcvt.s32.f32 %v1755
    %s1757 = scalar_lea.vmem [#allocation2], 1792
    %v1758 = vld [vmem:[%s1757] sm:$0xff]
    %v1759 = vld [vmem:[%s1757 + $0x8] sm:$0xff]
    %v1760 = vld [vmem:[%s1757 + $0x10] sm:$0xff]
    %v1761 = vld [vmem:[%s1757 + $0x18] sm:$0xff]
    %v1762 = vld [vmem:[%s1757 + $0x20] sm:$0xff]
    %v1763 = vld [vmem:[%s1757 + $0x28] sm:$0xff]
    %v1764 = vld [vmem:[%s1757 + $0x30] sm:$0xff]
    %v1765 = vld [vmem:[%s1757 + $0x38] sm:$0xff]
    %v1766 = vld [vmem:[%s1757 + $0x40] sm:$0xff]
    %v1767 = vld [vmem:[%s1757 + $0x48] sm:$0xff]
    %v1768 = vld [vmem:[%s1757 + $0x50] sm:$0xff]
    %v1769 = vld [vmem:[%s1757 + $0x58] sm:$0xff]
    %v1770 = vld [vmem:[%s1757 + $0x60] sm:$0xff]
    %v1771 = vld [vmem:[%s1757 + $0x68] sm:$0xff]
    %v1772 = vld [vmem:[%s1757 + $0x70] sm:$0xff]
    %v1773 = vld [vmem:[%s1757 + $0x78] sm:$0xff]
    %1774 = vmatprep.subr.mxu0 0.0
    %1775 = vmatpush1.msra.mxu0 %v1758
    %1776 = vmatprep.subr.mxu0 0.0
    %1777 = vmatpush1.msra.mxu0 %v1759
    %1778 = vmatprep.subr.mxu0 0.0
    %1779 = vmatpush1.msra.mxu0 %v1760
    %1780 = vmatprep.subr.mxu0 0.0
    %1781 = vmatpush1.msra.mxu0 %v1761
    %1782 = vmatprep.subr.mxu0 0.0
    %1783 = vmatpush1.msra.mxu0 %v1762
    %1784 = vmatprep.subr.mxu0 0.0
    %1785 = vmatpush1.msra.mxu0 %v1763
    %1786 = vmatprep.subr.mxu0 0.0
    %1787 = vmatpush1.msra.mxu0 %v1764
    %1788 = vmatprep.subr.mxu0 0.0
    %1789 = vmatpush1.msra.mxu0 %v1765
    %1790 = vmatprep.subr.mxu0 0.0
    %1791 = vmatpush1.msra.mxu0 %v1766
    %1792 = vmatprep.subr.mxu0 0.0
    %1793 = vmatpush1.msra.mxu0 %v1767
    %1794 = vmatprep.subr.mxu0 0.0
    %1795 = vmatpush1.msra.mxu0 %v1768
    %1796 = vmatprep.subr.mxu0 0.0
    %1797 = vmatpush1.msra.mxu0 %v1769
    %1798 = vmatprep.subr.mxu0 0.0
    %1799 = vmatpush1.msra.mxu0 %v1770
    %1800 = vmatprep.subr.mxu0 0.0
    %1801 = vmatpush1.msra.mxu0 %v1771
    %1802 = vmatprep.subr.mxu0 0.0
    %1803 = vmatpush1.msra.mxu0 %v1772
    %1804 = vmatprep.subr.mxu0 0.0
    %1805 = vmatpush1.msra.mxu0 %v1773
    %1806 = vmatprep.subr.mxu0 0.0
    %1807 = vmatpush1.msra.mxu0 0.0
    %1808 = vmatprep.subr.mxu0 0.0
    %1809 = vmatpush1.msra.mxu0 0.0
    %1810 = vmatprep.subr.mxu0 0.0
    %1811 = vmatpush1.msra.mxu0 0.0
    %1812 = vmatprep.subr.mxu0 0.0
    %1813 = vmatpush1.msra.mxu0 0.0
    %1814 = vmatprep.subr.mxu0 0.0
    %1815 = vmatpush1.msra.mxu0 0.0
    %1816 = vmatprep.subr.mxu0 0.0
    %1817 = vmatpush1.msra.mxu0 0.0
    %1818 = vmatprep.subr.mxu0 0.0
    %1819 = vmatpush1.msra.mxu0 0.0
    %1820 = vmatprep.subr.mxu0 0.0
    %1821 = vmatpush1.msra.mxu0 0.0
    %1822 = vmatprep.subr.mxu0 0.0
    %1823 = vmatpush1.msra.mxu0 0.0
    %1824 = vmatprep.subr.mxu0 0.0
    %1825 = vmatpush1.msra.mxu0 0.0
    %1826 = vmatprep.subr.mxu0 0.0
    %1827 = vmatpush1.msra.mxu0 0.0
    %1828 = vmatprep.subr.mxu0 0.0
    %1829 = vmatpush1.msra.mxu0 0.0
    %1830 = vmatprep.subr.mxu0 0.0
    %1831 = vmatpush1.msra.mxu0 0.0
    %1832 = vmatprep.subr.mxu0 0.0
    %1833 = vmatpush1.msra.mxu0 0.0
    %1834 = vmatprep.subr.mxu0 0.0
    %1835 = vmatpush1.msra.mxu0 0.0
    %1836 = vmatprep.subr.mxu0 0.0
    %1837 = vmatpush1.msra.mxu0 0.0
    %1838 = vmatprep.mubr.f32.mxu0 0.0
    %1839 = vmatmul.mubr.f32.gmra.mrb[0].mxu0 %v1748
    %v1840 = vpop.f32.mrb[0].mxu0
    %v1841 = vadd.f32 0.0, %v1840
    %v1842 = vpop.f32.mrb[0].mxu0
    %1843 = vdwg.mxu0
    %v1844 = vadd.s32 %v1753, 1
    %vm1845 = vcmp.eq.s32.totalorder %v1752, %v1844
    %v1846 = vsel %vm1845, 1, 0
    %v1847 = vcvt.s32.f32 %v1846
    %s1848 = scalar_lea.vmem [#allocation2], 1920
    %v1849 = vld [vmem:[%s1848] sm:$0xff]
    %v1850 = vld [vmem:[%s1848 + $0x8] sm:$0xff]
    %v1851 = vld [vmem:[%s1848 + $0x10] sm:$0xff]
    %v1852 = vld [vmem:[%s1848 + $0x18] sm:$0xff]
    %v1853 = vld [vmem:[%s1848 + $0x20] sm:$0xff]
    %v1854 = vld [vmem:[%s1848 + $0x28] sm:$0xff]
    %v1855 = vld [vmem:[%s1848 + $0x30] sm:$0xff]
    %v1856 = vld [vmem:[%s1848 + $0x38] sm:$0xff]
    %v1857 = vld [vmem:[%s1848 + $0x40] sm:$0xff]
    %v1858 = vld [vmem:[%s1848 + $0x48] sm:$0xff]
    %v1859 = vld [vmem:[%s1848 + $0x50] sm:$0xff]
    %v1860 = vld [vmem:[%s1848 + $0x58] sm:$0xff]
    %v1861 = vld [vmem:[%s1848 + $0x60] sm:$0xff]
    %v1862 = vld [vmem:[%s1848 + $0x68] sm:$0xff]
    %v1863 = vld [vmem:[%s1848 + $0x70] sm:$0xff]
    %v1864 = vld [vmem:[%s1848 + $0x78] sm:$0xff]
    %1865 = vmatprep.subr.mxu0 0.0
    %1866 = vmatpush1.msra.mxu0 %v1849
    %1867 = vmatprep.subr.mxu0 0.0
    %1868 = vmatpush1.msra.mxu0 %v1850
    %1869 = vmatprep.subr.mxu0 0.0
    %1870 = vmatpush1.msra.mxu0 %v1851
    %1871 = vmatprep.subr.mxu0 0.0
    %1872 = vmatpush1.msra.mxu0 %v1852
    %1873 = vmatprep.subr.mxu0 0.0
    %1874 = vmatpush1.msra.mxu0 %v1853
    %1875 = vmatprep.subr.mxu0 0.0
    %1876 = vmatpush1.msra.mxu0 %v1854
    %1877 = vmatprep.subr.mxu0 0.0
    %1878 = vmatpush1.msra.mxu0 %v1855
    %1879 = vmatprep.subr.mxu0 0.0
    %1880 = vmatpush1.msra.mxu0 %v1856
    %1881 = vmatprep.subr.mxu0 0.0
    %1882 = vmatpush1.msra.mxu0 %v1857
    %1883 = vmatprep.subr.mxu0 0.0
    %1884 = vmatpush1.msra.mxu0 %v1858
    %1885 = vmatprep.subr.mxu0 0.0
    %1886 = vmatpush1.msra.mxu0 %v1859
    %1887 = vmatprep.subr.mxu0 0.0
    %1888 = vmatpush1.msra.mxu0 %v1860
    %1889 = vmatprep.subr.mxu0 0.0
    %1890 = vmatpush1.msra.mxu0 %v1861
    %1891 = vmatprep.subr.mxu0 0.0
    %1892 = vmatpush1.msra.mxu0 %v1862
    %1893 = vmatprep.subr.mxu0 0.0
    %1894 = vmatpush1.msra.mxu0 %v1863
    %1895 = vmatprep.subr.mxu0 0.0
    %1896 = vmatpush1.msra.mxu0 %v1864
    %1897 = vmatprep.subr.mxu0 0.0
    %1898 = vmatpush1.msra.mxu0 0.0
    %1899 = vmatprep.subr.mxu0 0.0
    %1900 = vmatpush1.msra.mxu0 0.0
    %1901 = vmatprep.subr.mxu0 0.0
    %1902 = vmatpush1.msra.mxu0 0.0
    %1903 = vmatprep.subr.mxu0 0.0
    %1904 = vmatpush1.msra.mxu0 0.0
    %1905 = vmatprep.subr.mxu0 0.0
    %1906 = vmatpush1.msra.mxu0 0.0
    %1907 = vmatprep.subr.mxu0 0.0
    %1908 = vmatpush1.msra.mxu0 0.0
    %1909 = vmatprep.subr.mxu0 0.0
    %1910 = vmatpush1.msra.mxu0 0.0
    %1911 = vmatprep.subr.mxu0 0.0
    %1912 = vmatpush1.msra.mxu0 0.0
    %1913 = vmatprep.subr.mxu0 0.0
    %1914 = vmatpush1.msra.mxu0 0.0
    %1915 = vmatprep.subr.mxu0 0.0
    %1916 = vmatpush1.msra.mxu0 0.0
    %1917 = vmatprep.subr.mxu0 0.0
    %1918 = vmatpush1.msra.mxu0 0.0
    %1919 = vmatprep.subr.mxu0 0.0
    %1920 = vmatpush1.msra.mxu0 0.0
    %1921 = vmatprep.subr.mxu0 0.0
    %1922 = vmatpush1.msra.mxu0 0.0
    %1923 = vmatprep.subr.mxu0 0.0
    %1924 = vmatpush1.msra.mxu0 0.0
    %1925 = vmatprep.subr.mxu0 0.0
    %1926 = vmatpush1.msra.mxu0 0.0
    %1927 = vmatprep.subr.mxu0 0.0
    %1928 = vmatpush1.msra.mxu0 0.0
    %1929 = vmatprep.mubr.f32.mxu0 0.0
    %1930 = vmatmul.mubr.f32.gmra.mrb[0].mxu0 %v1748
    %v1931 = vpop.f32.mrb[0].mxu0
    %v1932 = vadd.f32 0.0, %v1931
    %v1933 = vpop.f32.mrb[0].mxu0
    %1934 = vdwg.mxu0
    %v1936 = vsel %vm519, %v1847, 0
    %1938 = vmatprep.subr.mxu0 0.0
    %1939 = vmatpush1.msra.mxu0 %v1932
    %1940 = vmatprep.subr.mxu0 0.0
    %1941 = vmatpush1.msra.mxu0 0.0
    %1942 = vmatprep.subr.mxu0 0.0
    %1943 = vmatpush1.msra.mxu0 0.0
    %1944 = vmatprep.subr.mxu0 0.0
    %1945 = vmatpush1.msra.mxu0 0.0
    %1946 = vmatprep.subr.mxu0 0.0
    %1947 = vmatpush1.msra.mxu0 0.0
    %1948 = vmatprep.subr.mxu0 0.0
    %1949 = vmatpush1.msra.mxu0 0.0
    %1950 = vmatprep.subr.mxu0 0.0
    %1951 = vmatpush1.msra.mxu0 0.0
    %1952 = vmatprep.subr.mxu0 0.0
    %1953 = vmatpush1.msra.mxu0 0.0
    %1954 = vmatprep.subr.mxu0 0.0
    %1955 = vmatpush1.msra.mxu0 0.0
    %1956 = vmatprep.subr.mxu0 0.0
    %1957 = vmatpush1.msra.mxu0 0.0
    %1958 = vmatprep.subr.mxu0 0.0
    %1959 = vmatpush1.msra.mxu0 0.0
    %1960 = vmatprep.subr.mxu0 0.0
    %1961 = vmatpush1.msra.mxu0 0.0
    %1962 = vmatprep.subr.mxu0 0.0
    %1963 = vmatpush1.msra.mxu0 0.0
    %1964 = vmatprep.subr.mxu0 0.0
    %1965 = vmatpush1.msra.mxu0 0.0
    %1966 = vmatprep.subr.mxu0 0.0
    %1967 = vmatpush1.msra.mxu0 0.0
    %1968 = vmatprep.subr.mxu0 0.0
    %1969 = vmatpush1.msra.mxu0 0.0
    %1970 = vmatprep.subr.mxu0 0.0
    %1971 = vmatpush1.msra.mxu0 0.0
    %1972 = vmatprep.subr.mxu0 0.0
    %1973 = vmatpush1.msra.mxu0 0.0
    %1974 = vmatprep.subr.mxu0 0.0
    %1975 = vmatpush1.msra.mxu0 0.0
    %1976 = vmatprep.subr.mxu0 0.0
    %1977 = vmatpush1.msra.mxu0 0.0
    %1978 = vmatprep.subr.mxu0 0.0
    %1979 = vmatpush1.msra.mxu0 0.0
    %1980 = vmatprep.subr.mxu0 0.0
    %1981 = vmatpush1.msra.mxu0 0.0
    %1982 = vmatprep.subr.mxu0 0.0
    %1983 = vmatpush1.msra.mxu0 0.0
    %1984 = vmatprep.subr.mxu0 0.0
    %1985 = vmatpush1.msra.mxu0 0.0
    %1986 = vmatprep.subr.mxu0 0.0
    %1987 = vmatpush1.msra.mxu0 0.0
    %1988 = vmatprep.subr.mxu0 0.0
    %1989 = vmatpush1.msra.mxu0 0.0
    %1990 = vmatprep.subr.mxu0 0.0
    %1991 = vmatpush1.msra.mxu0 0.0
    %1992 = vmatprep.subr.mxu0 0.0
    %1993 = vmatpush1.msra.mxu0 0.0
    %1994 = vmatprep.subr.mxu0 0.0
    %1995 = vmatpush1.msra.mxu0 0.0
    %1996 = vmatprep.subr.mxu0 0.0
    %1997 = vmatpush1.msra.mxu0 0.0
    %1998 = vmatprep.subr.mxu0 0.0
    %1999 = vmatpush1.msra.mxu0 0.0
    %2000 = vmatprep.subr.mxu0 0.0
    %2001 = vmatpush1.msra.mxu0 0.0
    %2002 = vmatprep.mubr.f32.mxu0 0.0
    %2003 = vmatmul.mubr.f32.gmra.mrb[0].mxu0 %v1936
    %v2004 = vpop.f32.mrb[0].mxu0
    %v2005 = vadd.f32 0.0, %v2004
    %v2006 = vpop.f32.mrb[0].mxu0
    %2007 = vdwg.mxu0
    %v2009 = vsel %vm519, %v1756, 0
    %2011 = vmatprep.subr.mxu0 0.0
    %2012 = vmatpush1.msra.mxu0 %v1841
    %2013 = vmatprep.subr.mxu0 0.0
    %2014 = vmatpush1.msra.mxu0 0.0
    %2015 = vmatprep.subr.mxu0 0.0
    %2016 = vmatpush1.msra.mxu0 0.0
    %2017 = vmatprep.subr.mxu0 0.0
    %2018 = vmatpush1.msra.mxu0 0.0
    %2019 = vmatprep.subr.mxu0 0.0
    %2020 = vmatpush1.msra.mxu0 0.0
    %2021 = vmatprep.subr.mxu0 0.0
    %2022 = vmatpush1.msra.mxu0 0.0
    %2023 = vmatprep.subr.mxu0 0.0
    %2024 = vmatpush1.msra.mxu0 0.0
    %2025 = vmatprep.subr.mxu0 0.0
    %2026 = vmatpush1.msra.mxu0 0.0
    %2027 = vmatprep.subr.mxu0 0.0
    %2028 = vmatpush1.msra.mxu0 0.0
    %2029 = vmatprep.subr.mxu0 0.0
    %2030 = vmatpush1.msra.mxu0 0.0
    %2031 = vmatprep.subr.mxu0 0.0
    %2032 = vmatpush1.msra.mxu0 0.0
    %2033 = vmatprep.subr.mxu0 0.0
    %2034 = vmatpush1.msra.mxu0 0.0
    %2035 = vmatprep.subr.mxu0 0.0
    %2036 = vmatpush1.msra.mxu0 0.0
    %2037 = vmatprep.subr.mxu0 0.0
    %2038 = vmatpush1.msra.mxu0 0.0
    %2039 = vmatprep.subr.mxu0 0.0
    %2040 = vmatpush1.msra.mxu0 0.0
    %2041 = vmatprep.subr.mxu0 0.0
    %2042 = vmatpush1.msra.mxu0 0.0
    %2043 = vmatprep.subr.mxu0 0.0
    %2044 = vmatpush1.msra.mxu0 0.0
    %2045 = vmatprep.subr.mxu0 0.0
    %2046 = vmatpush1.msra.mxu0 0.0
    %2047 = vmatprep.subr.mxu0 0.0
    %2048 = vmatpush1.msra.mxu0 0.0
    %2049 = vmatprep.subr.mxu0 0.0
    %2050 = vmatpush1.msra.mxu0 0.0
    %2051 = vmatprep.subr.mxu0 0.0
    %2052 = vmatpush1.msra.mxu0 0.0
    %2053 = vmatprep.subr.mxu0 0.0
    %2054 = vmatpush1.msra.mxu0 0.0
    %2055 = vmatprep.subr.mxu0 0.0
    %2056 = vmatpush1.msra.mxu0 0.0
    %2057 = vmatprep.subr.mxu0 0.0
    %2058 = vmatpush1.msra.mxu0 0.0
    %2059 = vmatprep.subr.mxu0 0.0
    %2060 = vmatpush1.msra.mxu0 0.0
    %2061 = vmatprep.subr.mxu0 0.0
    %2062 = vmatpush1.msra.mxu0 0.0
    %2063 = vmatprep.subr.mxu0 0.0
    %2064 = vmatpush1.msra.mxu0 0.0
    %2065 = vmatprep.subr.mxu0 0.0
    %2066 = vmatpush1.msra.mxu0 0.0
    %2067 = vmatprep.subr.mxu0 0.0
    %2068 = vmatpush1.msra.mxu0 0.0
    %2069 = vmatprep.subr.mxu0 0.0
    %2070 = vmatpush1.msra.mxu0 0.0
    %2071 = vmatprep.subr.mxu0 0.0
    %2072 = vmatpush1.msra.mxu0 0.0
    %2073 = vmatprep.subr.mxu0 0.0
    %2074 = vmatpush1.msra.mxu0 0.0
    %2075 = vmatprep.mubr.f32.mxu0 0.0
    %2076 = vmatmul.mubr.f32.gmra.mrb[0].mxu0 %v2009
    %v2077 = vpop.f32.mrb[0].mxu0
    %v2078 = vadd.f32 %v2005, %v2077
    %v2079 = vpop.f32.mrb[0].mxu0
    %2080 = vdwg.mxu0
    %v2081 = vadd.s32 %v1753, 2
    %vm2082 = vcmp.eq.s32.totalorder %v1752, %v2081
    %v2083 = vsel %vm2082, 1, 0
    %v2084 = vcvt.s32.f32 %v2083
    %s2085 = scalar_lea.vmem [#allocation2], 2048
    %v2086 = vld [vmem:[%s2085] sm:$0xff]
    %v2087 = vld [vmem:[%s2085 + $0x8] sm:$0xff]
    %v2088 = vld [vmem:[%s2085 + $0x10] sm:$0xff]
    %v2089 = vld [vmem:[%s2085 + $0x18] sm:$0xff]
    %v2090 = vld [vmem:[%s2085 + $0x20] sm:$0xff]
    %v2091 = vld [vmem:[%s2085 + $0x28] sm:$0xff]
    %v2092 = vld [vmem:[%s2085 + $0x30] sm:$0xff]
    %v2093 = vld [vmem:[%s2085 + $0x38] sm:$0xff]
    %v2094 = vld [vmem:[%s2085 + $0x40] sm:$0xff]
    %v2095 = vld [vmem:[%s2085 + $0x48] sm:$0xff]
    %v2096 = vld [vmem:[%s2085 + $0x50] sm:$0xff]
    %v2097 = vld [vmem:[%s2085 + $0x58] sm:$0xff]
    %v2098 = vld [vmem:[%s2085 + $0x60] sm:$0xff]
    %v2099 = vld [vmem:[%s2085 + $0x68] sm:$0xff]
    %v2100 = vld [vmem:[%s2085 + $0x70] sm:$0xff]
    %v2101 = vld [vmem:[%s2085 + $0x78] sm:$0xff]
    %2102 = vmatprep.subr.mxu0 0.0
    %2103 = vmatpush1.msra.mxu0 %v2086
    %2104 = vmatprep.subr.mxu0 0.0
    %2105 = vmatpush1.msra.mxu0 %v2087
    %2106 = vmatprep.subr.mxu0 0.0
    %2107 = vmatpush1.msra.mxu0 %v2088
    %2108 = vmatprep.subr.mxu0 0.0
    %2109 = vmatpush1.msra.mxu0 %v2089
    %2110 = vmatprep.subr.mxu0 0.0
    %2111 = vmatpush1.msra.mxu0 %v2090
    %2112 = vmatprep.subr.mxu0 0.0
    %2113 = vmatpush1.msra.mxu0 %v2091
    %2114 = vmatprep.subr.mxu0 0.0
    %2115 = vmatpush1.msra.mxu0 %v2092
    %2116 = vmatprep.subr.mxu0 0.0
    %2117 = vmatpush1.msra.mxu0 %v2093
    %2118 = vmatprep.subr.mxu0 0.0
    %2119 = vmatpush1.msra.mxu0 %v2094
    %2120 = vmatprep.subr.mxu0 0.0
    %2121 = vmatpush1.msra.mxu0 %v2095
    %2122 = vmatprep.subr.mxu0 0.0
    %2123 = vmatpush1.msra.mxu0 %v2096
    %2124 = vmatprep.subr.mxu0 0.0
    %2125 = vmatpush1.msra.mxu0 %v2097
    %2126 = vmatprep.subr.mxu0 0.0
    %2127 = vmatpush1.msra.mxu0 %v2098
    %2128 = vmatprep.subr.mxu0 0.0
    %2129 = vmatpush1.msra.mxu0 %v2099
    %2130 = vmatprep.subr.mxu0 0.0
    %2131 = vmatpush1.msra.mxu0 %v2100
    %2132 = vmatprep.subr.mxu0 0.0
    %2133 = vmatpush1.msra.mxu0 %v2101
    %2134 = vmatprep.subr.mxu0 0.0
    %2135 = vmatpush1.msra.mxu0 0.0
    %2136 = vmatprep.subr.mxu0 0.0
    %2137 = vmatpush1.msra.mxu0 0.0
    %2138 = vmatprep.subr.mxu0 0.0
    %2139 = vmatpush1.msra.mxu0 0.0
    %2140 = vmatprep.subr.mxu0 0.0
    %2141 = vmatpush1.msra.mxu0 0.0
    %2142 = vmatprep.subr.mxu0 0.0
    %2143 = vmatpush1.msra.mxu0 0.0
    %2144 = vmatprep.subr.mxu0 0.0
    %2145 = vmatpush1.msra.mxu0 0.0
    %2146 = vmatprep.subr.mxu0 0.0
    %2147 = vmatpush1.msra.mxu0 0.0
    %2148 = vmatprep.subr.mxu0 0.0
    %2149 = vmatpush1.msra.mxu0 0.0
    %2150 = vmatprep.subr.mxu0 0.0
    %2151 = vmatpush1.msra.mxu0 0.0
    %2152 = vmatprep.subr.mxu0 0.0
    %2153 = vmatpush1.msra.mxu0 0.0
    %2154 = vmatprep.subr.mxu0 0.0
    %2155 = vmatpush1.msra.mxu0 0.0
    %2156 = vmatprep.subr.mxu0 0.0
    %2157 = vmatpush1.msra.mxu0 0.0
    %2158 = vmatprep.subr.mxu0 0.0
    %2159 = vmatpush1.msra.mxu0 0.0
    %2160 = vmatprep.subr.mxu0 0.0
    %2161 = vmatpush1.msra.mxu0 0.0
    %2162 = vmatprep.subr.mxu0 0.0
    %2163 = vmatpush1.msra.mxu0 0.0
    %2164 = vmatprep.subr.mxu0 0.0
    %2165 = vmatpush1.msra.mxu0 0.0
    %2166 = vmatprep.mubr.f32.mxu0 0.0
    %2167 = vmatmul.mubr.f32.gmra.mrb[0].mxu0 %v1748
    %v2168 = vpop.f32.mrb[0].mxu0
    %v2169 = vadd.f32 0.0, %v2168
    %v2170 = vpop.f32.mrb[0].mxu0
    %2171 = vdwg.mxu0
    %v2173 = vsel %vm519, %v2084, 0
    %2175 = vmatprep.subr.mxu0 0.0
    %2176 = vmatpush1.msra.mxu0 %v2169
    %2177 = vmatprep.subr.mxu0 0.0
    %2178 = vmatpush1.msra.mxu0 0.0
    %2179 = vmatprep.subr.mxu0 0.0
    %2180 = vmatpush1.msra.mxu0 0.0
    %2181 = vmatprep.subr.mxu0 0.0
    %2182 = vmatpush1.msra.mxu0 0.0
    %2183 = vmatprep.subr.mxu0 0.0
    %2184 = vmatpush1.msra.mxu0 0.0
    %2185 = vmatprep.subr.mxu0 0.0
    %2186 = vmatpush1.msra.mxu0 0.0
    %2187 = vmatprep.subr.mxu0 0.0
    %2188 = vmatpush1.msra.mxu0 0.0
    %2189 = vmatprep.subr.mxu0 0.0
    %2190 = vmatpush1.msra.mxu0 0.0
    %2191 = vmatprep.subr.mxu0 0.0
    %2192 = vmatpush1.msra.mxu0 0.0
    %2193 = vmatprep.subr.mxu0 0.0
    %2194 = vmatpush1.msra.mxu0 0.0
    %2195 = vmatprep.subr.mxu0 0.0
    %2196 = vmatpush1.msra.mxu0 0.0
    %2197 = vmatprep.subr.mxu0 0.0
    %2198 = vmatpush1.msra.mxu0 0.0
    %2199 = vmatprep.subr.mxu0 0.0
    %2200 = vmatpush1.msra.mxu0 0.0
    %2201 = vmatprep.subr.mxu0 0.0
    %2202 = vmatpush1.msra.mxu0 0.0
    %2203 = vmatprep.subr.mxu0 0.0
    %2204 = vmatpush1.msra.mxu0 0.0
    %2205 = vmatprep.subr.mxu0 0.0
    %2206 = vmatpush1.msra.mxu0 0.0
    %2207 = vmatprep.subr.mxu0 0.0
    %2208 = vmatpush1.msra.mxu0 0.0
    %2209 = vmatprep.subr.mxu0 0.0
    %2210 = vmatpush1.msra.mxu0 0.0
    %2211 = vmatprep.subr.mxu0 0.0
    %2212 = vmatpush1.msra.mxu0 0.0
    %2213 = vmatprep.subr.mxu0 0.0
    %2214 = vmatpush1.msra.mxu0 0.0
    %2215 = vmatprep.subr.mxu0 0.0
    %2216 = vmatpush1.msra.mxu0 0.0
    %2217 = vmatprep.subr.mxu0 0.0
    %2218 = vmatpush1.msra.mxu0 0.0
    %2219 = vmatprep.subr.mxu0 0.0
    %2220 = vmatpush1.msra.mxu0 0.0
    %2221 = vmatprep.subr.mxu0 0.0
    %2222 = vmatpush1.msra.mxu0 0.0
    %2223 = vmatprep.subr.mxu0 0.0
    %2224 = vmatpush1.msra.mxu0 0.0
    %2225 = vmatprep.subr.mxu0 0.0
    %2226 = vmatpush1.msra.mxu0 0.0
    %2227 = vmatprep.subr.mxu0 0.0
    %2228 = vmatpush1.msra.mxu0 0.0
    %2229 = vmatprep.subr.mxu0 0.0
    %2230 = vmatpush1.msra.mxu0 0.0
    %2231 = vmatprep.subr.mxu0 0.0
    %2232 = vmatpush1.msra.mxu0 0.0
    %2233 = vmatprep.subr.mxu0 0.0
    %2234 = vmatpush1.msra.mxu0 0.0
    %2235 = vmatprep.subr.mxu0 0.0
    %2236 = vmatpush1.msra.mxu0 0.0
    %2237 = vmatprep.subr.mxu0 0.0
    %2238 = vmatpush1.msra.mxu0 0.0
    %2239 = vmatprep.mubr.f32.mxu0 0.0
    %2240 = vmatmul.mubr.f32.gmra.mrb[0].mxu0 %v2173
    %v2241 = vpop.f32.mrb[0].mxu0
    %v2242 = vadd.f32 0.0, %v2241
    %v2243 = vpop.f32.mrb[0].mxu0
    %2244 = vdwg.mxu0
    %v2245 = vadd.f32 %v2078, %v2242
    %v2246 = vadd.s32 %v1753, 3
    %vm2247 = vcmp.eq.s32.totalorder %v1752, %v2246
    %v2248 = vsel %vm2247, 1, 0
    %v2249 = vcvt.s32.f32 %v2248
    %s2250 = scalar_lea.vmem [#allocation2], 2176
    %v2251 = vld [vmem:[%s2250] sm:$0xff]
    %v2252 = vld [vmem:[%s2250 + $0x8] sm:$0xff]
    %v2253 = vld [vmem:[%s2250 + $0x10] sm:$0xff]
    %v2254 = vld [vmem:[%s2250 + $0x18] sm:$0xff]
    %v2255 = vld [vmem:[%s2250 + $0x20] sm:$0xff]
    %v2256 = vld [vmem:[%s2250 + $0x28] sm:$0xff]
    %v2257 = vld [vmem:[%s2250 + $0x30] sm:$0xff]
    %v2258 = vld [vmem:[%s2250 + $0x38] sm:$0xff]
    %v2259 = vld [vmem:[%s2250 + $0x40] sm:$0xff]
    %v2260 = vld [vmem:[%s2250 + $0x48] sm:$0xff]
    %v2261 = vld [vmem:[%s2250 + $0x50] sm:$0xff]
    %v2262 = vld [vmem:[%s2250 + $0x58] sm:$0xff]
    %v2263 = vld [vmem:[%s2250 + $0x60] sm:$0xff]
    %v2264 = vld [vmem:[%s2250 + $0x68] sm:$0xff]
    %v2265 = vld [vmem:[%s2250 + $0x70] sm:$0xff]
    %v2266 = vld [vmem:[%s2250 + $0x78] sm:$0xff]
    %2267 = vmatprep.subr.mxu0 0.0
    %2268 = vmatpush1.msra.mxu0 %v2251
    %2269 = vmatprep.subr.mxu0 0.0
    %2270 = vmatpush1.msra.mxu0 %v2252
    %2271 = vmatprep.subr.mxu0 0.0
    %2272 = vmatpush1.msra.mxu0 %v2253
    %2273 = vmatprep.subr.mxu0 0.0
    %2274 = vmatpush1.msra.mxu0 %v2254
    %2275 = vmatprep.subr.mxu0 0.0
    %2276 = vmatpush1.msra.mxu0 %v2255
    %2277 = vmatprep.subr.mxu0 0.0
    %2278 = vmatpush1.msra.mxu0 %v2256
    %2279 = vmatprep.subr.mxu0 0.0
    %2280 = vmatpush1.msra.mxu0 %v2257
    %2281 = vmatprep.subr.mxu0 0.0
    %2282 = vmatpush1.msra.mxu0 %v2258
    %2283 = vmatprep.subr.mxu0 0.0
    %2284 = vmatpush1.msra.mxu0 %v2259
    %2285 = vmatprep.subr.mxu0 0.0
    %2286 = vmatpush1.msra.mxu0 %v2260
    %2287 = vmatprep.subr.mxu0 0.0
    %2288 = vmatpush1.msra.mxu0 %v2261
    %2289 = vmatprep.subr.mxu0 0.0
    %2290 = vmatpush1.msra.mxu0 %v2262
    %2291 = vmatprep.subr.mxu0 0.0
    %2292 = vmatpush1.msra.mxu0 %v2263
    %2293 = vmatprep.subr.mxu0 0.0
    %2294 = vmatpush1.msra.mxu0 %v2264
    %2295 = vmatprep.subr.mxu0 0.0
    %2296 = vmatpush1.msra.mxu0 %v2265
    %2297 = vmatprep.subr.mxu0 0.0
    %2298 = vmatpush1.msra.mxu0 %v2266
    %2299 = vmatprep.subr.mxu0 0.0
    %2300 = vmatpush1.msra.mxu0 0.0
    %2301 = vmatprep.subr.mxu0 0.0
    %2302 = vmatpush1.msra.mxu0 0.0
    %2303 = vmatprep.subr.mxu0 0.0
    %2304 = vmatpush1.msra.mxu0 0.0
    %2305 = vmatprep.subr.mxu0 0.0
    %2306 = vmatpush1.msra.mxu0 0.0
    %2307 = vmatprep.subr.mxu0 0.0
    %2308 = vmatpush1.msra.mxu0 0.0
    %2309 = vmatprep.subr.mxu0 0.0
    %2310 = vmatpush1.msra.mxu0 0.0
    %2311 = vmatprep.subr.mxu0 0.0
    %2312 = vmatpush1.msra.mxu0 0.0
    %2313 = vmatprep.subr.mxu0 0.0
    %2314 = vmatpush1.msra.mxu0 0.0
    %2315 = vmatprep.subr.mxu0 0.0
    %2316 = vmatpush1.msra.mxu0 0.0
    %2317 = vmatprep.subr.mxu0 0.0
    %2318 = vmatpush1.msra.mxu0 0.0
    %2319 = vmatprep.subr.mxu0 0.0
    %2320 = vmatpush1.msra.mxu0 0.0
    %2321 = vmatprep.subr.mxu0 0.0
    %2322 = vmatpush1.msra.mxu0 0.0
    %2323 = vmatprep.subr.mxu0 0.0
    %2324 = vmatpush1.msra.mxu0 0.0
    %2325 = vmatprep.subr.mxu0 0.0
    %2326 = vmatpush1.msra.mxu0 0.0
    %2327 = vmatprep.subr.mxu0 0.0
    %2328 = vmatpush1.msra.mxu0 0.0
    %2329 = vmatprep.subr.mxu0 0.0
    %2330 = vmatpush1.msra.mxu0 0.0
    %2331 = vmatprep.mubr.f32.mxu0 0.0
    %2332 = vmatmul.mubr.f32.gmra.mrb[0].mxu0 %v1748
    %v2333 = vpop.f32.mrb[0].mxu0
    %v2334 = vadd.f32 0.0, %v2333
    %v2335 = vpop.f32.mrb[0].mxu0
    %2336 = vdwg.mxu0
    %v2338 = vsel %vm519, %v2249, 0
    %2340 = vmatprep.subr.mxu0 0.0
    %2341 = vmatpush1.msra.mxu0 %v2334
    %2342 = vmatprep.subr.mxu0 0.0
    %2343 = vmatpush1.msra.mxu0 0.0
    %2344 = vmatprep.subr.mxu0 0.0
    %2345 = vmatpush1.msra.mxu0 0.0
    %2346 = vmatprep.subr.mxu0 0.0
    %2347 = vmatpush1.msra.mxu0 0.0
    %2348 = vmatprep.subr.mxu0 0.0
    %2349 = vmatpush1.msra.mxu0 0.0
    %2350 = vmatprep.subr.mxu0 0.0
    %2351 = vmatpush1.msra.mxu0 0.0
    %2352 = vmatprep.subr.mxu0 0.0
    %2353 = vmatpush1.msra.mxu0 0.0
    %2354 = vmatprep.subr.mxu0 0.0
    %2355 = vmatpush1.msra.mxu0 0.0
    %2356 = vmatprep.subr.mxu0 0.0
    %2357 = vmatpush1.msra.mxu0 0.0
    %2358 = vmatprep.subr.mxu0 0.0
    %2359 = vmatpush1.msra.mxu0 0.0
    %2360 = vmatprep.subr.mxu0 0.0
    %2361 = vmatpush1.msra.mxu0 0.0
    %2362 = vmatprep.subr.mxu0 0.0
    %2363 = vmatpush1.msra.mxu0 0.0
    %2364 = vmatprep.subr.mxu0 0.0
    %2365 = vmatpush1.msra.mxu0 0.0
    %2366 = vmatprep.subr.mxu0 0.0
    %2367 = vmatpush1.msra.mxu0 0.0
    %2368 = vmatprep.subr.mxu0 0.0
    %2369 = vmatpush1.msra.mxu0 0.0
    %2370 = vmatprep.subr.mxu0 0.0
    %2371 = vmatpush1.msra.mxu0 0.0
    %2372 = vmatprep.subr.mxu0 0.0
    %2373 = vmatpush1.msra.mxu0 0.0
    %2374 = vmatprep.subr.mxu0 0.0
    %2375 = vmatpush1.msra.mxu0 0.0
    %2376 = vmatprep.subr.mxu0 0.0
    %2377 = vmatpush1.msra.mxu0 0.0
    %2378 = vmatprep.subr.mxu0 0.0
    %2379 = vmatpush1.msra.mxu0 0.0
    %2380 = vmatprep.subr.mxu0 0.0
    %2381 = vmatpush1.msra.mxu0 0.0
    %2382 = vmatprep.subr.mxu0 0.0
    %2383 = vmatpush1.msra.mxu0 0.0
    %2384 = vmatprep.subr.mxu0 0.0
    %2385 = vmatpush1.msra.mxu0 0.0
    %2386 = vmatprep.subr.mxu0 0.0
    %2387 = vmatpush1.msra.mxu0 0.0
    %2388 = vmatprep.subr.mxu0 0.0
    %2389 = vmatpush1.msra.mxu0 0.0
    %2390 = vmatprep.subr.mxu0 0.0
    %2391 = vmatpush1.msra.mxu0 0.0
    %2392 = vmatprep.subr.mxu0 0.0
    %2393 = vmatpush1.msra.mxu0 0.0
    %2394 = vmatprep.subr.mxu0 0.0
    %2395 = vmatpush1.msra.mxu0 0.0
    %2396 = vmatprep.subr.mxu0 0.0
    %2397 = vmatpush1.msra.mxu0 0.0
    %2398 = vmatprep.subr.mxu0 0.0
    %2399 = vmatpush1.msra.mxu0 0.0
    %2400 = vmatprep.subr.mxu0 0.0
    %2401 = vmatpush1.msra.mxu0 0.0
    %2402 = vmatprep.subr.mxu0 0.0
    %2403 = vmatpush1.msra.mxu0 0.0
    %2404 = vmatprep.mubr.f32.mxu0 0.0
    %2405 = vmatmul.mubr.f32.gmra.mrb[0].mxu0 %v2338
    %v2406 = vpop.f32.mrb[0].mxu0
    %v2407 = vadd.f32 0.0, %v2406
    %v2408 = vpop.f32.mrb[0].mxu0
    %2409 = vdwg.mxu0
    %v2410 = vadd.f32 %v2245, %v2407
    %v2411 = vld [vmem:[%s4] sm:$0xff]
    %s2412 = scalar_lea.vmem [#allocation2], 2304
    %v2413 = vld [vmem:[%s2412] sm:$0xff]
    %v2414 = vld [vmem:[%s2412 + $0x8] sm:$0xff]
    %v2415 = vld [vmem:[%s2412 + $0x10] sm:$0xff]
    %v2416 = vld [vmem:[%s2412 + $0x18] sm:$0xff]
    %v2417 = vld [vmem:[%s2412 + $0x20] sm:$0xff]
    %v2418 = vld [vmem:[%s2412 + $0x28] sm:$0xff]
    %v2419 = vld [vmem:[%s2412 + $0x30] sm:$0xff]
    %v2420 = vld [vmem:[%s2412 + $0x38] sm:$0xff]
    %v2421 = vld [vmem:[%s2412 + $0x40] sm:$0xff]
    %v2422 = vld [vmem:[%s2412 + $0x48] sm:$0xff]
    %v2423 = vld [vmem:[%s2412 + $0x50] sm:$0xff]
    %v2424 = vld [vmem:[%s2412 + $0x58] sm:$0xff]
    %v2425 = vld [vmem:[%s2412 + $0x60] sm:$0xff]
    %v2426 = vld [vmem:[%s2412 + $0x68] sm:$0xff]
    %v2427 = vld [vmem:[%s2412 + $0x70] sm:$0xff]
    %v2428 = vld [vmem:[%s2412 + $0x78] sm:$0xff]
    %2429 = vmatprep.subr.mxu0 0.0
    %2430 = vmatpush1.msra.mxu0 %v2413
    %2431 = vmatprep.subr.mxu0 0.0
    %2432 = vmatpush1.msra.mxu0 %v2414
    %2433 = vmatprep.subr.mxu0 0.0
    %2434 = vmatpush1.msra.mxu0 %v2415
    %2435 = vmatprep.subr.mxu0 0.0
    %2436 = vmatpush1.msra.mxu0 %v2416
    %2437 = vmatprep.subr.mxu0 0.0
    %2438 = vmatpush1.msra.mxu0 %v2417
    %2439 = vmatprep.subr.mxu0 0.0
    %2440 = vmatpush1.msra.mxu0 %v2418
    %2441 = vmatprep.subr.mxu0 0.0
    %2442 = vmatpush1.msra.mxu0 %v2419
    %2443 = vmatprep.subr.mxu0 0.0
    %2444 = vmatpush1.msra.mxu0 %v2420
    %2445 = vmatprep.subr.mxu0 0.0
    %2446 = vmatpush1.msra.mxu0 %v2421
    %2447 = vmatprep.subr.mxu0 0.0
    %2448 = vmatpush1.msra.mxu0 %v2422
    %2449 = vmatprep.subr.mxu0 0.0
    %2450 = vmatpush1.msra.mxu0 %v2423
    %2451 = vmatprep.subr.mxu0 0.0
    %2452 = vmatpush1.msra.mxu0 %v2424
    %2453 = vmatprep.subr.mxu0 0.0
    %2454 = vmatpush1.msra.mxu0 %v2425
    %2455 = vmatprep.subr.mxu0 0.0
    %2456 = vmatpush1.msra.mxu0 %v2426
    %2457 = vmatprep.subr.mxu0 0.0
    %2458 = vmatpush1.msra.mxu0 %v2427
    %2459 = vmatprep.subr.mxu0 0.0
    %2460 = vmatpush1.msra.mxu0 %v2428
    %2461 = vmatprep.subr.mxu0 0.0
    %2462 = vmatpush1.msra.mxu0 0.0
    %2463 = vmatprep.subr.mxu0 0.0
    %2464 = vmatpush1.msra.mxu0 0.0
    %2465 = vmatprep.subr.mxu0 0.0
    %2466 = vmatpush1.msra.mxu0 0.0
    %2467 = vmatprep.subr.mxu0 0.0
    %2468 = vmatpush1.msra.mxu0 0.0
    %2469 = vmatprep.subr.mxu0 0.0
    %2470 = vmatpush1.msra.mxu0 0.0
    %2471 = vmatprep.subr.mxu0 0.0
    %2472 = vmatpush1.msra.mxu0 0.0
    %2473 = vmatprep.subr.mxu0 0.0
    %2474 = vmatpush1.msra.mxu0 0.0
    %2475 = vmatprep.subr.mxu0 0.0
    %2476 = vmatpush1.msra.mxu0 0.0
    %2477 = vmatprep.subr.mxu0 0.0
    %2478 = vmatpush1.msra.mxu0 0.0
    %2479 = vmatprep.subr.mxu0 0.0
    %2480 = vmatpush1.msra.mxu0 0.0
    %2481 = vmatprep.subr.mxu0 0.0
    %2482 = vmatpush1.msra.mxu0 0.0
    %2483 = vmatprep.subr.mxu0 0.0
    %2484 = vmatpush1.msra.mxu0 0.0
    %2485 = vmatprep.subr.mxu0 0.0
    %2486 = vmatpush1.msra.mxu0 0.0
    %2487 = vmatprep.subr.mxu0 0.0
    %2488 = vmatpush1.msra.mxu0 0.0
    %2489 = vmatprep.subr.mxu0 0.0
    %2490 = vmatpush1.msra.mxu0 0.0
    %2491 = vmatprep.subr.mxu0 0.0
    %2492 = vmatpush1.msra.mxu0 0.0
    %2493 = vmatprep.mubr.f32.mxu0 0.0
    %2494 = vmatmul.mubr.f32.gmra.mrb[0].mxu0 %v2411
    %v2495 = vpop.f32.mrb[0].mxu0
    %v2496 = vadd.f32 0.0, %v2495
    %v2497 = vpop.f32.mrb[0].mxu0
    %2498 = vdwg.mxu0
    %v2499 = vadd.f32 %v2410, %v2496
    %v2500 = vld [vmem:[#allocation4 + $0x10] sm:$0x1]
    %v2501 = vlaneseq
    %v2502 = vshrl.u32 %v2501, 7
    %v2503 = vsub.s32 0, %v2502
    %v2504 = vrot.slane %v2500, %v2503
    %v2505 = vadd.f32 %v2499, %v2504
    %v2506 = vmax.f32 %v2505, 0.0
    %s2507 = scalar_lea.vmem [#allocation2], 2432
    %v2508 = vld [vmem:[%s2507] sm:$0xff]
    %v2509 = vld [vmem:[%s2507 + $0x8] sm:$0xff]
    %v2510 = vld [vmem:[%s2507 + $0x10] sm:$0xff]
    %v2511 = vld [vmem:[%s2507 + $0x18] sm:$0xff]
    %v2512 = vld [vmem:[%s2507 + $0x20] sm:$0xff]
    %v2513 = vld [vmem:[%s2507 + $0x28] sm:$0xff]
    %v2514 = vld [vmem:[%s2507 + $0x30] sm:$0xff]
    %v2515 = vld [vmem:[%s2507 + $0x38] sm:$0xff]
    %v2516 = vld [vmem:[%s2507 + $0x40] sm:$0xff]
    %v2517 = vld [vmem:[%s2507 + $0x48] sm:$0xff]
    %v2518 = vld [vmem:[%s2507 + $0x50] sm:$0xff]
    %v2519 = vld [vmem:[%s2507 + $0x58] sm:$0xff]
    %v2520 = vld [vmem:[%s2507 + $0x60] sm:$0xff]
    %v2521 = vld [vmem:[%s2507 + $0x68] sm:$0xff]
    %v2522 = vld [vmem:[%s2507 + $0x70] sm:$0xff]
    %v2523 = vld [vmem:[%s2507 + $0x78] sm:$0xff]
    %v2524 = vld [vmem:[#allocation4 + $0x11] sm:$0x1]
    %v2525 = vlaneseq
    %v2526 = vshrl.u32 %v2525, 7
    %v2527 = vsub.s32 0, %v2526
    %v2528 = vrot.slane %v2524, %v2527
    %2529 = vmatprep.subr.mxu0 0.0
    %2530 = vmatpush1.msra.mxu0 %v2508
    %2531 = vmatprep.subr.mxu0 0.0
    %2532 = vmatpush1.msra.mxu0 %v2509
    %2533 = vmatprep.subr.mxu0 0.0
    %2534 = vmatpush1.msra.mxu0 %v2510
    %2535 = vmatprep.subr.mxu0 0.0
    %2536 = vmatpush1.msra.mxu0 %v2511
    %2537 = vmatprep.subr.mxu0 0.0
    %2538 = vmatpush1.msra.mxu0 %v2512
    %2539 = vmatprep.subr.mxu0 0.0
    %2540 = vmatpush1.msra.mxu0 %v2513
    %2541 = vmatprep.subr.mxu0 0.0
    %2542 = vmatpush1.msra.mxu0 %v2514
    %2543 = vmatprep.subr.mxu0 0.0
    %2544 = vmatpush1.msra.mxu0 %v2515
    %2545 = vmatprep.subr.mxu0 0.0
    %2546 = vmatpush1.msra.mxu0 %v2516
    %2547 = vmatprep.subr.mxu0 0.0
    %2548 = vmatpush1.msra.mxu0 %v2517
    %2549 = vmatprep.subr.mxu0 0.0
    %2550 = vmatpush1.msra.mxu0 %v2518
    %2551 = vmatprep.subr.mxu0 0.0
    %2552 = vmatpush1.msra.mxu0 %v2519
    %2553 = vmatprep.subr.mxu0 0.0
    %2554 = vmatpush1.msra.mxu0 %v2520
    %2555 = vmatprep.subr.mxu0 0.0
    %2556 = vmatpush1.msra.mxu0 %v2521
    %2557 = vmatprep.subr.mxu0 0.0
    %2558 = vmatpush1.msra.mxu0 %v2522
    %2559 = vmatprep.subr.mxu0 0.0
    %2560 = vmatpush1.msra.mxu0 %v2523
    %2561 = vmatprep.subr.mxu0 0.0
    %2562 = vmatpush1.msra.mxu0 0.0
    %2563 = vmatprep.subr.mxu0 0.0
    %2564 = vmatpush1.msra.mxu0 0.0
    %2565 = vmatprep.subr.mxu0 0.0
    %2566 = vmatpush1.msra.mxu0 0.0
    %2567 = vmatprep.subr.mxu0 0.0
    %2568 = vmatpush1.msra.mxu0 0.0
    %2569 = vmatprep.subr.mxu0 0.0
    %2570 = vmatpush1.msra.mxu0 0.0
    %2571 = vmatprep.subr.mxu0 0.0
    %2572 = vmatpush1.msra.mxu0 0.0
    %2573 = vmatprep.subr.mxu0 0.0
    %2574 = vmatpush1.msra.mxu0 0.0
    %2575 = vmatprep.subr.mxu0 0.0
    %2576 = vmatpush1.msra.mxu0 0.0
    %2577 = vmatprep.subr.mxu0 0.0
    %2578 = vmatpush1.msra.mxu0 0.0
    %2579 = vmatprep.subr.mxu0 0.0
    %2580 = vmatpush1.msra.mxu0 0.0
    %2581 = vmatprep.subr.mxu0 0.0
    %2582 = vmatpush1.msra.mxu0 0.0
    %2583 = vmatprep.subr.mxu0 0.0
    %2584 = vmatpush1.msra.mxu0 0.0
    %2585 = vmatprep.subr.mxu0 0.0
    %2586 = vmatpush1.msra.mxu0 0.0
    %2587 = vmatprep.subr.mxu0 0.0
    %2588 = vmatpush1.msra.mxu0 0.0
    %2589 = vmatprep.subr.mxu0 0.0
    %2590 = vmatpush1.msra.mxu0 0.0
    %2591 = vmatprep.subr.mxu0 0.0
    %2592 = vmatpush1.msra.mxu0 0.0
    %2593 = vmatprep.mubr.f32.mxu0 0.0
    %2594 = vmatmul.mubr.f32.gmra.mrb[0].mxu0 %v2506
    %v2595 = vpop.f32.mrb[0].mxu0
    %v2596 = vadd.f32 %v2528, %v2595
    %v2597 = vpop.f32.mrb[0].mxu0
    %2598 = vdwg.mxu0
    %2599 = vst [vmem:[%s7] sm:$0xff] %v2596
    // Predicated region
    $region38: #{forward.1} parent=1 // pred_check
      _
    $region39: #{forward.1} parent=1 // pred_check_branch
      %2601 = sbr.rel (0) target = $region41
    $region40: #{forward.1} parent=1 // pred_region
      _
    $region41: #{forward.1} parent=1 // pred_fallthru
      _
    // Predicated region
    $region42: #{forward.1} parent=1 // pred_check
      _
    $region43: #{forward.1} parent=1 // pred_check_branch
      %2603 = sbr.rel (0) target = $region45
    $region44: #{forward.1} parent=1 // pred_region
      _
    $region45: #{forward.1} parent=1 // pred_fallthru
      _
    %2604 = vsyncpa [#allocation3], 1
    %2605 = vsyncpa [#allocation5], 1

</llo_original>
